<compile_context>
chip_gen: v7x
topology: tpu7x:2x2x1
jax: 0.10.0
libtpu: 0.0.40
codegen_flags: <defaults>
</compile_context>

<pallas_src>
import math
import functools

import numpy as np
import jax
import jax.numpy as jnp
from jax.experimental import pallas as pl
from jax.experimental.pallas import tpu as pltpu

# ---- model config (ModelArgs defaults except a small vocab for the synthetic test) ----
H = 32                     # num_hiddens
N_HEADS = 4
HEAD_DIM = H // N_HEADS    # 8
FFN_DIM = 2 * H            # 64
VOCAB = 128                # small vocab; logits slab is exactly 128 lanes wide
ENC_LAYERS = 2
DEC_LAYERS = 2
LN_EPS = 1e-5
NEG_INF = -1e6             # d2l masked_softmax semantics
LANES = 128                # lane width of the packed weight slab


def _round_up(x, m):
    return (x + m - 1) // m * m


# ------------------------- slab layout (weights + constants) -------------------------

def build_layout(b, se, sd):
    """Row layout of the single packed f32 (rows, LANES) slab: every weight, bias,
    LayerNorm param and precomputed mask/bias constant, 8-row aligned."""
    re_, rd_ = b * se, b * sd
    layout = {}
    off = 0

    def add(name, rows, cols):
        nonlocal off
        assert cols <= LANES, (name, cols)
        layout[name] = (off, rows, cols)
        off += _round_up(rows, 8)

    for l in range(ENC_LAYERS):
        p = f"enc{l}."
        add(p + "wqkv", H, 3 * H); add(p + "bqkv", 1, 3 * H)
        add(p + "wo", H, H);       add(p + "bo", 1, H)
        add(p + "ln1g", 1, H);     add(p + "ln1b", 1, H)
        add(p + "w1", H, FFN_DIM); add(p + "b1", 1, FFN_DIM)
        add(p + "w2", FFN_DIM, H); add(p + "b2", 1, H)
        add(p + "ln2g", 1, H);     add(p + "ln2b", 1, H)
    for l in range(DEC_LAYERS):
        p = f"dec{l}."
        add(p + "wqkv", H, 3 * H); add(p + "bqkv", 1, 3 * H)
        add(p + "wo1", H, H);      add(p + "bo1", 1, H)
        add(p + "ln1g", 1, H);     add(p + "ln1b", 1, H)
        add(p + "wq2", H, H);      add(p + "bq2", 1, H)
        add(p + "wkv2", H, 2 * H); add(p + "bkv2", 1, 2 * H)
        add(p + "wo2", H, H);      add(p + "bo2", 1, H)
        add(p + "ln2g", 1, H);     add(p + "ln2b", 1, H)
        add(p + "w1", H, FFN_DIM); add(p + "b1", 1, FFN_DIM)
        add(p + "w2", FFN_DIM, H); add(p + "b2", 1, H)
        add(p + "ln3g", 1, H);     add(p + "ln3b", 1, H)
    add("out_w", H, VOCAB); add("out_b", 1, VOCAB)

    # precomputed (trace-time) attention constants, head-tiled on the lane axis
    add("c_enc_bias", re_, N_HEADS * re_)      # same-batch bias for encoder self-attn
    add("c_causal_bias", rd_, N_HEADS * rd_)   # fully-formed causal + same-batch bias
    add("c_cross_bias", rd_, N_HEADS * re_)    # same-batch bias for cross-attn
    add("c_mexp_e", N_HEADS * re_, H)          # head block-diag K/V expansion mask (enc keys)
    add("c_mexp_d", N_HEADS * rd_, H)          # head block-diag K/V expansion mask (dec keys)
    add("c_mseg_e", N_HEADS * re_, N_HEADS * re_)   # per-head segment-sum matrix (enc keys)
    add("c_mseg_d", N_HEADS * rd_, N_HEADS * rd_)   # per-head segment-sum matrix (dec keys)
    add("c_colpos_e", 1, N_HEADS * re_)        # key position-within-batch per enc-key lane
    add("c_onehot_e", b, N_HEADS * re_)        # batch one-hot per enc-key lane
    return layout, _round_up(off, 8)


def build_constants(b, se, sd):
    """All static mask structure is built with numpy at trace time (no in-kernel iota)."""
    re_, rd_ = b * se, b * sd
    qe, qd = np.arange(re_), np.arange(rd_)
    enc_same = (qe[:, None] // se) == (qe[None, :] // se)
    dec_same = (qd[:, None] // sd) == (qd[None, :] // sd)
    causal = dec_same & (qd[None, :] <= qd[:, None])
    cross_same = (qd[:, None] // sd) == (qe[None, :] // se)

    def bias(mask):  # 0 keep / NEG_INF masked, tiled over heads along lanes
        return np.tile(np.where(mask, 0.0, NEG_INF).astype(np.float32), (1, N_HEADS))

    def head_masks(rk):
        rows = np.arange(N_HEADS * rk)
        m_exp = ((rows[:, None] // rk) ==
                 (np.arange(H)[None, :] // HEAD_DIM)).astype(np.float32)
        m_seg = ((rows[:, None] // rk) == (rows[None, :] // rk)).astype(np.float32)
        return m_exp, m_seg

    mexp_e, mseg_e = head_masks(re_)
    mexp_d, mseg_d = head_masks(rd_)
    colpos = np.tile(np.tile(np.arange(se), b).astype(np.float32)[None, :], (1, N_HEADS))
    onehot = np.tile((np.repeat(np.arange(b), se)[None, :] ==
                      np.arange(b)[:, None]).astype(np.float32), (1, N_HEADS))
    return {
        "c_enc_bias": bias(enc_same),
        "c_causal_bias": bias(causal),
        "c_cross_bias": bias(cross_same),
        "c_mexp_e": mexp_e, "c_mseg_e": mseg_e,
        "c_mexp_d": mexp_d, "c_mseg_d": mseg_d,
        "c_colpos_e": colpos,
        "c_onehot_e": onehot,
    }


def pack_slab(weights, consts, layout, total_rows):
    slab = np.zeros((total_rows, LANES), np.float32)
    named = dict(consts)
    named.update(weights)
    for name, (off, rows, cols) in layout.items():
        slab[off:off + rows, :cols] = np.asarray(named[name], np.float32).reshape(rows, cols)
    return jnp.asarray(slab)


# ------------------------------ the fused kernel ------------------------------

def transformer_kernel(valid_len_ref, enc_x_ref, dec_x_ref, w_ref, out_ref,
                       *, layout, b, se, sd):
    re_, rd_ = b * se, b * sd
    scale = 1.0 / math.sqrt(HEAD_DIM)

    def P(name):  # static slice view of the packed slab (8-row aligned offsets)
        off, rows, cols = layout[name]
        return w_ref[off:off + rows, 0:cols]

    def bdot(a, w):  # bf16 MXU inputs, f32 accumulation
        return jnp.dot(a.astype(jnp.bfloat16), w.astype(jnp.bfloat16),
                       preferred_element_type=jnp.float32)

    def addnorm(x, y, g, beta):  # LayerNorm(x + y), f32
        z = x + y
        mu = jnp.mean(z, axis=-1, keepdims=True)
        var = jnp.mean(jnp.square(z - mu), axis=-1, keepdims=True)
        return (z - mu) * jax.lax.rsqrt(var + LN_EPS) * g + beta

    def ffn(x, w1, b1, w2, b2):
        h1 = jnp.maximum(bdot(x, w1) + b1, 0.0)
        return bdot(h1, w2) + b2

    def mha(q, k, v, wo, bo, bias_all, m_exp, m_seg):
        # All heads at once: K/V are replicated along sublanes and masked into a
        # block-diagonal layout so one matmul yields the (Rq, N_HEADS*Rk) score slab.
        kexp = (jnp.concatenate([k] * N_HEADS, axis=0) * m_exp).astype(jnp.bfloat16)
        vexp = (jnp.concatenate([v] * N_HEADS, axis=0) * m_exp).astype(jnp.bfloat16)
        dn = (((1,), (1,)), ((), ()))            # contract hidden dims: q @ kexp^T
        s = jax.lax.dot_general(q.astype(jnp.bfloat16), kexp, dn,
                                preferred_element_type=jnp.float32) * scale + bias_all
        # per-row shift is invariant for the per-head-segment softmax
        s = s - jnp.max(s, axis=-1, keepdims=True)
        e = jnp.exp(s)
        # per-head segment sums via one constant-matrix matmul (keeps layout lane-dense)
        denom = jnp.dot(e, m_seg, preferred_element_type=jnp.float32)
        p = e * pl.reciprocal(denom, approx=True)
        ctx = bdot(p, vexp)                      # (Rq, H): heads already concatenated
        return bdot(ctx, wo) + bo

    # --- runtime enc-key keep bias from the scalar-prefetched valid lens ---
    colpos = P("c_colpos_e")                     # (1, N*re)
    onehot = P("c_onehot_e")                     # (b, N*re)
    vl_cols = jnp.zeros_like(colpos)
    for bb in range(b):
        vl_cols = vl_cols + onehot[bb:bb + 1, :] * valid_len_ref[bb].astype(jnp.float32)
    keep_bias = jnp.where(colpos < vl_cols, 0.0, NEG_INF)     # (1, N*re)

    enc_bias = P("c_enc_bias") + keep_bias       # (re, N*re)
    causal_bias = P("c_causal_bias")             # (rd, N*rd), fully constant
    cross_bias = P("c_cross_bias") + keep_bias   # (rd, N*re)
    m_exp_e, m_seg_e = P("c_mexp_e"), P("c_mseg_e")
    m_exp_d, m_seg_d = P("c_mexp_d"), P("c_mseg_d")

    # ------------------------------ encoder ------------------------------
    h = enc_x_ref[...]                           # (B*Se, H)
    for l in range(ENC_LAYERS):
        p = f"enc{l}."
        qkv = bdot(h, P(p + "wqkv")) + P(p + "bqkv")
        a = mha(qkv[:, 0:H], qkv[:, H:2 * H], qkv[:, 2 * H:3 * H],
                P(p + "wo"), P(p + "bo"), enc_bias, m_exp_e, m_seg_e)
        y = addnorm(h, a, P(p + "ln1g"), P(p + "ln1b"))
        f = ffn(y, P(p + "w1"), P(p + "b1"), P(p + "w2"), P(p + "b2"))
        h = addnorm(y, f, P(p + "ln2g"), P(p + "ln2b"))
    enc_out = h

    # ------------------------------ decoder ------------------------------
    x = dec_x_ref[...]                           # (B*Sd, H)
    for l in range(DEC_LAYERS):
        p = f"dec{l}."
        qkv = bdot(x, P(p + "wqkv")) + P(p + "bqkv")
        a1 = mha(qkv[:, 0:H], qkv[:, H:2 * H], qkv[:, 2 * H:3 * H],
                 P(p + "wo1"), P(p + "bo1"), causal_bias, m_exp_d, m_seg_d)
        hh = addnorm(x, a1, P(p + "ln1g"), P(p + "ln1b"))
        # NOTE: reference uses the block *input* x as the cross-attention query
        q2 = bdot(x, P(p + "wq2")) + P(p + "bq2")
        kv = bdot(enc_out, P(p + "wkv2")) + P(p + "bkv2")
        a2 = mha(q2, kv[:, 0:H], kv[:, H:2 * H],
                 P(p + "wo2"), P(p + "bo2"), cross_bias, m_exp_e, m_seg_e)
        hh = addnorm(hh, a2, P(p + "ln2g"), P(p + "ln2b"))
        f = ffn(hh, P(p + "w1"), P(p + "b1"), P(p + "w2"), P(p + "b2"))
        x = addnorm(hh, f, P(p + "ln3g"), P(p + "ln3b"))

    # lane-dense output slab: (B*Sd, VOCAB) with VOCAB = 128
    out_ref[...] = bdot(x, P("out_w")) + P("out_b")


# ------------------------------ plain-JAX glue ------------------------------

def positional_encoding(x):
    """x: (B, S, H). Matches the reference sin/cos interleave (dropout skipped)."""
    S = x.shape[1]
    pos = jnp.arange(S, dtype=jnp.float32).reshape(-1, 1)
    i = jnp.power(10000.0, jnp.arange(0, H, 2, dtype=jnp.float32) / H)
    pos_i = pos / i
    P = jnp.zeros((1, S, H), jnp.float32)
    P = P.at[:, :, 0::2].set(jnp.sin(pos_i))
    P = P.at[:, :, 1::2].set(jnp.cos(pos_i))
    return x + P


def make_forward(layout, slab_rows, b, se, sd):
    re_, rd_ = b * se, b * sd
    kern = functools.partial(transformer_kernel, layout=layout, b=b, se=se, sd=sd)

    @jax.jit
    def forward(slab, enc_emb, dec_emb, enc_tokens, dec_tokens, enc_valid_len):
        enc_x = positional_encoding(enc_emb[enc_tokens] * math.sqrt(H)).reshape(re_, H)
        dec_x = positional_encoding(dec_emb[dec_tokens] * math.sqrt(H)).reshape(rd_, H)
        logits = pl.pallas_call(
            kern,
            out_shape=jax.ShapeDtypeStruct((rd_, VOCAB), jnp.float32),
            grid_spec=pltpu.PrefetchScalarGridSpec(
                num_scalar_prefetch=1,          # enc_valid_len -> SMEM
                grid=(1,),
                in_specs=[
                    pl.BlockSpec((re_, H), lambda i, vl: (0, 0)),
                    pl.BlockSpec((rd_, H), lambda i, vl: (0, 0)),
                    pl.BlockSpec((slab_rows, LANES), lambda i, vl: (0, 0)),
                ],
                out_specs=pl.BlockSpec((rd_, VOCAB), lambda i, vl: (0, 0)),
            ),
            compiler_params=pltpu.CompilerParams(
                dimension_semantics=("arbitrary",),
                vmem_limit_bytes=32 * 1024 * 1024,   # portable guard (v7x has less VMEM)
            ),
        )(enc_valid_len.astype(jnp.int32), enc_x, dec_x, slab)
        return logits.reshape(b, sd, VOCAB)

    return forward


# ------------------------------ parameter init ------------------------------

def init_linear(key, din, dout):
    kw, kb = jax.random.split(key)
    bound = 1.0 / math.sqrt(din)
    w = jax.random.uniform(kw, (din, dout), jnp.float32, -bound, bound)
    b = jax.random.uniform(kb, (1, dout), jnp.float32, -bound, bound)
    return w, b


def init_params(key):
    keys = jax.random.split(key, 5)
    params = {
        "enc_emb": 0.02 * jax.random.normal(keys[0], (VOCAB, H), jnp.float32),
        "dec_emb": 0.02 * jax.random.normal(keys[1], (VOCAB, H), jnp.float32),
    }
    ones = jnp.ones((1, H), jnp.float32)
    zeros = jnp.zeros((1, H), jnp.float32)
    w = {}
    for l in range(ENC_LAYERS):
        ks = jax.random.split(jax.random.fold_in(keys[2], l), 6)
        p = f"enc{l}."
        wq, bq = init_linear(ks[0], H, H)
        wk, bk = init_linear(ks[1], H, H)
        wv, bv = init_linear(ks[2], H, H)
        w[p + "wqkv"] = jnp.concatenate([wq, wk, wv], axis=1)
        w[p + "bqkv"] = jnp.concatenate([bq, bk, bv], axis=1)
        w[p + "wo"], w[p + "bo"] = init_linear(ks[3], H, H)
        w[p + "ln1g"], w[p + "ln1b"] = ones, zeros
        w[p + "w1"], w[p + "b1"] = init_linear(ks[4], H, FFN_DIM)
        w[p + "w2"], w[p + "b2"] = init_linear(ks[5], FFN_DIM, H)
        w[p + "ln2g"], w[p + "ln2b"] = ones, zeros
    for l in range(DEC_LAYERS):
        ks = jax.random.split(jax.random.fold_in(keys[3], l), 10)
        p = f"dec{l}."
        wq1, bq1 = init_linear(ks[0], H, H)
        wk1, bk1 = init_linear(ks[1], H, H)
        wv1, bv1 = init_linear(ks[2], H, H)
        w[p + "wqkv"] = jnp.concatenate([wq1, wk1, wv1], axis=1)
        w[p + "bqkv"] = jnp.concatenate([bq1, bk1, bv1], axis=1)
        w[p + "wo1"], w[p + "bo1"] = init_linear(ks[3], H, H)
        w[p + "ln1g"], w[p + "ln1b"] = ones, zeros
        w[p + "wq2"], w[p + "bq2"] = init_linear(ks[4], H, H)
        wk2, bk2 = init_linear(ks[5], H, H)
        wv2, bv2 = init_linear(ks[6], H, H)
        w[p + "wkv2"] = jnp.concatenate([wk2, wv2], axis=1)
        w[p + "bkv2"] = jnp.concatenate([bk2, bv2], axis=1)
        w[p + "wo2"], w[p + "bo2"] = init_linear(ks[7], H, H)
        w[p + "ln2g"], w[p + "ln2b"] = ones, zeros
        w[p + "w1"], w[p + "b1"] = init_linear(ks[8], H, FFN_DIM)
        w[p + "w2"], w[p + "b2"] = init_linear(ks[9], FFN_DIM, H)
        w[p + "ln3g"], w[p + "ln3b"] = ones, zeros
    w["out_w"], w["out_b"] = init_linear(keys[4], H, VOCAB)
    params["weights"] = w
    return params


# ------------------------------ main ------------------------------

if __name__ == "__main__":
    root = jax.random.PRNGKey(0)
    kp, ke, kd = jax.random.split(root, 3)
    params = init_params(kp)

    B, Se, Sd = 2, 8, 8
    enc_tokens = jax.random.randint(ke, (B, Se), 0, VOCAB, dtype=jnp.int32)
    dec_tokens = jax.random.randint(kd, (B, Sd), 0, VOCAB, dtype=jnp.int32)
    enc_valid_len = jnp.array([8, 5], dtype=jnp.int32)

    layout, slab_rows = build_layout(B, Se, Sd)
    consts = build_constants(B, Se, Sd)
    slab = pack_slab(params["weights"], consts, layout, slab_rows)   # one-time host packing

    forward = make_forward(layout, slab_rows, B, Se, Sd)
    logits = forward(slab, params["enc_emb"], params["dec_emb"],
                     enc_tokens, dec_tokens, enc_valid_len)
    jax.block_until_ready(logits)

    assert logits.shape == (B, Sd, VOCAB), logits.shape
    assert logits.dtype == jnp.float32
    assert bool(jnp.all(jnp.isfinite(logits)))
    print("KERNEL_OK")
</pallas_src>

<mosaic_0001>
module attributes {stable_mosaic.version = 11 : i64} {
  func.func @transformer_kernel(%arg0: i32, %arg1: memref<2xi32, #tpu.memory_space<smem>>, %arg2: memref<16x32xf32, #tpu.memory_space<vmem>>, %arg3: memref<16x32xf32, #tpu.memory_space<vmem>>, %arg4: memref<1528x128xf32, #tpu.memory_space<vmem>>, %arg5: memref<16x128xf32, #tpu.memory_space<vmem>>) attributes {dimension_semantics = [#tpu.dimension_semantics<arbitrary>], iteration_bounds = array<i64: 1>, scalar_prefetch = 1 : i64, scratch_operands = 0 : i64, tpu.core_type = #tpu.core_type<tc>, window_params = [{pipeline_mode = #tpu.pipeline_mode<synchronous>, transform_indices = @transform_0, window_bounds = array<i64: 16, 32>}, {pipeline_mode = #tpu.pipeline_mode<synchronous>, transform_indices = @transform_1, window_bounds = array<i64: 16, 32>}, {pipeline_mode = #tpu.pipeline_mode<synchronous>, transform_indices = @transform_2, window_bounds = array<i64: 1528, 128>}, {pipeline_mode = #tpu.pipeline_mode<synchronous>, transform_indices = @transform_3, window_bounds = array<i64: 16, 128>}]} {
    %c1512 = arith.constant 1512 : index
    %c0 = arith.constant 0 : index
    %0 = vector.load %arg4[%c1512, %c0] : memref<1528x128xf32, #tpu.memory_space<vmem>>, vector<1x64xf32>
    %c1520 = arith.constant 1520 : index
    %c0_0 = arith.constant 0 : index
    %1 = vector.load %arg4[%c1520, %c0_0] : memref<1528x128xf32, #tpu.memory_space<vmem>>, vector<2x64xf32>
    %cst = arith.constant 0.000000e+00 : f32
    %2 = vector.broadcast %cst : f32 to vector<1x64xf32>
    %3 = vector.extract_strided_slice %1 {offsets = [0, 0], sizes = [1, 64], strides = [1, 1]} : vector<2x64xf32> to vector<1x64xf32>
    %c0_1 = arith.constant 0 : index
    %4 = memref.load %arg1[%c0_1] : memref<2xi32, #tpu.memory_space<smem>>
    %5 = arith.sitofp %4 : i32 to f32
    %6 = vector.broadcast %5 : f32 to vector<1x64xf32>
    %7 = arith.mulf %3, %6 : vector<1x64xf32>
    %8 = arith.addf %2, %7 : vector<1x64xf32>
    %9 = vector.extract_strided_slice %1 {offsets = [1, 0], sizes = [1, 64], strides = [1, 1]} : vector<2x64xf32> to vector<1x64xf32>
    %c1 = arith.constant 1 : index
    %10 = memref.load %arg1[%c1] : memref<2xi32, #tpu.memory_space<smem>>
    %11 = arith.sitofp %10 : i32 to f32
    %12 = vector.broadcast %11 : f32 to vector<1x64xf32>
    %13 = arith.mulf %9, %12 : vector<1x64xf32>
    %14 = arith.addf %8, %13 : vector<1x64xf32>
    %15 = arith.cmpf olt, %0, %14 : vector<1x64xf32>
    %cst_2 = arith.constant 0.000000e+00 : f32
    %cst_3 = arith.constant -1.000000e+06 : f32
    %16 = vector.broadcast %cst_2 : f32 to vector<1x64xf32>
    %17 = vector.broadcast %cst_3 : f32 to vector<1x64xf32>
    %18 = arith.select %15, %16, %17 : vector<1x64xi1>, vector<1x64xf32>
    %c1208 = arith.constant 1208 : index
    %c0_4 = arith.constant 0 : index
    %19 = vector.load %arg4[%c1208, %c0_4] : memref<1528x128xf32, #tpu.memory_space<vmem>>, vector<16x64xf32>
    %20 = vector.broadcast %18 : vector<1x64xf32> to vector<16x64xf32>
    %21 = arith.addf %19, %20 : vector<16x64xf32>
    %c1224 = arith.constant 1224 : index
    %c0_5 = arith.constant 0 : index
    %22 = vector.load %arg4[%c1224, %c0_5] : memref<1528x128xf32, #tpu.memory_space<vmem>>, vector<16x64xf32>
    %c1240 = arith.constant 1240 : index
    %c0_6 = arith.constant 0 : index
    %23 = vector.load %arg4[%c1240, %c0_6] : memref<1528x128xf32, #tpu.memory_space<vmem>>, vector<16x64xf32>
    %24 = vector.broadcast %18 : vector<1x64xf32> to vector<16x64xf32>
    %25 = arith.addf %23, %24 : vector<16x64xf32>
    %c1256 = arith.constant 1256 : index
    %c0_7 = arith.constant 0 : index
    %26 = vector.load %arg4[%c1256, %c0_7] : memref<1528x128xf32, #tpu.memory_space<vmem>>, vector<64x32xf32>
    %c1384 = arith.constant 1384 : index
    %c0_8 = arith.constant 0 : index
    %27 = vector.load %arg4[%c1384, %c0_8] : memref<1528x128xf32, #tpu.memory_space<vmem>>, vector<64x64xf32>
    %c1320 = arith.constant 1320 : index
    %c0_9 = arith.constant 0 : index
    %28 = vector.load %arg4[%c1320, %c0_9] : memref<1528x128xf32, #tpu.memory_space<vmem>>, vector<64x32xf32>
    %c1448 = arith.constant 1448 : index
    %c0_10 = arith.constant 0 : index
    %29 = vector.load %arg4[%c1448, %c0_10] : memref<1528x128xf32, #tpu.memory_space<vmem>>, vector<64x64xf32>
    %c0_11 = arith.constant 0 : index
    %c0_12 = arith.constant 0 : index
    %30 = vector.load %arg2[%c0_11, %c0_12] : memref<16x32xf32, #tpu.memory_space<vmem>>, vector<16x32xf32>
    %c0_13 = arith.constant 0 : index
    %c0_14 = arith.constant 0 : index
    %31 = vector.load %arg4[%c0_13, %c0_14] : memref<1528x128xf32, #tpu.memory_space<vmem>>, vector<32x96xf32>
    %32 = arith.truncf %30 : vector<16x32xf32> to vector<16x32xbf16>
    %33 = arith.truncf %31 : vector<32x96xf32> to vector<32x96xbf16>
    %cst_15 = arith.constant dense<0.000000e+00> : vector<16x96xf32>
    %34 = tpu.matmul %32, %33, %cst_15 {dimension_numbers = #tpu.dot_dimension_numbers<[1], [0], [0], [1], [0, 0, 1, 1], [], []>} : vector<16x32xbf16>, vector<32x96xbf16>, vector<16x96xf32> -> vector<16x96xf32>
    %c32 = arith.constant 32 : index
    %c0_16 = arith.constant 0 : index
    %35 = vector.load %arg4[%c32, %c0_16] : memref<1528x128xf32, #tpu.memory_space<vmem>>, vector<1x96xf32>
    %36 = vector.broadcast %35 : vector<1x96xf32> to vector<16x96xf32>
    %37 = arith.addf %34, %36 : vector<16x96xf32>
    %38 = vector.extract_strided_slice %37 {offsets = [0, 0], sizes = [16, 32], strides = [1, 1]} : vector<16x96xf32> to vector<16x32xf32>
    %39 = vector.extract_strided_slice %37 {offsets = [0, 32], sizes = [16, 32], strides = [1, 1]} : vector<16x96xf32> to vector<16x32xf32>
    %40 = vector.extract_strided_slice %37 {offsets = [0, 64], sizes = [16, 32], strides = [1, 1]} : vector<16x96xf32> to vector<16x32xf32>
    %c40 = arith.constant 40 : index
    %c0_17 = arith.constant 0 : index
    %41 = vector.load %arg4[%c40, %c0_17] : memref<1528x128xf32, #tpu.memory_space<vmem>>, vector<32x32xf32>
    %c72 = arith.constant 72 : index
    %c0_18 = arith.constant 0 : index
    %42 = vector.load %arg4[%c72, %c0_18] : memref<1528x128xf32, #tpu.memory_space<vmem>>, vector<1x32xf32>
    %43 = tpu.concatenate %39, %39, %39, %39 in 0 : vector<16x32xf32>, vector<16x32xf32>, vector<16x32xf32>, vector<16x32xf32> -> vector<64x32xf32>
    %44 = arith.mulf %43, %26 : vector<64x32xf32>
    %45 = arith.truncf %44 : vector<64x32xf32> to vector<64x32xbf16>
    %46 = tpu.concatenate %40, %40, %40, %40 in 0 : vector<16x32xf32>, vector<16x32xf32>, vector<16x32xf32>, vector<16x32xf32> -> vector<64x32xf32>
    %47 = arith.mulf %46, %26 : vector<64x32xf32>
    %48 = arith.truncf %47 : vector<64x32xf32> to vector<64x32xbf16>
    %49 = arith.truncf %38 : vector<16x32xf32> to vector<16x32xbf16>
    %cst_19 = arith.constant dense<0.000000e+00> : vector<16x64xf32>
    %50 = tpu.matmul %49, %45, %cst_19 {dimension_numbers = #tpu.dot_dimension_numbers<[1], [1], [0], [0], [0, 0, 1, 0], [], []>} : vector<16x32xbf16>, vector<64x32xbf16>, vector<16x64xf32> -> vector<16x64xf32>
    %cst_20 = arith.constant 0.353553385 : f32
    %51 = vector.broadcast %cst_20 : f32 to vector<16x64xf32>
    %52 = arith.mulf %50, %51 : vector<16x64xf32>
    %53 = arith.addf %52, %21 : vector<16x64xf32>
    %cst_21 = arith.constant dense<0xFF800000> : vector<16xf32>
    %54 = vector.multi_reduction <maximumf>, %53, %cst_21 [1] : vector<16x64xf32> to vector<16xf32>
    %55 = vector.shape_cast %54 : vector<16xf32> to vector<16x1xf32>
    %56 = vector.broadcast %55 : vector<16x1xf32> to vector<16x64xf32>
    %57 = arith.subf %53, %56 : vector<16x64xf32>
    %58 = math.exp %57 : vector<16x64xf32>
    %cst_22 = arith.constant dense<0.000000e+00> : vector<16x64xf32>
    %59 = tpu.matmul %58, %27, %cst_22 {dimension_numbers = #tpu.dot_dimension_numbers<[1], [0], [0], [1], [0, 0, 1, 1], [], []>} : vector<16x64xf32>, vector<64x64xf32>, vector<16x64xf32> -> vector<16x64xf32>
    %60 = tpu.reciprocal %59 {approx = true} : vector<16x64xf32> -> vector<16x64xf32>
    %61 = arith.mulf %58, %60 : vector<16x64xf32>
    %62 = arith.truncf %61 : vector<16x64xf32> to vector<16x64xbf16>
    %cst_23 = arith.constant dense<0.000000e+00> : vector<16x32xf32>
    %63 = tpu.matmul %62, %48, %cst_23 {dimension_numbers = #tpu.dot_dimension_numbers<[1], [0], [0], [1], [0, 0, 1, 1], [], []>} : vector<16x64xbf16>, vector<64x32xbf16>, vector<16x32xf32> -> vector<16x32xf32>
    %64 = arith.truncf %63 : vector<16x32xf32> to vector<16x32xbf16>
    %65 = arith.truncf %41 : vector<32x32xf32> to vector<32x32xbf16>
    %cst_24 = arith.constant dense<0.000000e+00> : vector<16x32xf32>
    %66 = tpu.matmul %64, %65, %cst_24 {dimension_numbers = #tpu.dot_dimension_numbers<[1], [0], [0], [1], [0, 0, 1, 1], [], []>} : vector<16x32xbf16>, vector<32x32xbf16>, vector<16x32xf32> -> vector<16x32xf32>
    %67 = vector.broadcast %42 : vector<1x32xf32> to vector<16x32xf32>
    %68 = arith.addf %66, %67 : vector<16x32xf32>
    %c80 = arith.constant 80 : index
    %c0_25 = arith.constant 0 : index
    %69 = vector.load %arg4[%c80, %c0_25] : memref<1528x128xf32, #tpu.memory_space<vmem>>, vector<1x32xf32>
    %c88 = arith.constant 88 : index
    %c0_26 = arith.constant 0 : index
    %70 = vector.load %arg4[%c88, %c0_26] : memref<1528x128xf32, #tpu.memory_space<vmem>>, vector<1x32xf32>
    %71 = arith.addf %30, %68 : vector<16x32xf32>
    %cst_27 = arith.constant dense<0.000000e+00> : vector<16xf32>
    %72 = vector.multi_reduction <add>, %71, %cst_27 [1] : vector<16x32xf32> to vector<16xf32>
    %73 = vector.shape_cast %72 : vector<16xf32> to vector<16x1xf32>
    %cst_28 = arith.constant 3.200000e+01 : f32
    %74 = vector.broadcast %cst_28 : f32 to vector<16x1xf32>
    %75 = arith.divf %73, %74 : vector<16x1xf32>
    %76 = vector.broadcast %75 : vector<16x1xf32> to vector<16x32xf32>
    %77 = arith.subf %71, %76 : vector<16x32xf32>
    %78 = arith.mulf %77, %77 : vector<16x32xf32>
    %cst_29 = arith.constant dense<0.000000e+00> : vector<16xf32>
    %79 = vector.multi_reduction <add>, %78, %cst_29 [1] : vector<16x32xf32> to vector<16xf32>
    %80 = vector.shape_cast %79 : vector<16xf32> to vector<16x1xf32>
    %cst_30 = arith.constant 3.200000e+01 : f32
    %81 = vector.broadcast %cst_30 : f32 to vector<16x1xf32>
    %82 = arith.divf %80, %81 : vector<16x1xf32>
    %83 = vector.broadcast %75 : vector<16x1xf32> to vector<16x32xf32>
    %84 = arith.subf %71, %83 : vector<16x32xf32>
    %cst_31 = arith.constant 9.99999974E-6 : f32
    %85 = vector.broadcast %cst_31 : f32 to vector<16x1xf32>
    %86 = arith.addf %82, %85 : vector<16x1xf32>
    %87 = math.rsqrt %86 : vector<16x1xf32>
    %88 = vector.broadcast %87 : vector<16x1xf32> to vector<16x32xf32>
    %89 = arith.mulf %84, %88 : vector<16x32xf32>
    %90 = vector.broadcast %69 : vector<1x32xf32> to vector<16x32xf32>
    %91 = arith.mulf %89, %90 : vector<16x32xf32>
    %92 = vector.broadcast %70 : vector<1x32xf32> to vector<16x32xf32>
    %93 = arith.addf %91, %92 : vector<16x32xf32>
    %c96 = arith.constant 96 : index
    %c0_32 = arith.constant 0 : index
    %94 = vector.load %arg4[%c96, %c0_32] : memref<1528x128xf32, #tpu.memory_space<vmem>>, vector<32x64xf32>
    %c128 = arith.constant 128 : index
    %c0_33 = arith.constant 0 : index
    %95 = vector.load %arg4[%c128, %c0_33] : memref<1528x128xf32, #tpu.memory_space<vmem>>, vector<1x64xf32>
    %c136 = arith.constant 136 : index
    %c0_34 = arith.constant 0 : index
    %96 = vector.load %arg4[%c136, %c0_34] : memref<1528x128xf32, #tpu.memory_space<vmem>>, vector<64x32xf32>
    %c200 = arith.constant 200 : index
    %c0_35 = arith.constant 0 : index
    %97 = vector.load %arg4[%c200, %c0_35] : memref<1528x128xf32, #tpu.memory_space<vmem>>, vector<1x32xf32>
    %98 = arith.truncf %93 : vector<16x32xf32> to vector<16x32xbf16>
    %99 = arith.truncf %94 : vector<32x64xf32> to vector<32x64xbf16>
    %cst_36 = arith.constant dense<0.000000e+00> : vector<16x64xf32>
    %100 = tpu.matmul %98, %99, %cst_36 {dimension_numbers = #tpu.dot_dimension_numbers<[1], [0], [0], [1], [0, 0, 1, 1], [], []>} : vector<16x32xbf16>, vector<32x64xbf16>, vector<16x64xf32> -> vector<16x64xf32>
    %101 = vector.broadcast %95 : vector<1x64xf32> to vector<16x64xf32>
    %102 = arith.addf %100, %101 : vector<16x64xf32>
    %cst_37 = arith.constant 0.000000e+00 : f32
    %103 = vector.broadcast %cst_37 : f32 to vector<16x64xf32>
    %104 = arith.maximumf %102, %103 : vector<16x64xf32>
    %105 = arith.truncf %104 : vector<16x64xf32> to vector<16x64xbf16>
    %106 = arith.truncf %96 : vector<64x32xf32> to vector<64x32xbf16>
    %cst_38 = arith.constant dense<0.000000e+00> : vector<16x32xf32>
    %107 = tpu.matmul %105, %106, %cst_38 {dimension_numbers = #tpu.dot_dimension_numbers<[1], [0], [0], [1], [0, 0, 1, 1], [], []>} : vector<16x64xbf16>, vector<64x32xbf16>, vector<16x32xf32> -> vector<16x32xf32>
    %108 = vector.broadcast %97 : vector<1x32xf32> to vector<16x32xf32>
    %109 = arith.addf %107, %108 : vector<16x32xf32>
    %c208 = arith.constant 208 : index
    %c0_39 = arith.constant 0 : index
    %110 = vector.load %arg4[%c208, %c0_39] : memref<1528x128xf32, #tpu.memory_space<vmem>>, vector<1x32xf32>
    %c216 = arith.constant 216 : index
    %c0_40 = arith.constant 0 : index
    %111 = vector.load %arg4[%c216, %c0_40] : memref<1528x128xf32, #tpu.memory_space<vmem>>, vector<1x32xf32>
    %112 = arith.addf %93, %109 : vector<16x32xf32>
    %cst_41 = arith.constant dense<0.000000e+00> : vector<16xf32>
    %113 = vector.multi_reduction <add>, %112, %cst_41 [1] : vector<16x32xf32> to vector<16xf32>
    %114 = vector.shape_cast %113 : vector<16xf32> to vector<16x1xf32>
    %cst_42 = arith.constant 3.200000e+01 : f32
    %115 = vector.broadcast %cst_42 : f32 to vector<16x1xf32>
    %116 = arith.divf %114, %115 : vector<16x1xf32>
    %117 = vector.broadcast %116 : vector<16x1xf32> to vector<16x32xf32>
    %118 = arith.subf %112, %117 : vector<16x32xf32>
    %119 = arith.mulf %118, %118 : vector<16x32xf32>
    %cst_43 = arith.constant dense<0.000000e+00> : vector<16xf32>
    %120 = vector.multi_reduction <add>, %119, %cst_43 [1] : vector<16x32xf32> to vector<16xf32>
    %121 = vector.shape_cast %120 : vector<16xf32> to vector<16x1xf32>
    %cst_44 = arith.constant 3.200000e+01 : f32
    %122 = vector.broadcast %cst_44 : f32 to vector<16x1xf32>
    %123 = arith.divf %121, %122 : vector<16x1xf32>
    %124 = vector.broadcast %116 : vector<16x1xf32> to vector<16x32xf32>
    %125 = arith.subf %112, %124 : vector<16x32xf32>
    %cst_45 = arith.constant 9.99999974E-6 : f32
    %126 = vector.broadcast %cst_45 : f32 to vector<16x1xf32>
    %127 = arith.addf %123, %126 : vector<16x1xf32>
    %128 = math.rsqrt %127 : vector<16x1xf32>
    %129 = vector.broadcast %128 : vector<16x1xf32> to vector<16x32xf32>
    %130 = arith.mulf %125, %129 : vector<16x32xf32>
    %131 = vector.broadcast %110 : vector<1x32xf32> to vector<16x32xf32>
    %132 = arith.mulf %130, %131 : vector<16x32xf32>
    %133 = vector.broadcast %111 : vector<1x32xf32> to vector<16x32xf32>
    %134 = arith.addf %132, %133 : vector<16x32xf32>
    %c224 = arith.constant 224 : index
    %c0_46 = arith.constant 0 : index
    %135 = vector.load %arg4[%c224, %c0_46] : memref<1528x128xf32, #tpu.memory_space<vmem>>, vector<32x96xf32>
    %136 = arith.truncf %134 : vector<16x32xf32> to vector<16x32xbf16>
    %137 = arith.truncf %135 : vector<32x96xf32> to vector<32x96xbf16>
    %cst_47 = arith.constant dense<0.000000e+00> : vector<16x96xf32>
    %138 = tpu.matmul %136, %137, %cst_47 {dimension_numbers = #tpu.dot_dimension_numbers<[1], [0], [0], [1], [0, 0, 1, 1], [], []>} : vector<16x32xbf16>, vector<32x96xbf16>, vector<16x96xf32> -> vector<16x96xf32>
    %c256 = arith.constant 256 : index
    %c0_48 = arith.constant 0 : index
    %139 = vector.load %arg4[%c256, %c0_48] : memref<1528x128xf32, #tpu.memory_space<vmem>>, vector<1x96xf32>
    %140 = vector.broadcast %139 : vector<1x96xf32> to vector<16x96xf32>
    %141 = arith.addf %138, %140 : vector<16x96xf32>
    %142 = vector.extract_strided_slice %141 {offsets = [0, 0], sizes = [16, 32], strides = [1, 1]} : vector<16x96xf32> to vector<16x32xf32>
    %143 = vector.extract_strided_slice %141 {offsets = [0, 32], sizes = [16, 32], strides = [1, 1]} : vector<16x96xf32> to vector<16x32xf32>
    %144 = vector.extract_strided_slice %141 {offsets = [0, 64], sizes = [16, 32], strides = [1, 1]} : vector<16x96xf32> to vector<16x32xf32>
    %c264 = arith.constant 264 : index
    %c0_49 = arith.constant 0 : index
    %145 = vector.load %arg4[%c264, %c0_49] : memref<1528x128xf32, #tpu.memory_space<vmem>>, vector<32x32xf32>
    %c296 = arith.constant 296 : index
    %c0_50 = arith.constant 0 : index
    %146 = vector.load %arg4[%c296, %c0_50] : memref<1528x128xf32, #tpu.memory_space<vmem>>, vector<1x32xf32>
    %147 = tpu.concatenate %143, %143, %143, %143 in 0 : vector<16x32xf32>, vector<16x32xf32>, vector<16x32xf32>, vector<16x32xf32> -> vector<64x32xf32>
    %148 = arith.mulf %147, %26 : vector<64x32xf32>
    %149 = arith.truncf %148 : vector<64x32xf32> to vector<64x32xbf16>
    %150 = tpu.concatenate %144, %144, %144, %144 in 0 : vector<16x32xf32>, vector<16x32xf32>, vector<16x32xf32>, vector<16x32xf32> -> vector<64x32xf32>
    %151 = arith.mulf %150, %26 : vector<64x32xf32>
    %152 = arith.truncf %151 : vector<64x32xf32> to vector<64x32xbf16>
    %153 = arith.truncf %142 : vector<16x32xf32> to vector<16x32xbf16>
    %cst_51 = arith.constant dense<0.000000e+00> : vector<16x64xf32>
    %154 = tpu.matmul %153, %149, %cst_51 {dimension_numbers = #tpu.dot_dimension_numbers<[1], [1], [0], [0], [0, 0, 1, 0], [], []>} : vector<16x32xbf16>, vector<64x32xbf16>, vector<16x64xf32> -> vector<16x64xf32>
    %cst_52 = arith.constant 0.353553385 : f32
    %155 = vector.broadcast %cst_52 : f32 to vector<16x64xf32>
    %156 = arith.mulf %154, %155 : vector<16x64xf32>
    %157 = arith.addf %156, %21 : vector<16x64xf32>
    %cst_53 = arith.constant dense<0xFF800000> : vector<16xf32>
    %158 = vector.multi_reduction <maximumf>, %157, %cst_53 [1] : vector<16x64xf32> to vector<16xf32>
    %159 = vector.shape_cast %158 : vector<16xf32> to vector<16x1xf32>
    %160 = vector.broadcast %159 : vector<16x1xf32> to vector<16x64xf32>
    %161 = arith.subf %157, %160 : vector<16x64xf32>
    %162 = math.exp %161 : vector<16x64xf32>
    %cst_54 = arith.constant dense<0.000000e+00> : vector<16x64xf32>
    %163 = tpu.matmul %162, %27, %cst_54 {dimension_numbers = #tpu.dot_dimension_numbers<[1], [0], [0], [1], [0, 0, 1, 1], [], []>} : vector<16x64xf32>, vector<64x64xf32>, vector<16x64xf32> -> vector<16x64xf32>
    %164 = tpu.reciprocal %163 {approx = true} : vector<16x64xf32> -> vector<16x64xf32>
    %165 = arith.mulf %162, %164 : vector<16x64xf32>
    %166 = arith.truncf %165 : vector<16x64xf32> to vector<16x64xbf16>
    %cst_55 = arith.constant dense<0.000000e+00> : vector<16x32xf32>
    %167 = tpu.matmul %166, %152, %cst_55 {dimension_numbers = #tpu.dot_dimension_numbers<[1], [0], [0], [1], [0, 0, 1, 1], [], []>} : vector<16x64xbf16>, vector<64x32xbf16>, vector<16x32xf32> -> vector<16x32xf32>
    %168 = arith.truncf %167 : vector<16x32xf32> to vector<16x32xbf16>
    %169 = arith.truncf %145 : vector<32x32xf32> to vector<32x32xbf16>
    %cst_56 = arith.constant dense<0.000000e+00> : vector<16x32xf32>
    %170 = tpu.matmul %168, %169, %cst_56 {dimension_numbers = #tpu.dot_dimension_numbers<[1], [0], [0], [1], [0, 0, 1, 1], [], []>} : vector<16x32xbf16>, vector<32x32xbf16>, vector<16x32xf32> -> vector<16x32xf32>
    %171 = vector.broadcast %146 : vector<1x32xf32> to vector<16x32xf32>
    %172 = arith.addf %170, %171 : vector<16x32xf32>
    %c304 = arith.constant 304 : index
    %c0_57 = arith.constant 0 : index
    %173 = vector.load %arg4[%c304, %c0_57] : memref<1528x128xf32, #tpu.memory_space<vmem>>, vector<1x32xf32>
    %c312 = arith.constant 312 : index
    %c0_58 = arith.constant 0 : index
    %174 = vector.load %arg4[%c312, %c0_58] : memref<1528x128xf32, #tpu.memory_space<vmem>>, vector<1x32xf32>
    %175 = arith.addf %134, %172 : vector<16x32xf32>
    %cst_59 = arith.constant dense<0.000000e+00> : vector<16xf32>
    %176 = vector.multi_reduction <add>, %175, %cst_59 [1] : vector<16x32xf32> to vector<16xf32>
    %177 = vector.shape_cast %176 : vector<16xf32> to vector<16x1xf32>
    %cst_60 = arith.constant 3.200000e+01 : f32
    %178 = vector.broadcast %cst_60 : f32 to vector<16x1xf32>
    %179 = arith.divf %177, %178 : vector<16x1xf32>
    %180 = vector.broadcast %179 : vector<16x1xf32> to vector<16x32xf32>
    %181 = arith.subf %175, %180 : vector<16x32xf32>
    %182 = arith.mulf %181, %181 : vector<16x32xf32>
    %cst_61 = arith.constant dense<0.000000e+00> : vector<16xf32>
    %183 = vector.multi_reduction <add>, %182, %cst_61 [1] : vector<16x32xf32> to vector<16xf32>
    %184 = vector.shape_cast %183 : vector<16xf32> to vector<16x1xf32>
    %cst_62 = arith.constant 3.200000e+01 : f32
    %185 = vector.broadcast %cst_62 : f32 to vector<16x1xf32>
    %186 = arith.divf %184, %185 : vector<16x1xf32>
    %187 = vector.broadcast %179 : vector<16x1xf32> to vector<16x32xf32>
    %188 = arith.subf %175, %187 : vector<16x32xf32>
    %cst_63 = arith.constant 9.99999974E-6 : f32
    %189 = vector.broadcast %cst_63 : f32 to vector<16x1xf32>
    %190 = arith.addf %186, %189 : vector<16x1xf32>
    %191 = math.rsqrt %190 : vector<16x1xf32>
    %192 = vector.broadcast %191 : vector<16x1xf32> to vector<16x32xf32>
    %193 = arith.mulf %188, %192 : vector<16x32xf32>
    %194 = vector.broadcast %173 : vector<1x32xf32> to vector<16x32xf32>
    %195 = arith.mulf %193, %194 : vector<16x32xf32>
    %196 = vector.broadcast %174 : vector<1x32xf32> to vector<16x32xf32>
    %197 = arith.addf %195, %196 : vector<16x32xf32>
    %c320 = arith.constant 320 : index
    %c0_64 = arith.constant 0 : index
    %198 = vector.load %arg4[%c320, %c0_64] : memref<1528x128xf32, #tpu.memory_space<vmem>>, vector<32x64xf32>
    %c352 = arith.constant 352 : index
    %c0_65 = arith.constant 0 : index
    %199 = vector.load %arg4[%c352, %c0_65] : memref<1528x128xf32, #tpu.memory_space<vmem>>, vector<1x64xf32>
    %c360 = arith.constant 360 : index
    %c0_66 = arith.constant 0 : index
    %200 = vector.load %arg4[%c360, %c0_66] : memref<1528x128xf32, #tpu.memory_space<vmem>>, vector<64x32xf32>
    %c424 = arith.constant 424 : index
    %c0_67 = arith.constant 0 : index
    %201 = vector.load %arg4[%c424, %c0_67] : memref<1528x128xf32, #tpu.memory_space<vmem>>, vector<1x32xf32>
    %202 = arith.truncf %197 : vector<16x32xf32> to vector<16x32xbf16>
    %203 = arith.truncf %198 : vector<32x64xf32> to vector<32x64xbf16>
    %cst_68 = arith.constant dense<0.000000e+00> : vector<16x64xf32>
    %204 = tpu.matmul %202, %203, %cst_68 {dimension_numbers = #tpu.dot_dimension_numbers<[1], [0], [0], [1], [0, 0, 1, 1], [], []>} : vector<16x32xbf16>, vector<32x64xbf16>, vector<16x64xf32> -> vector<16x64xf32>
    %205 = vector.broadcast %199 : vector<1x64xf32> to vector<16x64xf32>
    %206 = arith.addf %204, %205 : vector<16x64xf32>
    %cst_69 = arith.constant 0.000000e+00 : f32
    %207 = vector.broadcast %cst_69 : f32 to vector<16x64xf32>
    %208 = arith.maximumf %206, %207 : vector<16x64xf32>
    %209 = arith.truncf %208 : vector<16x64xf32> to vector<16x64xbf16>
    %210 = arith.truncf %200 : vector<64x32xf32> to vector<64x32xbf16>
    %cst_70 = arith.constant dense<0.000000e+00> : vector<16x32xf32>
    %211 = tpu.matmul %209, %210, %cst_70 {dimension_numbers = #tpu.dot_dimension_numbers<[1], [0], [0], [1], [0, 0, 1, 1], [], []>} : vector<16x64xbf16>, vector<64x32xbf16>, vector<16x32xf32> -> vector<16x32xf32>
    %212 = vector.broadcast %201 : vector<1x32xf32> to vector<16x32xf32>
    %213 = arith.addf %211, %212 : vector<16x32xf32>
    %c432 = arith.constant 432 : index
    %c0_71 = arith.constant 0 : index
    %214 = vector.load %arg4[%c432, %c0_71] : memref<1528x128xf32, #tpu.memory_space<vmem>>, vector<1x32xf32>
    %c440 = arith.constant 440 : index
    %c0_72 = arith.constant 0 : index
    %215 = vector.load %arg4[%c440, %c0_72] : memref<1528x128xf32, #tpu.memory_space<vmem>>, vector<1x32xf32>
    %216 = arith.addf %197, %213 : vector<16x32xf32>
    %cst_73 = arith.constant dense<0.000000e+00> : vector<16xf32>
    %217 = vector.multi_reduction <add>, %216, %cst_73 [1] : vector<16x32xf32> to vector<16xf32>
    %218 = vector.shape_cast %217 : vector<16xf32> to vector<16x1xf32>
    %cst_74 = arith.constant 3.200000e+01 : f32
    %219 = vector.broadcast %cst_74 : f32 to vector<16x1xf32>
    %220 = arith.divf %218, %219 : vector<16x1xf32>
    %221 = vector.broadcast %220 : vector<16x1xf32> to vector<16x32xf32>
    %222 = arith.subf %216, %221 : vector<16x32xf32>
    %223 = arith.mulf %222, %222 : vector<16x32xf32>
    %cst_75 = arith.constant dense<0.000000e+00> : vector<16xf32>
    %224 = vector.multi_reduction <add>, %223, %cst_75 [1] : vector<16x32xf32> to vector<16xf32>
    %225 = vector.shape_cast %224 : vector<16xf32> to vector<16x1xf32>
    %cst_76 = arith.constant 3.200000e+01 : f32
    %226 = vector.broadcast %cst_76 : f32 to vector<16x1xf32>
    %227 = arith.divf %225, %226 : vector<16x1xf32>
    %228 = vector.broadcast %220 : vector<16x1xf32> to vector<16x32xf32>
    %229 = arith.subf %216, %228 : vector<16x32xf32>
    %cst_77 = arith.constant 9.99999974E-6 : f32
    %230 = vector.broadcast %cst_77 : f32 to vector<16x1xf32>
    %231 = arith.addf %227, %230 : vector<16x1xf32>
    %232 = math.rsqrt %231 : vector<16x1xf32>
    %233 = vector.broadcast %232 : vector<16x1xf32> to vector<16x32xf32>
    %234 = arith.mulf %229, %233 : vector<16x32xf32>
    %235 = vector.broadcast %214 : vector<1x32xf32> to vector<16x32xf32>
    %236 = arith.mulf %234, %235 : vector<16x32xf32>
    %237 = vector.broadcast %215 : vector<1x32xf32> to vector<16x32xf32>
    %238 = arith.addf %236, %237 : vector<16x32xf32>
    %c0_78 = arith.constant 0 : index
    %c0_79 = arith.constant 0 : index
    %239 = vector.load %arg3[%c0_78, %c0_79] : memref<16x32xf32, #tpu.memory_space<vmem>>, vector<16x32xf32>
    %c448 = arith.constant 448 : index
    %c0_80 = arith.constant 0 : index
    %240 = vector.load %arg4[%c448, %c0_80] : memref<1528x128xf32, #tpu.memory_space<vmem>>, vector<32x96xf32>
    %241 = arith.truncf %239 : vector<16x32xf32> to vector<16x32xbf16>
    %242 = arith.truncf %240 : vector<32x96xf32> to vector<32x96xbf16>
    %cst_81 = arith.constant dense<0.000000e+00> : vector<16x96xf32>
    %243 = tpu.matmul %241, %242, %cst_81 {dimension_numbers = #tpu.dot_dimension_numbers<[1], [0], [0], [1], [0, 0, 1, 1], [], []>} : vector<16x32xbf16>, vector<32x96xbf16>, vector<16x96xf32> -> vector<16x96xf32>
    %c480 = arith.constant 480 : index
    %c0_82 = arith.constant 0 : index
    %244 = vector.load %arg4[%c480, %c0_82] : memref<1528x128xf32, #tpu.memory_space<vmem>>, vector<1x96xf32>
    %245 = vector.broadcast %244 : vector<1x96xf32> to vector<16x96xf32>
    %246 = arith.addf %243, %245 : vector<16x96xf32>
    %247 = vector.extract_strided_slice %246 {offsets = [0, 0], sizes = [16, 32], strides = [1, 1]} : vector<16x96xf32> to vector<16x32xf32>
    %248 = vector.extract_strided_slice %246 {offsets = [0, 32], sizes = [16, 32], strides = [1, 1]} : vector<16x96xf32> to vector<16x32xf32>
    %249 = vector.extract_strided_slice %246 {offsets = [0, 64], sizes = [16, 32], strides = [1, 1]} : vector<16x96xf32> to vector<16x32xf32>
    %c488 = arith.constant 488 : index
    %c0_83 = arith.constant 0 : index
    %250 = vector.load %arg4[%c488, %c0_83] : memref<1528x128xf32, #tpu.memory_space<vmem>>, vector<32x32xf32>
    %c520 = arith.constant 520 : index
    %c0_84 = arith.constant 0 : index
    %251 = vector.load %arg4[%c520, %c0_84] : memref<1528x128xf32, #tpu.memory_space<vmem>>, vector<1x32xf32>
    %252 = tpu.concatenate %248, %248, %248, %248 in 0 : vector<16x32xf32>, vector<16x32xf32>, vector<16x32xf32>, vector<16x32xf32> -> vector<64x32xf32>
    %253 = arith.mulf %252, %28 : vector<64x32xf32>
    %254 = arith.truncf %253 : vector<64x32xf32> to vector<64x32xbf16>
    %255 = tpu.concatenate %249, %249, %249, %249 in 0 : vector<16x32xf32>, vector<16x32xf32>, vector<16x32xf32>, vector<16x32xf32> -> vector<64x32xf32>
    %256 = arith.mulf %255, %28 : vector<64x32xf32>
    %257 = arith.truncf %256 : vector<64x32xf32> to vector<64x32xbf16>
    %258 = arith.truncf %247 : vector<16x32xf32> to vector<16x32xbf16>
    %cst_85 = arith.constant dense<0.000000e+00> : vector<16x64xf32>
    %259 = tpu.matmul %258, %254, %cst_85 {dimension_numbers = #tpu.dot_dimension_numbers<[1], [1], [0], [0], [0, 0, 1, 0], [], []>} : vector<16x32xbf16>, vector<64x32xbf16>, vector<16x64xf32> -> vector<16x64xf32>
    %cst_86 = arith.constant 0.353553385 : f32
    %260 = vector.broadcast %cst_86 : f32 to vector<16x64xf32>
    %261 = arith.mulf %259, %260 : vector<16x64xf32>
    %262 = arith.addf %261, %22 : vector<16x64xf32>
    %cst_87 = arith.constant dense<0xFF800000> : vector<16xf32>
    %263 = vector.multi_reduction <maximumf>, %262, %cst_87 [1] : vector<16x64xf32> to vector<16xf32>
    %264 = vector.shape_cast %263 : vector<16xf32> to vector<16x1xf32>
    %265 = vector.broadcast %264 : vector<16x1xf32> to vector<16x64xf32>
    %266 = arith.subf %262, %265 : vector<16x64xf32>
    %267 = math.exp %266 : vector<16x64xf32>
    %cst_88 = arith.constant dense<0.000000e+00> : vector<16x64xf32>
    %268 = tpu.matmul %267, %29, %cst_88 {dimension_numbers = #tpu.dot_dimension_numbers<[1], [0], [0], [1], [0, 0, 1, 1], [], []>} : vector<16x64xf32>, vector<64x64xf32>, vector<16x64xf32> -> vector<16x64xf32>
    %269 = tpu.reciprocal %268 {approx = true} : vector<16x64xf32> -> vector<16x64xf32>
    %270 = arith.mulf %267, %269 : vector<16x64xf32>
    %271 = arith.truncf %270 : vector<16x64xf32> to vector<16x64xbf16>
    %cst_89 = arith.constant dense<0.000000e+00> : vector<16x32xf32>
    %272 = tpu.matmul %271, %257, %cst_89 {dimension_numbers = #tpu.dot_dimension_numbers<[1], [0], [0], [1], [0, 0, 1, 1], [], []>} : vector<16x64xbf16>, vector<64x32xbf16>, vector<16x32xf32> -> vector<16x32xf32>
    %273 = arith.truncf %272 : vector<16x32xf32> to vector<16x32xbf16>
    %274 = arith.truncf %250 : vector<32x32xf32> to vector<32x32xbf16>
    %cst_90 = arith.constant dense<0.000000e+00> : vector<16x32xf32>
    %275 = tpu.matmul %273, %274, %cst_90 {dimension_numbers = #tpu.dot_dimension_numbers<[1], [0], [0], [1], [0, 0, 1, 1], [], []>} : vector<16x32xbf16>, vector<32x32xbf16>, vector<16x32xf32> -> vector<16x32xf32>
    %276 = vector.broadcast %251 : vector<1x32xf32> to vector<16x32xf32>
    %277 = arith.addf %275, %276 : vector<16x32xf32>
    %c528 = arith.constant 528 : index
    %c0_91 = arith.constant 0 : index
    %278 = vector.load %arg4[%c528, %c0_91] : memref<1528x128xf32, #tpu.memory_space<vmem>>, vector<1x32xf32>
    %c536 = arith.constant 536 : index
    %c0_92 = arith.constant 0 : index
    %279 = vector.load %arg4[%c536, %c0_92] : memref<1528x128xf32, #tpu.memory_space<vmem>>, vector<1x32xf32>
    %280 = arith.addf %239, %277 : vector<16x32xf32>
    %cst_93 = arith.constant dense<0.000000e+00> : vector<16xf32>
    %281 = vector.multi_reduction <add>, %280, %cst_93 [1] : vector<16x32xf32> to vector<16xf32>
    %282 = vector.shape_cast %281 : vector<16xf32> to vector<16x1xf32>
    %cst_94 = arith.constant 3.200000e+01 : f32
    %283 = vector.broadcast %cst_94 : f32 to vector<16x1xf32>
    %284 = arith.divf %282, %283 : vector<16x1xf32>
    %285 = vector.broadcast %284 : vector<16x1xf32> to vector<16x32xf32>
    %286 = arith.subf %280, %285 : vector<16x32xf32>
    %287 = arith.mulf %286, %286 : vector<16x32xf32>
    %cst_95 = arith.constant dense<0.000000e+00> : vector<16xf32>
    %288 = vector.multi_reduction <add>, %287, %cst_95 [1] : vector<16x32xf32> to vector<16xf32>
    %289 = vector.shape_cast %288 : vector<16xf32> to vector<16x1xf32>
    %cst_96 = arith.constant 3.200000e+01 : f32
    %290 = vector.broadcast %cst_96 : f32 to vector<16x1xf32>
    %291 = arith.divf %289, %290 : vector<16x1xf32>
    %292 = vector.broadcast %284 : vector<16x1xf32> to vector<16x32xf32>
    %293 = arith.subf %280, %292 : vector<16x32xf32>
    %cst_97 = arith.constant 9.99999974E-6 : f32
    %294 = vector.broadcast %cst_97 : f32 to vector<16x1xf32>
    %295 = arith.addf %291, %294 : vector<16x1xf32>
    %296 = math.rsqrt %295 : vector<16x1xf32>
    %297 = vector.broadcast %296 : vector<16x1xf32> to vector<16x32xf32>
    %298 = arith.mulf %293, %297 : vector<16x32xf32>
    %299 = vector.broadcast %278 : vector<1x32xf32> to vector<16x32xf32>
    %300 = arith.mulf %298, %299 : vector<16x32xf32>
    %301 = vector.broadcast %279 : vector<1x32xf32> to vector<16x32xf32>
    %302 = arith.addf %300, %301 : vector<16x32xf32>
    %c544 = arith.constant 544 : index
    %c0_98 = arith.constant 0 : index
    %303 = vector.load %arg4[%c544, %c0_98] : memref<1528x128xf32, #tpu.memory_space<vmem>>, vector<32x32xf32>
    %304 = arith.truncf %239 : vector<16x32xf32> to vector<16x32xbf16>
    %305 = arith.truncf %303 : vector<32x32xf32> to vector<32x32xbf16>
    %cst_99 = arith.constant dense<0.000000e+00> : vector<16x32xf32>
    %306 = tpu.matmul %304, %305, %cst_99 {dimension_numbers = #tpu.dot_dimension_numbers<[1], [0], [0], [1], [0, 0, 1, 1], [], []>} : vector<16x32xbf16>, vector<32x32xbf16>, vector<16x32xf32> -> vector<16x32xf32>
    %c576 = arith.constant 576 : index
    %c0_100 = arith.constant 0 : index
    %307 = vector.load %arg4[%c576, %c0_100] : memref<1528x128xf32, #tpu.memory_space<vmem>>, vector<1x32xf32>
    %308 = vector.broadcast %307 : vector<1x32xf32> to vector<16x32xf32>
    %309 = arith.addf %306, %308 : vector<16x32xf32>
    %c584 = arith.constant 584 : index
    %c0_101 = arith.constant 0 : index
    %310 = vector.load %arg4[%c584, %c0_101] : memref<1528x128xf32, #tpu.memory_space<vmem>>, vector<32x64xf32>
    %311 = arith.truncf %238 : vector<16x32xf32> to vector<16x32xbf16>
    %312 = arith.truncf %310 : vector<32x64xf32> to vector<32x64xbf16>
    %cst_102 = arith.constant dense<0.000000e+00> : vector<16x64xf32>
    %313 = tpu.matmul %311, %312, %cst_102 {dimension_numbers = #tpu.dot_dimension_numbers<[1], [0], [0], [1], [0, 0, 1, 1], [], []>} : vector<16x32xbf16>, vector<32x64xbf16>, vector<16x64xf32> -> vector<16x64xf32>
    %c616 = arith.constant 616 : index
    %c0_103 = arith.constant 0 : index
    %314 = vector.load %arg4[%c616, %c0_103] : memref<1528x128xf32, #tpu.memory_space<vmem>>, vector<1x64xf32>
    %315 = vector.broadcast %314 : vector<1x64xf32> to vector<16x64xf32>
    %316 = arith.addf %313, %315 : vector<16x64xf32>
    %317 = vector.extract_strided_slice %316 {offsets = [0, 0], sizes = [16, 32], strides = [1, 1]} : vector<16x64xf32> to vector<16x32xf32>
    %318 = vector.extract_strided_slice %316 {offsets = [0, 32], sizes = [16, 32], strides = [1, 1]} : vector<16x64xf32> to vector<16x32xf32>
    %c624 = arith.constant 624 : index
    %c0_104 = arith.constant 0 : index
    %319 = vector.load %arg4[%c624, %c0_104] : memref<1528x128xf32, #tpu.memory_space<vmem>>, vector<32x32xf32>
    %c656 = arith.constant 656 : index
    %c0_105 = arith.constant 0 : index
    %320 = vector.load %arg4[%c656, %c0_105] : memref<1528x128xf32, #tpu.memory_space<vmem>>, vector<1x32xf32>
    %321 = tpu.concatenate %317, %317, %317, %317 in 0 : vector<16x32xf32>, vector<16x32xf32>, vector<16x32xf32>, vector<16x32xf32> -> vector<64x32xf32>
    %322 = arith.mulf %321, %26 : vector<64x32xf32>
    %323 = arith.truncf %322 : vector<64x32xf32> to vector<64x32xbf16>
    %324 = tpu.concatenate %318, %318, %318, %318 in 0 : vector<16x32xf32>, vector<16x32xf32>, vector<16x32xf32>, vector<16x32xf32> -> vector<64x32xf32>
    %325 = arith.mulf %324, %26 : vector<64x32xf32>
    %326 = arith.truncf %325 : vector<64x32xf32> to vector<64x32xbf16>
    %327 = arith.truncf %309 : vector<16x32xf32> to vector<16x32xbf16>
    %cst_106 = arith.constant dense<0.000000e+00> : vector<16x64xf32>
    %328 = tpu.matmul %327, %323, %cst_106 {dimension_numbers = #tpu.dot_dimension_numbers<[1], [1], [0], [0], [0, 0, 1, 0], [], []>} : vector<16x32xbf16>, vector<64x32xbf16>, vector<16x64xf32> -> vector<16x64xf32>
    %cst_107 = arith.constant 0.353553385 : f32
    %329 = vector.broadcast %cst_107 : f32 to vector<16x64xf32>
    %330 = arith.mulf %328, %329 : vector<16x64xf32>
    %331 = arith.addf %330, %25 : vector<16x64xf32>
    %cst_108 = arith.constant dense<0xFF800000> : vector<16xf32>
    %332 = vector.multi_reduction <maximumf>, %331, %cst_108 [1] : vector<16x64xf32> to vector<16xf32>
    %333 = vector.shape_cast %332 : vector<16xf32> to vector<16x1xf32>
    %334 = vector.broadcast %333 : vector<16x1xf32> to vector<16x64xf32>
    %335 = arith.subf %331, %334 : vector<16x64xf32>
    %336 = math.exp %335 : vector<16x64xf32>
    %cst_109 = arith.constant dense<0.000000e+00> : vector<16x64xf32>
    %337 = tpu.matmul %336, %27, %cst_109 {dimension_numbers = #tpu.dot_dimension_numbers<[1], [0], [0], [1], [0, 0, 1, 1], [], []>} : vector<16x64xf32>, vector<64x64xf32>, vector<16x64xf32> -> vector<16x64xf32>
    %338 = tpu.reciprocal %337 {approx = true} : vector<16x64xf32> -> vector<16x64xf32>
    %339 = arith.mulf %336, %338 : vector<16x64xf32>
    %340 = arith.truncf %339 : vector<16x64xf32> to vector<16x64xbf16>
    %cst_110 = arith.constant dense<0.000000e+00> : vector<16x32xf32>
    %341 = tpu.matmul %340, %326, %cst_110 {dimension_numbers = #tpu.dot_dimension_numbers<[1], [0], [0], [1], [0, 0, 1, 1], [], []>} : vector<16x64xbf16>, vector<64x32xbf16>, vector<16x32xf32> -> vector<16x32xf32>
    %342 = arith.truncf %341 : vector<16x32xf32> to vector<16x32xbf16>
    %343 = arith.truncf %319 : vector<32x32xf32> to vector<32x32xbf16>
    %cst_111 = arith.constant dense<0.000000e+00> : vector<16x32xf32>
    %344 = tpu.matmul %342, %343, %cst_111 {dimension_numbers = #tpu.dot_dimension_numbers<[1], [0], [0], [1], [0, 0, 1, 1], [], []>} : vector<16x32xbf16>, vector<32x32xbf16>, vector<16x32xf32> -> vector<16x32xf32>
    %345 = vector.broadcast %320 : vector<1x32xf32> to vector<16x32xf32>
    %346 = arith.addf %344, %345 : vector<16x32xf32>
    %c664 = arith.constant 664 : index
    %c0_112 = arith.constant 0 : index
    %347 = vector.load %arg4[%c664, %c0_112] : memref<1528x128xf32, #tpu.memory_space<vmem>>, vector<1x32xf32>
    %c672 = arith.constant 672 : index
    %c0_113 = arith.constant 0 : index
    %348 = vector.load %arg4[%c672, %c0_113] : memref<1528x128xf32, #tpu.memory_space<vmem>>, vector<1x32xf32>
    %349 = arith.addf %302, %346 : vector<16x32xf32>
    %cst_114 = arith.constant dense<0.000000e+00> : vector<16xf32>
    %350 = vector.multi_reduction <add>, %349, %cst_114 [1] : vector<16x32xf32> to vector<16xf32>
    %351 = vector.shape_cast %350 : vector<16xf32> to vector<16x1xf32>
    %cst_115 = arith.constant 3.200000e+01 : f32
    %352 = vector.broadcast %cst_115 : f32 to vector<16x1xf32>
    %353 = arith.divf %351, %352 : vector<16x1xf32>
    %354 = vector.broadcast %353 : vector<16x1xf32> to vector<16x32xf32>
    %355 = arith.subf %349, %354 : vector<16x32xf32>
    %356 = arith.mulf %355, %355 : vector<16x32xf32>
    %cst_116 = arith.constant dense<0.000000e+00> : vector<16xf32>
    %357 = vector.multi_reduction <add>, %356, %cst_116 [1] : vector<16x32xf32> to vector<16xf32>
    %358 = vector.shape_cast %357 : vector<16xf32> to vector<16x1xf32>
    %cst_117 = arith.constant 3.200000e+01 : f32
    %359 = vector.broadcast %cst_117 : f32 to vector<16x1xf32>
    %360 = arith.divf %358, %359 : vector<16x1xf32>
    %361 = vector.broadcast %353 : vector<16x1xf32> to vector<16x32xf32>
    %362 = arith.subf %349, %361 : vector<16x32xf32>
    %cst_118 = arith.constant 9.99999974E-6 : f32
    %363 = vector.broadcast %cst_118 : f32 to vector<16x1xf32>
    %364 = arith.addf %360, %363 : vector<16x1xf32>
    %365 = math.rsqrt %364 : vector<16x1xf32>
    %366 = vector.broadcast %365 : vector<16x1xf32> to vector<16x32xf32>
    %367 = arith.mulf %362, %366 : vector<16x32xf32>
    %368 = vector.broadcast %347 : vector<1x32xf32> to vector<16x32xf32>
    %369 = arith.mulf %367, %368 : vector<16x32xf32>
    %370 = vector.broadcast %348 : vector<1x32xf32> to vector<16x32xf32>
    %371 = arith.addf %369, %370 : vector<16x32xf32>
    %c680 = arith.constant 680 : index
    %c0_119 = arith.constant 0 : index
    %372 = vector.load %arg4[%c680, %c0_119] : memref<1528x128xf32, #tpu.memory_space<vmem>>, vector<32x64xf32>
    %c712 = arith.constant 712 : index
    %c0_120 = arith.constant 0 : index
    %373 = vector.load %arg4[%c712, %c0_120] : memref<1528x128xf32, #tpu.memory_space<vmem>>, vector<1x64xf32>
    %c720 = arith.constant 720 : index
    %c0_121 = arith.constant 0 : index
    %374 = vector.load %arg4[%c720, %c0_121] : memref<1528x128xf32, #tpu.memory_space<vmem>>, vector<64x32xf32>
    %c784 = arith.constant 784 : index
    %c0_122 = arith.constant 0 : index
    %375 = vector.load %arg4[%c784, %c0_122] : memref<1528x128xf32, #tpu.memory_space<vmem>>, vector<1x32xf32>
    %376 = arith.truncf %371 : vector<16x32xf32> to vector<16x32xbf16>
    %377 = arith.truncf %372 : vector<32x64xf32> to vector<32x64xbf16>
    %cst_123 = arith.constant dense<0.000000e+00> : vector<16x64xf32>
    %378 = tpu.matmul %376, %377, %cst_123 {dimension_numbers = #tpu.dot_dimension_numbers<[1], [0], [0], [1], [0, 0, 1, 1], [], []>} : vector<16x32xbf16>, vector<32x64xbf16>, vector<16x64xf32> -> vector<16x64xf32>
    %379 = vector.broadcast %373 : vector<1x64xf32> to vector<16x64xf32>
    %380 = arith.addf %378, %379 : vector<16x64xf32>
    %cst_124 = arith.constant 0.000000e+00 : f32
    %381 = vector.broadcast %cst_124 : f32 to vector<16x64xf32>
    %382 = arith.maximumf %380, %381 : vector<16x64xf32>
    %383 = arith.truncf %382 : vector<16x64xf32> to vector<16x64xbf16>
    %384 = arith.truncf %374 : vector<64x32xf32> to vector<64x32xbf16>
    %cst_125 = arith.constant dense<0.000000e+00> : vector<16x32xf32>
    %385 = tpu.matmul %383, %384, %cst_125 {dimension_numbers = #tpu.dot_dimension_numbers<[1], [0], [0], [1], [0, 0, 1, 1], [], []>} : vector<16x64xbf16>, vector<64x32xbf16>, vector<16x32xf32> -> vector<16x32xf32>
    %386 = vector.broadcast %375 : vector<1x32xf32> to vector<16x32xf32>
    %387 = arith.addf %385, %386 : vector<16x32xf32>
    %c792 = arith.constant 792 : index
    %c0_126 = arith.constant 0 : index
    %388 = vector.load %arg4[%c792, %c0_126] : memref<1528x128xf32, #tpu.memory_space<vmem>>, vector<1x32xf32>
    %c800 = arith.constant 800 : index
    %c0_127 = arith.constant 0 : index
    %389 = vector.load %arg4[%c800, %c0_127] : memref<1528x128xf32, #tpu.memory_space<vmem>>, vector<1x32xf32>
    %390 = arith.addf %371, %387 : vector<16x32xf32>
    %cst_128 = arith.constant dense<0.000000e+00> : vector<16xf32>
    %391 = vector.multi_reduction <add>, %390, %cst_128 [1] : vector<16x32xf32> to vector<16xf32>
    %392 = vector.shape_cast %391 : vector<16xf32> to vector<16x1xf32>
    %cst_129 = arith.constant 3.200000e+01 : f32
    %393 = vector.broadcast %cst_129 : f32 to vector<16x1xf32>
    %394 = arith.divf %392, %393 : vector<16x1xf32>
    %395 = vector.broadcast %394 : vector<16x1xf32> to vector<16x32xf32>
    %396 = arith.subf %390, %395 : vector<16x32xf32>
    %397 = arith.mulf %396, %396 : vector<16x32xf32>
    %cst_130 = arith.constant dense<0.000000e+00> : vector<16xf32>
    %398 = vector.multi_reduction <add>, %397, %cst_130 [1] : vector<16x32xf32> to vector<16xf32>
    %399 = vector.shape_cast %398 : vector<16xf32> to vector<16x1xf32>
    %cst_131 = arith.constant 3.200000e+01 : f32
    %400 = vector.broadcast %cst_131 : f32 to vector<16x1xf32>
    %401 = arith.divf %399, %400 : vector<16x1xf32>
    %402 = vector.broadcast %394 : vector<16x1xf32> to vector<16x32xf32>
    %403 = arith.subf %390, %402 : vector<16x32xf32>
    %cst_132 = arith.constant 9.99999974E-6 : f32
    %404 = vector.broadcast %cst_132 : f32 to vector<16x1xf32>
    %405 = arith.addf %401, %404 : vector<16x1xf32>
    %406 = math.rsqrt %405 : vector<16x1xf32>
    %407 = vector.broadcast %406 : vector<16x1xf32> to vector<16x32xf32>
    %408 = arith.mulf %403, %407 : vector<16x32xf32>
    %409 = vector.broadcast %388 : vector<1x32xf32> to vector<16x32xf32>
    %410 = arith.mulf %408, %409 : vector<16x32xf32>
    %411 = vector.broadcast %389 : vector<1x32xf32> to vector<16x32xf32>
    %412 = arith.addf %410, %411 : vector<16x32xf32>
    %c808 = arith.constant 808 : index
    %c0_133 = arith.constant 0 : index
    %413 = vector.load %arg4[%c808, %c0_133] : memref<1528x128xf32, #tpu.memory_space<vmem>>, vector<32x96xf32>
    %414 = arith.truncf %412 : vector<16x32xf32> to vector<16x32xbf16>
    %415 = arith.truncf %413 : vector<32x96xf32> to vector<32x96xbf16>
    %cst_134 = arith.constant dense<0.000000e+00> : vector<16x96xf32>
    %416 = tpu.matmul %414, %415, %cst_134 {dimension_numbers = #tpu.dot_dimension_numbers<[1], [0], [0], [1], [0, 0, 1, 1], [], []>} : vector<16x32xbf16>, vector<32x96xbf16>, vector<16x96xf32> -> vector<16x96xf32>
    %c840 = arith.constant 840 : index
    %c0_135 = arith.constant 0 : index
    %417 = vector.load %arg4[%c840, %c0_135] : memref<1528x128xf32, #tpu.memory_space<vmem>>, vector<1x96xf32>
    %418 = vector.broadcast %417 : vector<1x96xf32> to vector<16x96xf32>
    %419 = arith.addf %416, %418 : vector<16x96xf32>
    %420 = vector.extract_strided_slice %419 {offsets = [0, 0], sizes = [16, 32], strides = [1, 1]} : vector<16x96xf32> to vector<16x32xf32>
    %421 = vector.extract_strided_slice %419 {offsets = [0, 32], sizes = [16, 32], strides = [1, 1]} : vector<16x96xf32> to vector<16x32xf32>
    %422 = vector.extract_strided_slice %419 {offsets = [0, 64], sizes = [16, 32], strides = [1, 1]} : vector<16x96xf32> to vector<16x32xf32>
    %c848 = arith.constant 848 : index
    %c0_136 = arith.constant 0 : index
    %423 = vector.load %arg4[%c848, %c0_136] : memref<1528x128xf32, #tpu.memory_space<vmem>>, vector<32x32xf32>
    %c880 = arith.constant 880 : index
    %c0_137 = arith.constant 0 : index
    %424 = vector.load %arg4[%c880, %c0_137] : memref<1528x128xf32, #tpu.memory_space<vmem>>, vector<1x32xf32>
    %425 = tpu.concatenate %421, %421, %421, %421 in 0 : vector<16x32xf32>, vector<16x32xf32>, vector<16x32xf32>, vector<16x32xf32> -> vector<64x32xf32>
    %426 = arith.mulf %425, %28 : vector<64x32xf32>
    %427 = arith.truncf %426 : vector<64x32xf32> to vector<64x32xbf16>
    %428 = tpu.concatenate %422, %422, %422, %422 in 0 : vector<16x32xf32>, vector<16x32xf32>, vector<16x32xf32>, vector<16x32xf32> -> vector<64x32xf32>
    %429 = arith.mulf %428, %28 : vector<64x32xf32>
    %430 = arith.truncf %429 : vector<64x32xf32> to vector<64x32xbf16>
    %431 = arith.truncf %420 : vector<16x32xf32> to vector<16x32xbf16>
    %cst_138 = arith.constant dense<0.000000e+00> : vector<16x64xf32>
    %432 = tpu.matmul %431, %427, %cst_138 {dimension_numbers = #tpu.dot_dimension_numbers<[1], [1], [0], [0], [0, 0, 1, 0], [], []>} : vector<16x32xbf16>, vector<64x32xbf16>, vector<16x64xf32> -> vector<16x64xf32>
    %cst_139 = arith.constant 0.353553385 : f32
    %433 = vector.broadcast %cst_139 : f32 to vector<16x64xf32>
    %434 = arith.mulf %432, %433 : vector<16x64xf32>
    %435 = arith.addf %434, %22 : vector<16x64xf32>
    %cst_140 = arith.constant dense<0xFF800000> : vector<16xf32>
    %436 = vector.multi_reduction <maximumf>, %435, %cst_140 [1] : vector<16x64xf32> to vector<16xf32>
    %437 = vector.shape_cast %436 : vector<16xf32> to vector<16x1xf32>
    %438 = vector.broadcast %437 : vector<16x1xf32> to vector<16x64xf32>
    %439 = arith.subf %435, %438 : vector<16x64xf32>
    %440 = math.exp %439 : vector<16x64xf32>
    %cst_141 = arith.constant dense<0.000000e+00> : vector<16x64xf32>
    %441 = tpu.matmul %440, %29, %cst_141 {dimension_numbers = #tpu.dot_dimension_numbers<[1], [0], [0], [1], [0, 0, 1, 1], [], []>} : vector<16x64xf32>, vector<64x64xf32>, vector<16x64xf32> -> vector<16x64xf32>
    %442 = tpu.reciprocal %441 {approx = true} : vector<16x64xf32> -> vector<16x64xf32>
    %443 = arith.mulf %440, %442 : vector<16x64xf32>
    %444 = arith.truncf %443 : vector<16x64xf32> to vector<16x64xbf16>
    %cst_142 = arith.constant dense<0.000000e+00> : vector<16x32xf32>
    %445 = tpu.matmul %444, %430, %cst_142 {dimension_numbers = #tpu.dot_dimension_numbers<[1], [0], [0], [1], [0, 0, 1, 1], [], []>} : vector<16x64xbf16>, vector<64x32xbf16>, vector<16x32xf32> -> vector<16x32xf32>
    %446 = arith.truncf %445 : vector<16x32xf32> to vector<16x32xbf16>
    %447 = arith.truncf %423 : vector<32x32xf32> to vector<32x32xbf16>
    %cst_143 = arith.constant dense<0.000000e+00> : vector<16x32xf32>
    %448 = tpu.matmul %446, %447, %cst_143 {dimension_numbers = #tpu.dot_dimension_numbers<[1], [0], [0], [1], [0, 0, 1, 1], [], []>} : vector<16x32xbf16>, vector<32x32xbf16>, vector<16x32xf32> -> vector<16x32xf32>
    %449 = vector.broadcast %424 : vector<1x32xf32> to vector<16x32xf32>
    %450 = arith.addf %448, %449 : vector<16x32xf32>
    %c888 = arith.constant 888 : index
    %c0_144 = arith.constant 0 : index
    %451 = vector.load %arg4[%c888, %c0_144] : memref<1528x128xf32, #tpu.memory_space<vmem>>, vector<1x32xf32>
    %c896 = arith.constant 896 : index
    %c0_145 = arith.constant 0 : index
    %452 = vector.load %arg4[%c896, %c0_145] : memref<1528x128xf32, #tpu.memory_space<vmem>>, vector<1x32xf32>
    %453 = arith.addf %412, %450 : vector<16x32xf32>
    %cst_146 = arith.constant dense<0.000000e+00> : vector<16xf32>
    %454 = vector.multi_reduction <add>, %453, %cst_146 [1] : vector<16x32xf32> to vector<16xf32>
    %455 = vector.shape_cast %454 : vector<16xf32> to vector<16x1xf32>
    %cst_147 = arith.constant 3.200000e+01 : f32
    %456 = vector.broadcast %cst_147 : f32 to vector<16x1xf32>
    %457 = arith.divf %455, %456 : vector<16x1xf32>
    %458 = vector.broadcast %457 : vector<16x1xf32> to vector<16x32xf32>
    %459 = arith.subf %453, %458 : vector<16x32xf32>
    %460 = arith.mulf %459, %459 : vector<16x32xf32>
    %cst_148 = arith.constant dense<0.000000e+00> : vector<16xf32>
    %461 = vector.multi_reduction <add>, %460, %cst_148 [1] : vector<16x32xf32> to vector<16xf32>
    %462 = vector.shape_cast %461 : vector<16xf32> to vector<16x1xf32>
    %cst_149 = arith.constant 3.200000e+01 : f32
    %463 = vector.broadcast %cst_149 : f32 to vector<16x1xf32>
    %464 = arith.divf %462, %463 : vector<16x1xf32>
    %465 = vector.broadcast %457 : vector<16x1xf32> to vector<16x32xf32>
    %466 = arith.subf %453, %465 : vector<16x32xf32>
    %cst_150 = arith.constant 9.99999974E-6 : f32
    %467 = vector.broadcast %cst_150 : f32 to vector<16x1xf32>
    %468 = arith.addf %464, %467 : vector<16x1xf32>
    %469 = math.rsqrt %468 : vector<16x1xf32>
    %470 = vector.broadcast %469 : vector<16x1xf32> to vector<16x32xf32>
    %471 = arith.mulf %466, %470 : vector<16x32xf32>
    %472 = vector.broadcast %451 : vector<1x32xf32> to vector<16x32xf32>
    %473 = arith.mulf %471, %472 : vector<16x32xf32>
    %474 = vector.broadcast %452 : vector<1x32xf32> to vector<16x32xf32>
    %475 = arith.addf %473, %474 : vector<16x32xf32>
    %c904 = arith.constant 904 : index
    %c0_151 = arith.constant 0 : index
    %476 = vector.load %arg4[%c904, %c0_151] : memref<1528x128xf32, #tpu.memory_space<vmem>>, vector<32x32xf32>
    %477 = arith.truncf %412 : vector<16x32xf32> to vector<16x32xbf16>
    %478 = arith.truncf %476 : vector<32x32xf32> to vector<32x32xbf16>
    %cst_152 = arith.constant dense<0.000000e+00> : vector<16x32xf32>
    %479 = tpu.matmul %477, %478, %cst_152 {dimension_numbers = #tpu.dot_dimension_numbers<[1], [0], [0], [1], [0, 0, 1, 1], [], []>} : vector<16x32xbf16>, vector<32x32xbf16>, vector<16x32xf32> -> vector<16x32xf32>
    %c936 = arith.constant 936 : index
    %c0_153 = arith.constant 0 : index
    %480 = vector.load %arg4[%c936, %c0_153] : memref<1528x128xf32, #tpu.memory_space<vmem>>, vector<1x32xf32>
    %481 = vector.broadcast %480 : vector<1x32xf32> to vector<16x32xf32>
    %482 = arith.addf %479, %481 : vector<16x32xf32>
    %c944 = arith.constant 944 : index
    %c0_154 = arith.constant 0 : index
    %483 = vector.load %arg4[%c944, %c0_154] : memref<1528x128xf32, #tpu.memory_space<vmem>>, vector<32x64xf32>
    %484 = arith.truncf %238 : vector<16x32xf32> to vector<16x32xbf16>
    %485 = arith.truncf %483 : vector<32x64xf32> to vector<32x64xbf16>
    %cst_155 = arith.constant dense<0.000000e+00> : vector<16x64xf32>
    %486 = tpu.matmul %484, %485, %cst_155 {dimension_numbers = #tpu.dot_dimension_numbers<[1], [0], [0], [1], [0, 0, 1, 1], [], []>} : vector<16x32xbf16>, vector<32x64xbf16>, vector<16x64xf32> -> vector<16x64xf32>
    %c976 = arith.constant 976 : index
    %c0_156 = arith.constant 0 : index
    %487 = vector.load %arg4[%c976, %c0_156] : memref<1528x128xf32, #tpu.memory_space<vmem>>, vector<1x64xf32>
    %488 = vector.broadcast %487 : vector<1x64xf32> to vector<16x64xf32>
    %489 = arith.addf %486, %488 : vector<16x64xf32>
    %490 = vector.extract_strided_slice %489 {offsets = [0, 0], sizes = [16, 32], strides = [1, 1]} : vector<16x64xf32> to vector<16x32xf32>
    %491 = vector.extract_strided_slice %489 {offsets = [0, 32], sizes = [16, 32], strides = [1, 1]} : vector<16x64xf32> to vector<16x32xf32>
    %c984 = arith.constant 984 : index
    %c0_157 = arith.constant 0 : index
    %492 = vector.load %arg4[%c984, %c0_157] : memref<1528x128xf32, #tpu.memory_space<vmem>>, vector<32x32xf32>
    %c1016 = arith.constant 1016 : index
    %c0_158 = arith.constant 0 : index
    %493 = vector.load %arg4[%c1016, %c0_158] : memref<1528x128xf32, #tpu.memory_space<vmem>>, vector<1x32xf32>
    %494 = tpu.concatenate %490, %490, %490, %490 in 0 : vector<16x32xf32>, vector<16x32xf32>, vector<16x32xf32>, vector<16x32xf32> -> vector<64x32xf32>
    %495 = arith.mulf %494, %26 : vector<64x32xf32>
    %496 = arith.truncf %495 : vector<64x32xf32> to vector<64x32xbf16>
    %497 = tpu.concatenate %491, %491, %491, %491 in 0 : vector<16x32xf32>, vector<16x32xf32>, vector<16x32xf32>, vector<16x32xf32> -> vector<64x32xf32>
    %498 = arith.mulf %497, %26 : vector<64x32xf32>
    %499 = arith.truncf %498 : vector<64x32xf32> to vector<64x32xbf16>
    %500 = arith.truncf %482 : vector<16x32xf32> to vector<16x32xbf16>
    %cst_159 = arith.constant dense<0.000000e+00> : vector<16x64xf32>
    %501 = tpu.matmul %500, %496, %cst_159 {dimension_numbers = #tpu.dot_dimension_numbers<[1], [1], [0], [0], [0, 0, 1, 0], [], []>} : vector<16x32xbf16>, vector<64x32xbf16>, vector<16x64xf32> -> vector<16x64xf32>
    %cst_160 = arith.constant 0.353553385 : f32
    %502 = vector.broadcast %cst_160 : f32 to vector<16x64xf32>
    %503 = arith.mulf %501, %502 : vector<16x64xf32>
    %504 = arith.addf %503, %25 : vector<16x64xf32>
    %cst_161 = arith.constant dense<0xFF800000> : vector<16xf32>
    %505 = vector.multi_reduction <maximumf>, %504, %cst_161 [1] : vector<16x64xf32> to vector<16xf32>
    %506 = vector.shape_cast %505 : vector<16xf32> to vector<16x1xf32>
    %507 = vector.broadcast %506 : vector<16x1xf32> to vector<16x64xf32>
    %508 = arith.subf %504, %507 : vector<16x64xf32>
    %509 = math.exp %508 : vector<16x64xf32>
    %cst_162 = arith.constant dense<0.000000e+00> : vector<16x64xf32>
    %510 = tpu.matmul %509, %27, %cst_162 {dimension_numbers = #tpu.dot_dimension_numbers<[1], [0], [0], [1], [0, 0, 1, 1], [], []>} : vector<16x64xf32>, vector<64x64xf32>, vector<16x64xf32> -> vector<16x64xf32>
    %511 = tpu.reciprocal %510 {approx = true} : vector<16x64xf32> -> vector<16x64xf32>
    %512 = arith.mulf %509, %511 : vector<16x64xf32>
    %513 = arith.truncf %512 : vector<16x64xf32> to vector<16x64xbf16>
    %cst_163 = arith.constant dense<0.000000e+00> : vector<16x32xf32>
    %514 = tpu.matmul %513, %499, %cst_163 {dimension_numbers = #tpu.dot_dimension_numbers<[1], [0], [0], [1], [0, 0, 1, 1], [], []>} : vector<16x64xbf16>, vector<64x32xbf16>, vector<16x32xf32> -> vector<16x32xf32>
    %515 = arith.truncf %514 : vector<16x32xf32> to vector<16x32xbf16>
    %516 = arith.truncf %492 : vector<32x32xf32> to vector<32x32xbf16>
    %cst_164 = arith.constant dense<0.000000e+00> : vector<16x32xf32>
    %517 = tpu.matmul %515, %516, %cst_164 {dimension_numbers = #tpu.dot_dimension_numbers<[1], [0], [0], [1], [0, 0, 1, 1], [], []>} : vector<16x32xbf16>, vector<32x32xbf16>, vector<16x32xf32> -> vector<16x32xf32>
    %518 = vector.broadcast %493 : vector<1x32xf32> to vector<16x32xf32>
    %519 = arith.addf %517, %518 : vector<16x32xf32>
    %c1024 = arith.constant 1024 : index
    %c0_165 = arith.constant 0 : index
    %520 = vector.load %arg4[%c1024, %c0_165] : memref<1528x128xf32, #tpu.memory_space<vmem>>, vector<1x32xf32>
    %c1032 = arith.constant 1032 : index
    %c0_166 = arith.constant 0 : index
    %521 = vector.load %arg4[%c1032, %c0_166] : memref<1528x128xf32, #tpu.memory_space<vmem>>, vector<1x32xf32>
    %522 = arith.addf %475, %519 : vector<16x32xf32>
    %cst_167 = arith.constant dense<0.000000e+00> : vector<16xf32>
    %523 = vector.multi_reduction <add>, %522, %cst_167 [1] : vector<16x32xf32> to vector<16xf32>
    %524 = vector.shape_cast %523 : vector<16xf32> to vector<16x1xf32>
    %cst_168 = arith.constant 3.200000e+01 : f32
    %525 = vector.broadcast %cst_168 : f32 to vector<16x1xf32>
    %526 = arith.divf %524, %525 : vector<16x1xf32>
    %527 = vector.broadcast %526 : vector<16x1xf32> to vector<16x32xf32>
    %528 = arith.subf %522, %527 : vector<16x32xf32>
    %529 = arith.mulf %528, %528 : vector<16x32xf32>
    %cst_169 = arith.constant dense<0.000000e+00> : vector<16xf32>
    %530 = vector.multi_reduction <add>, %529, %cst_169 [1] : vector<16x32xf32> to vector<16xf32>
    %531 = vector.shape_cast %530 : vector<16xf32> to vector<16x1xf32>
    %cst_170 = arith.constant 3.200000e+01 : f32
    %532 = vector.broadcast %cst_170 : f32 to vector<16x1xf32>
    %533 = arith.divf %531, %532 : vector<16x1xf32>
    %534 = vector.broadcast %526 : vector<16x1xf32> to vector<16x32xf32>
    %535 = arith.subf %522, %534 : vector<16x32xf32>
    %cst_171 = arith.constant 9.99999974E-6 : f32
    %536 = vector.broadcast %cst_171 : f32 to vector<16x1xf32>
    %537 = arith.addf %533, %536 : vector<16x1xf32>
    %538 = math.rsqrt %537 : vector<16x1xf32>
    %539 = vector.broadcast %538 : vector<16x1xf32> to vector<16x32xf32>
    %540 = arith.mulf %535, %539 : vector<16x32xf32>
    %541 = vector.broadcast %520 : vector<1x32xf32> to vector<16x32xf32>
    %542 = arith.mulf %540, %541 : vector<16x32xf32>
    %543 = vector.broadcast %521 : vector<1x32xf32> to vector<16x32xf32>
    %544 = arith.addf %542, %543 : vector<16x32xf32>
    %c1040 = arith.constant 1040 : index
    %c0_172 = arith.constant 0 : index
    %545 = vector.load %arg4[%c1040, %c0_172] : memref<1528x128xf32, #tpu.memory_space<vmem>>, vector<32x64xf32>
    %c1072 = arith.constant 1072 : index
    %c0_173 = arith.constant 0 : index
    %546 = vector.load %arg4[%c1072, %c0_173] : memref<1528x128xf32, #tpu.memory_space<vmem>>, vector<1x64xf32>
    %c1080 = arith.constant 1080 : index
    %c0_174 = arith.constant 0 : index
    %547 = vector.load %arg4[%c1080, %c0_174] : memref<1528x128xf32, #tpu.memory_space<vmem>>, vector<64x32xf32>
    %c1144 = arith.constant 1144 : index
    %c0_175 = arith.constant 0 : index
    %548 = vector.load %arg4[%c1144, %c0_175] : memref<1528x128xf32, #tpu.memory_space<vmem>>, vector<1x32xf32>
    %549 = arith.truncf %544 : vector<16x32xf32> to vector<16x32xbf16>
    %550 = arith.truncf %545 : vector<32x64xf32> to vector<32x64xbf16>
    %cst_176 = arith.constant dense<0.000000e+00> : vector<16x64xf32>
    %551 = tpu.matmul %549, %550, %cst_176 {dimension_numbers = #tpu.dot_dimension_numbers<[1], [0], [0], [1], [0, 0, 1, 1], [], []>} : vector<16x32xbf16>, vector<32x64xbf16>, vector<16x64xf32> -> vector<16x64xf32>
    %552 = vector.broadcast %546 : vector<1x64xf32> to vector<16x64xf32>
    %553 = arith.addf %551, %552 : vector<16x64xf32>
    %cst_177 = arith.constant 0.000000e+00 : f32
    %554 = vector.broadcast %cst_177 : f32 to vector<16x64xf32>
    %555 = arith.maximumf %553, %554 : vector<16x64xf32>
    %556 = arith.truncf %555 : vector<16x64xf32> to vector<16x64xbf16>
    %557 = arith.truncf %547 : vector<64x32xf32> to vector<64x32xbf16>
    %cst_178 = arith.constant dense<0.000000e+00> : vector<16x32xf32>
    %558 = tpu.matmul %556, %557, %cst_178 {dimension_numbers = #tpu.dot_dimension_numbers<[1], [0], [0], [1], [0, 0, 1, 1], [], []>} : vector<16x64xbf16>, vector<64x32xbf16>, vector<16x32xf32> -> vector<16x32xf32>
    %559 = vector.broadcast %548 : vector<1x32xf32> to vector<16x32xf32>
    %560 = arith.addf %558, %559 : vector<16x32xf32>
    %c1152 = arith.constant 1152 : index
    %c0_179 = arith.constant 0 : index
    %561 = vector.load %arg4[%c1152, %c0_179] : memref<1528x128xf32, #tpu.memory_space<vmem>>, vector<1x32xf32>
    %c1160 = arith.constant 1160 : index
    %c0_180 = arith.constant 0 : index
    %562 = vector.load %arg4[%c1160, %c0_180] : memref<1528x128xf32, #tpu.memory_space<vmem>>, vector<1x32xf32>
    %563 = arith.addf %544, %560 : vector<16x32xf32>
    %cst_181 = arith.constant dense<0.000000e+00> : vector<16xf32>
    %564 = vector.multi_reduction <add>, %563, %cst_181 [1] : vector<16x32xf32> to vector<16xf32>
    %565 = vector.shape_cast %564 : vector<16xf32> to vector<16x1xf32>
    %cst_182 = arith.constant 3.200000e+01 : f32
    %566 = vector.broadcast %cst_182 : f32 to vector<16x1xf32>
    %567 = arith.divf %565, %566 : vector<16x1xf32>
    %568 = vector.broadcast %567 : vector<16x1xf32> to vector<16x32xf32>
    %569 = arith.subf %563, %568 : vector<16x32xf32>
    %570 = arith.mulf %569, %569 : vector<16x32xf32>
    %cst_183 = arith.constant dense<0.000000e+00> : vector<16xf32>
    %571 = vector.multi_reduction <add>, %570, %cst_183 [1] : vector<16x32xf32> to vector<16xf32>
    %572 = vector.shape_cast %571 : vector<16xf32> to vector<16x1xf32>
    %cst_184 = arith.constant 3.200000e+01 : f32
    %573 = vector.broadcast %cst_184 : f32 to vector<16x1xf32>
    %574 = arith.divf %572, %573 : vector<16x1xf32>
    %575 = vector.broadcast %567 : vector<16x1xf32> to vector<16x32xf32>
    %576 = arith.subf %563, %575 : vector<16x32xf32>
    %cst_185 = arith.constant 9.99999974E-6 : f32
    %577 = vector.broadcast %cst_185 : f32 to vector<16x1xf32>
    %578 = arith.addf %574, %577 : vector<16x1xf32>
    %579 = math.rsqrt %578 : vector<16x1xf32>
    %580 = vector.broadcast %579 : vector<16x1xf32> to vector<16x32xf32>
    %581 = arith.mulf %576, %580 : vector<16x32xf32>
    %582 = vector.broadcast %561 : vector<1x32xf32> to vector<16x32xf32>
    %583 = arith.mulf %581, %582 : vector<16x32xf32>
    %584 = vector.broadcast %562 : vector<1x32xf32> to vector<16x32xf32>
    %585 = arith.addf %583, %584 : vector<16x32xf32>
    %c1168 = arith.constant 1168 : index
    %c0_186 = arith.constant 0 : index
    %586 = vector.load %arg4[%c1168, %c0_186] : memref<1528x128xf32, #tpu.memory_space<vmem>>, vector<32x128xf32>
    %587 = arith.truncf %585 : vector<16x32xf32> to vector<16x32xbf16>
    %588 = arith.truncf %586 : vector<32x128xf32> to vector<32x128xbf16>
    %cst_187 = arith.constant dense<0.000000e+00> : vector<16x128xf32>
    %589 = tpu.matmul %587, %588, %cst_187 {dimension_numbers = #tpu.dot_dimension_numbers<[1], [0], [0], [1], [0, 0, 1, 1], [], []>} : vector<16x32xbf16>, vector<32x128xbf16>, vector<16x128xf32> -> vector<16x128xf32>
    %c1200 = arith.constant 1200 : index
    %c0_188 = arith.constant 0 : index
    %590 = vector.load %arg4[%c1200, %c0_188] : memref<1528x128xf32, #tpu.memory_space<vmem>>, vector<1x128xf32>
    %591 = vector.broadcast %590 : vector<1x128xf32> to vector<16x128xf32>
    %592 = arith.addf %589, %591 : vector<16x128xf32>
    %c0_189 = arith.constant 0 : index
    %c0_190 = arith.constant 0 : index
    %593 = vector.load %arg5[%c0_189, %c0_190] : memref<16x128xf32, #tpu.memory_space<vmem>>, vector<16x128xf32>
    tpu.vector_store %arg5[%c0_189, %c0_190], %592 {strides = array<i32>} : memref<16x128xf32, #tpu.memory_space<vmem>>, vector<16x128xf32>,
    return
  }
  func.func @transform_0(%arg0: i32, %arg1: memref<2xi32, #tpu.memory_space<smem>>) -> (i32, i32) {
    %c0_i32 = arith.constant 0 : i32
    %c0_i32_0 = arith.constant 0 : i32
    %c0_i32_1 = arith.constant 0 : i32
    return %c0_i32, %c0_i32_0 : i32, i32
  }
  func.func @transform_1(%arg0: i32, %arg1: memref<2xi32, #tpu.memory_space<smem>>) -> (i32, i32) {
    %c0_i32 = arith.constant 0 : i32
    %c0_i32_0 = arith.constant 0 : i32
    %c0_i32_1 = arith.constant 0 : i32
    return %c0_i32, %c0_i32_0 : i32, i32
  }
  func.func @transform_2(%arg0: i32, %arg1: memref<2xi32, #tpu.memory_space<smem>>) -> (i32, i32) {
    %c0_i32 = arith.constant 0 : i32
    %c0_i32_0 = arith.constant 0 : i32
    %c0_i32_1 = arith.constant 0 : i32
    return %c0_i32, %c0_i32_0 : i32, i32
  }
  func.func @transform_3(%arg0: i32, %arg1: memref<2xi32, #tpu.memory_space<smem>>) -> (i32, i32) {
    %c0_i32 = arith.constant 0 : i32
    %c0_i32_0 = arith.constant 0 : i32
    %c0_i32_1 = arith.constant 0 : i32
    return %c0_i32, %c0_i32_0 : i32, i32
  }
}

</mosaic_0001>

<llo_original>
// kernel: forward.1
$region0: #{forward.1}
  #allocation0 [shape = 'u32[]', space=smem, size = 0x4, offset = 0x4, fixed_abs, tag = 'smem constant byte address 0x4 - core index']
  #allocation1 [shape = 'u32[144,128]{1,0:T(1,128)}', space=vmem, size = 0x12000, scoped, tag = 'internal scratch']
  #allocation2 [shape = 's32[1]{0}', space=sflag, size = 0x4, scoped, tag = 'scoped memory for forward.1']
  #allocation3 [shape = 'u8[512]{0}', space=smem, size = 0x200, scoped, tag = 'prefetched SMEM operand 0']
  %s0 = inlined_call_operand.vmem [shape: s32[2], index: 0, kind: input, shape index: {}]
  %s1 = inlined_call_operand.vmem [shape: f32[16,32], index: 1, kind: input, shape index: {}]
  %s2 = inlined_call_operand.vmem [shape: f32[16,32], index: 2, kind: input, shape index: {}]
  %s3 = inlined_call_operand.hbm [shape: f32[1528,128], index: 3, kind: input, shape index: {}]
  %s4 = inlined_call_operand.hbm [shape: f32[16,128], index: 4, kind: output, shape index: {}]
  %s5 = sld [smem:[#allocation0]]
  $region26: #{forward.1} parent=0
    _
  %s7 = ssub.s32 1, %s5
  %s8 = scalar_select 0, %s7, %s5
  %s9 = sshll.u32 %s0, 4
  %s10 = int_to_ptr.vmem [resolvable:$true] %s9
  %12 = dma.vmem_to_smem %s10, 16, [#allocation3], [#allocation2]
  %13 = dma.done [#allocation2], 16
  %14 = sfence
  $region1: #{forward.1} parent=0
    #allocation4 [shape = 'u8[782336]{0}', space=vmem, size = 0xbf000, scoped, tag = 'input window, operand 3, single buffered']
    #allocation5 [shape = 's32[1]{0}', space=sflag, size = 0x4, scoped, tag = 'scoped memory for forward.1']
    #allocation6 [shape = 's32[1]{0}', space=sflag, size = 0x4, scoped, tag = 'scoped memory for forward.1']
    #allocation7 [shape = 'u8[8192]{0}', space=vmem, size = 0x2000, scoped, tag = 'output window, operand 0, single buffered']
    %15 = vsyncpa [#allocation5], 0
    %16 = vsyncpa [#allocation6], 0
    // Predicated region
    $region2: #{forward.1} parent=1 // pred_check
      _
    $region3: #{forward.1} parent=1 // pred_check_branch
      %18 = sbr.rel (0) target = $region5
    $region4: #{forward.1} parent=1 // pred_region
      _
    $region5: #{forward.1} parent=1 // pred_fallthru
      _
    // Predicated region
    $region6: #{forward.1} parent=1 // pred_check
      _
    $region7: #{forward.1} parent=1 // pred_check_branch
      %20 = sbr.rel (0) target = $region9
    $region8: #{forward.1} parent=1 // pred_region
      _
    $region9: #{forward.1} parent=1 // pred_fallthru
      _
    // Predicated region
    $region10: #{forward.1} parent=1 // pred_check
      _
    $region11: #{forward.1} parent=1 // pred_check_branch
      %22 = sbr.rel (0) target = $region13
    $region12: #{forward.1} parent=1 // pred_region
      %s24 = ssub.s32 24448, 24448
      %25 = vsyncadd [#allocation5], %s24
      %s26 = sshll.u32 [#allocation4], 4
      %s27 = int_to_ptr.vmem [resolvable:$true] %s26
      %32 = dma.hbm_to_vmem [thread:$0]  %s3, 24448, %s27, [#allocation5], 128, 128, 8
    $region13: #{forward.1} parent=1 // pred_fallthru
      _
    // Predicated region
    $region14: #{forward.1} parent=1 // pred_check
      _
    $region15: #{forward.1} parent=1 // pred_check_branch
      %34 = sbr.rel (0) target = $region17
    $region16: #{forward.1} parent=1 // pred_region
      %35 = dma.done [#allocation5], 24448
    $region17: #{forward.1} parent=1 // pred_fallthru
      _
    %v37 = vld [vmem:[#allocation4 + $0x5e8] sm:$0x1]
    %v38 = vld [vmem:[#allocation4 + $0x5f0] sm:$0x3]
    %s39 = sld [smem:[#allocation3]]
    %s40 = scvt.s32.f32 %s39
    %v41 = vstv %s40
    %v42 = vmul.f32 %v38, %v41
    %v43 = vadd.f32 %v42, 0.0
    %s44 = sld [smem:[#allocation3 + $0x1]]
    %s45 = scvt.s32.f32 %s44
    %v46 = vstv %s45
    %v47 = vmul.f32 %v38, %v46
    %v49 = vrot.slane %v47, 1
    %v51 = vadd.f32 %v43, %v49
    %vm52 = vcmp.lt.f32.partialorder %v37, %v51
    %v53 = vsel %vm52, 0.0, -1000000.0
    %v54 = vld [vmem:[#allocation4 + $0x4b8] sm:$0xff]
    %v55 = vld [vmem:[#allocation4 + $0x4c0] sm:$0xff]
    %v56 = vlaneseq
    %v57 = vshrl.u32 %v56, 7
    %v58 = vsub.s32 0, %v57
    %v59 = vrot.slane %v53, %v58
    %v60 = vadd.f32 %v54, %v59
    %v61 = vadd.f32 %v55, %v59
    %v62 = vld [vmem:[#allocation4 + $0x4c8] sm:$0xff]
    %v63 = vld [vmem:[#allocation4 + $0x4d0] sm:$0xff]
    %v64 = vld [vmem:[#allocation4 + $0x4d8] sm:$0xff]
    %v65 = vld [vmem:[#allocation4 + $0x4e0] sm:$0xff]
    %v66 = vadd.f32 %v64, %v59
    %v67 = vadd.f32 %v65, %v59
    %v68 = vld [vmem:[#allocation4 + $0x4e8] sm:$0xff]
    %v69 = vld [vmem:[#allocation4 + $0x4f0] sm:$0xff]
    %v70 = vld [vmem:[#allocation4 + $0x4f8] sm:$0xff]
    %v71 = vld [vmem:[#allocation4 + $0x500] sm:$0xff]
    %v72 = vld [vmem:[#allocation4 + $0x508] sm:$0xff]
    %v73 = vld [vmem:[#allocation4 + $0x510] sm:$0xff]
    %v74 = vld [vmem:[#allocation4 + $0x518] sm:$0xff]
    %v75 = vld [vmem:[#allocation4 + $0x520] sm:$0xff]
    %v76 = vld [vmem:[#allocation4 + $0x568] sm:$0xff]
    %v77 = vld [vmem:[#allocation4 + $0x570] sm:$0xff]
    %v78 = vld [vmem:[#allocation4 + $0x578] sm:$0xff]
    %v79 = vld [vmem:[#allocation4 + $0x580] sm:$0xff]
    %v80 = vld [vmem:[#allocation4 + $0x588] sm:$0xff]
    %v81 = vld [vmem:[#allocation4 + $0x590] sm:$0xff]
    %v82 = vld [vmem:[#allocation4 + $0x598] sm:$0xff]
    %v83 = vld [vmem:[#allocation4 + $0x5a0] sm:$0xff]
    %v84 = vld [vmem:[#allocation4 + $0x528] sm:$0xff]
    %v85 = vld [vmem:[#allocation4 + $0x530] sm:$0xff]
    %v86 = vld [vmem:[#allocation4 + $0x538] sm:$0xff]
    %v87 = vld [vmem:[#allocation4 + $0x540] sm:$0xff]
    %v88 = vld [vmem:[#allocation4 + $0x548] sm:$0xff]
    %v89 = vld [vmem:[#allocation4 + $0x550] sm:$0xff]
    %v90 = vld [vmem:[#allocation4 + $0x558] sm:$0xff]
    %v91 = vld [vmem:[#allocation4 + $0x560] sm:$0xff]
    %v92 = vld [vmem:[#allocation4 + $0x5a8] sm:$0xff]
    %v93 = vld [vmem:[#allocation4 + $0x5b0] sm:$0xff]
    %v94 = vld [vmem:[#allocation4 + $0x5b8] sm:$0xff]
    %v95 = vld [vmem:[#allocation4 + $0x5c0] sm:$0xff]
    %v96 = vld [vmem:[#allocation4 + $0x5c8] sm:$0xff]
    %v97 = vld [vmem:[#allocation4 + $0x5d0] sm:$0xff]
    %v98 = vld [vmem:[#allocation4 + $0x5d8] sm:$0xff]
    %v99 = vld [vmem:[#allocation4 + $0x5e0] sm:$0xff]
    %v100 = vld [vmem:[%s1] sm:$0xff]
    %v101 = vld [vmem:[%s1 + $0x8] sm:$0xff]
    %v102 = vld [vmem:[#allocation4] sm:$0xff]
    %v103 = vld [vmem:[#allocation4 + $0x8] sm:$0xff]
    %v104 = vld [vmem:[#allocation4 + $0x10] sm:$0xff]
    %v105 = vld [vmem:[#allocation4 + $0x18] sm:$0xff]
    %v106 = vpack.c.bf16 %v101, %v100
    %v107 = vpack.c.bf16 %v103, %v102
    %v108 = vpack.c.bf16 %v105, %v104
    %v109 = vld [vmem:[#allocation4 + $0x20] sm:$0x1]
    %v110 = vlaneseq
    %v111 = vshrl.u32 %v110, 7
    %v112 = vsub.s32 0, %v111
    %v113 = vrot.slane %v109, %v112
    %vm114 = vcmask 261120
    %v116 = vsel %vm114, %v106, 0
    %118 = vmatprep.subr.bf16.mxu0 0
    %119 = vmatpush1.bf16.msra.mxu0 %v107
    %120 = vmatprep.subr.bf16.mxu0 0
    %121 = vmatpush1.bf16.msra.mxu0 %v108
    %122 = vmatprep.subr.bf16.mxu0 0
    %123 = vmatpush1.bf16.msra.mxu0 0
    %124 = vmatprep.subr.bf16.mxu0 0
    %125 = vmatpush1.bf16.msra.mxu0 0
    %126 = vmatprep.subr.bf16.mxu0 0
    %127 = vmatpush1.bf16.msra.mxu0 0
    %128 = vmatprep.subr.bf16.mxu0 0
    %129 = vmatpush1.bf16.msra.mxu0 0
    %130 = vmatprep.subr.bf16.mxu0 0
    %131 = vmatpush1.bf16.msra.mxu0 0
    %132 = vmatprep.subr.bf16.mxu0 0
    %133 = vmatpush1.bf16.msra.mxu0 0
    %134 = vmatprep.subr.bf16.mxu0 0
    %135 = vmatpush1.bf16.msra.mxu0 0
    %136 = vmatprep.subr.bf16.mxu0 0
    %137 = vmatpush1.bf16.msra.mxu0 0
    %138 = vmatprep.subr.bf16.mxu0 0
    %139 = vmatpush1.bf16.msra.mxu0 0
    %140 = vmatprep.subr.bf16.mxu0 0
    %141 = vmatpush1.bf16.msra.mxu0 0
    %142 = vmatprep.subr.bf16.mxu0 0
    %143 = vmatpush1.bf16.msra.mxu0 0
    %144 = vmatprep.subr.bf16.mxu0 0
    %145 = vmatpush1.bf16.msra.mxu0 0
    %146 = vmatprep.subr.bf16.mxu0 0
    %147 = vmatpush1.bf16.msra.mxu0 0
    %148 = vmatprep.subr.bf16.mxu0 0
    %149 = vmatpush1.bf16.msra.mxu0 0
    %150 = vmatprep.mubr.bf16.mxu0 0
    %151 = vmatmul.mubr.bf16.gmra.mrb[0].mxu0 %v116
    %v152 = vpop.f32.mrb[0].mxu0
    %v153 = vadd.f32 %v113, %v152
    %v154 = vpop.f32.mrb[0].mxu0
    %v155 = vpop.f32.mrb[0].mxu0
    %v156 = vadd.f32 %v113, %v155
    %v157 = vpop.f32.mrb[0].mxu0
    %158 = vdwg.mxu0
    %v159 = vld [vmem:[#allocation4 + $0x28] sm:$0xff]
    %v160 = vld [vmem:[#allocation4 + $0x30] sm:$0xff]
    %v161 = vld [vmem:[#allocation4 + $0x38] sm:$0xff]
    %v162 = vld [vmem:[#allocation4 + $0x40] sm:$0xff]
    %v163 = vld [vmem:[#allocation4 + $0x48] sm:$0x1]
    %172 = vrot.lane.b32.xlu0 %v68, 32
    %v173 = vpop.permute.xlu0 %172
    %174 = vrot.lane.b32.xlu0 %v69, 32
    %v175 = vpop.permute.xlu0 %174
    %176 = vrot.lane.b32.xlu0 %v70, 32
    %v177 = vpop.permute.xlu0 %176
    %178 = vrot.lane.b32.xlu0 %v71, 32
    %v179 = vpop.permute.xlu0 %178
    %180 = vrot.lane.b32.xlu0 %v72, 32
    %v181 = vpop.permute.xlu0 %180
    %182 = vrot.lane.b32.xlu0 %v73, 32
    %v183 = vpop.permute.xlu0 %182
    %184 = vrot.lane.b32.xlu0 %v74, 32
    %v185 = vpop.permute.xlu0 %184
    %186 = vrot.lane.b32.xlu0 %v75, 32
    %v187 = vpop.permute.xlu0 %186
    %v196 = vmul.f32 %v153, %v173
    %v197 = vmul.f32 %v156, %v175
    %v198 = vmul.f32 %v153, %v177
    %v199 = vmul.f32 %v156, %v179
    %v200 = vmul.f32 %v153, %v181
    %v201 = vmul.f32 %v156, %v183
    %v202 = vmul.f32 %v153, %v185
    %v203 = vmul.f32 %v156, %v187
    %v204 = vpack.c.bf16 %v197, %v196
    %v205 = vpack.c.bf16 %v199, %v198
    %v206 = vpack.c.bf16 %v201, %v200
    %v207 = vpack.c.bf16 %v203, %v202
    %208 = vrot.lane.b32.xlu0 %v68, 64
    %v209 = vpop.permute.xlu0 %208
    %210 = vrot.lane.b32.xlu0 %v69, 64
    %v211 = vpop.permute.xlu0 %210
    %212 = vrot.lane.b32.xlu0 %v70, 64
    %v213 = vpop.permute.xlu0 %212
    %214 = vrot.lane.b32.xlu0 %v71, 64
    %v215 = vpop.permute.xlu0 %214
    %216 = vrot.lane.b32.xlu0 %v72, 64
    %v217 = vpop.permute.xlu0 %216
    %218 = vrot.lane.b32.xlu0 %v73, 64
    %v219 = vpop.permute.xlu0 %218
    %220 = vrot.lane.b32.xlu0 %v74, 64
    %v221 = vpop.permute.xlu0 %220
    %222 = vrot.lane.b32.xlu0 %v75, 64
    %v223 = vpop.permute.xlu0 %222
    %v232 = vmul.f32 %v153, %v209
    %v233 = vmul.f32 %v156, %v211
    %v234 = vmul.f32 %v153, %v213
    %v235 = vmul.f32 %v156, %v215
    %v236 = vmul.f32 %v153, %v217
    %v237 = vmul.f32 %v156, %v219
    %v238 = vmul.f32 %v153, %v221
    %v239 = vmul.f32 %v156, %v223
    %v240 = vpack.c.bf16 %v233, %v232
    %v241 = vpack.c.bf16 %v235, %v234
    %v242 = vpack.c.bf16 %v237, %v236
    %v243 = vpack.c.bf16 %v239, %v238
    %v244 = vpack.c.bf16 %v156, %v153
    %249 = vrot.lane.b32.xlu0 %v204, 96
    %v250 = vpop.permute.xlu0 %249
    %251 = vrot.lane.b32.xlu0 %v205, 96
    %v252 = vpop.permute.xlu0 %251
    %253 = vrot.lane.b32.xlu0 %v206, 96
    %v254 = vpop.permute.xlu0 %253
    %255 = vrot.lane.b32.xlu0 %v207, 96
    %v256 = vpop.permute.xlu0 %255
    %v258 = vsel %vm114, %v244, 0
    %v261 = vsel %vm114, %v250, 0
    %v264 = vsel %vm114, %v252, 0
    %v267 = vsel %vm114, %v254, 0
    %v270 = vsel %vm114, %v256, 0
    %272 = vmatprep.subr.bf16.mxu0 0
    %273 = vmatpush1.bf16.xpose.msra.mxu0 %v261
    %274 = vmatprep.subr.bf16.mxu0 0
    %275 = vmatpush1.bf16.xpose.msra.mxu0 %v264
    %276 = vmatprep.subr.bf16.mxu0 0
    %277 = vmatpush1.bf16.xpose.msra.mxu0 %v267
    %278 = vmatprep.subr.bf16.mxu0 0
    %279 = vmatpush1.bf16.xpose.msra.mxu0 %v270
    %280 = vmatprep.subr.bf16.mxu0 0
    %281 = vmatpush1.bf16.xpose.msra.mxu0 0
    %282 = vmatprep.subr.bf16.mxu0 0
    %283 = vmatpush1.bf16.xpose.msra.mxu0 0
    %284 = vmatprep.subr.bf16.mxu0 0
    %285 = vmatpush1.bf16.xpose.msra.mxu0 0
    %286 = vmatprep.subr.bf16.mxu0 0
    %287 = vmatpush1.bf16.xpose.msra.mxu0 0
    %288 = vmatprep.subr.bf16.mxu0 0
    %289 = vmatpush1.bf16.xpose.msra.mxu0 0
    %290 = vmatprep.subr.bf16.mxu0 0
    %291 = vmatpush1.bf16.xpose.msra.mxu0 0
    %292 = vmatprep.subr.bf16.mxu0 0
    %293 = vmatpush1.bf16.xpose.msra.mxu0 0
    %294 = vmatprep.subr.bf16.mxu0 0
    %295 = vmatpush1.bf16.xpose.msra.mxu0 0
    %296 = vmatprep.subr.bf16.mxu0 0
    %297 = vmatpush1.bf16.xpose.msra.mxu0 0
    %298 = vmatprep.subr.bf16.mxu0 0
    %299 = vmatpush1.bf16.xpose.msra.mxu0 0
    %300 = vmatprep.subr.bf16.mxu0 0
    %301 = vmatpush1.bf16.xpose.msra.mxu0 0
    %302 = vmatprep.subr.bf16.mxu0 0
    %303 = vmatpush1.bf16.xpose.msra.mxu0 0
    %304 = vmatprep.mubr.bf16.mxu0 0
    %305 = vmatmul.mubr.bf16.gmra.mrb[0].mxu0 %v258
    %v306 = vpop.f32.mrb[0].mxu0
    %v307 = vadd.f32 0.0, %v306
    %v308 = vpop.f32.mrb[0].mxu0
    %v309 = vpop.f32.mrb[0].mxu0
    %v310 = vadd.f32 0.0, %v309
    %v311 = vpop.f32.mrb[0].mxu0
    %312 = vdwg.mxu0
    %v313 = vmul.f32 %v307, 0.35355338
    %v314 = vmul.f32 %v310, 0.35355338
    %v315 = vadd.f32 %v313, %v60
    %v316 = vadd.f32 %v314, %v61
    %vm317 = vcmask 523264
    %v318 = vsel %vm317, %v315, -inf
    %319 = vmax.xlane.f32.xlu0 %v318
    %v320 = vpop.xlane.xlu0 %319
    %v321 = vsel %vm317, %v316, -inf
    %322 = vmax.xlane.f32.xlu0 %v321
    %v323 = vpop.xlane.xlu0 %322
    %v324 = vsub.f32 %v315, %v320
    %v325 = vsub.f32 %v316, %v323
    %v326 = vmul.f32 %v324, 1.442695
    %v327 = vpow.pop %v326
    %v328 = vmul.f32 %v325, 1.442695
    %v329 = vpow.pop %v328
    %v331 = vsel %vm317, %v327, 0
    %v334 = vsel %vm317, %v329, 0
    %336 = vmatprep.subr.mxu0 0.0
    %337 = vmatpush1.msra.mxu0 %v76
    %338 = vmatprep.subr.mxu0 0.0
    %339 = vmatpush1.msra.mxu0 %v77
    %340 = vmatprep.subr.mxu0 0.0
    %341 = vmatpush1.msra.mxu0 %v78
    %342 = vmatprep.subr.mxu0 0.0
    %343 = vmatpush1.msra.mxu0 %v79
    %344 = vmatprep.subr.mxu0 0.0
    %345 = vmatpush1.msra.mxu0 %v80
    %346 = vmatprep.subr.mxu0 0.0
    %347 = vmatpush1.msra.mxu0 %v81
    %348 = vmatprep.subr.mxu0 0.0
    %349 = vmatpush1.msra.mxu0 %v82
    %350 = vmatprep.subr.mxu0 0.0
    %351 = vmatpush1.msra.mxu0 %v83
    %352 = vmatprep.subr.mxu0 0.0
    %353 = vmatpush1.msra.mxu0 0.0
    %354 = vmatprep.subr.mxu0 0.0
    %355 = vmatpush1.msra.mxu0 0.0
    %356 = vmatprep.subr.mxu0 0.0
    %357 = vmatpush1.msra.mxu0 0.0
    %358 = vmatprep.subr.mxu0 0.0
    %359 = vmatpush1.msra.mxu0 0.0
    %360 = vmatprep.subr.mxu0 0.0
    %361 = vmatpush1.msra.mxu0 0.0
    %362 = vmatprep.subr.mxu0 0.0
    %363 = vmatpush1.msra.mxu0 0.0
    %364 = vmatprep.subr.mxu0 0.0
    %365 = vmatpush1.msra.mxu0 0.0
    %366 = vmatprep.subr.mxu0 0.0
    %367 = vmatpush1.msra.mxu0 0.0
    %368 = vmatprep.subr.mxu0 0.0
    %369 = vmatpush1.msra.mxu0 0.0
    %370 = vmatprep.subr.mxu0 0.0
    %371 = vmatpush1.msra.mxu0 0.0
    %372 = vmatprep.subr.mxu0 0.0
    %373 = vmatpush1.msra.mxu0 0.0
    %374 = vmatprep.subr.mxu0 0.0
    %375 = vmatpush1.msra.mxu0 0.0
    %376 = vmatprep.subr.mxu0 0.0
    %377 = vmatpush1.msra.mxu0 0.0
    %378 = vmatprep.subr.mxu0 0.0
    %379 = vmatpush1.msra.mxu0 0.0
    %380 = vmatprep.subr.mxu0 0.0
    %381 = vmatpush1.msra.mxu0 0.0
    %382 = vmatprep.subr.mxu0 0.0
    %383 = vmatpush1.msra.mxu0 0.0
    %384 = vmatprep.subr.mxu0 0.0
    %385 = vmatpush1.msra.mxu0 0.0
    %386 = vmatprep.subr.mxu0 0.0
    %387 = vmatpush1.msra.mxu0 0.0
    %388 = vmatprep.subr.mxu0 0.0
    %389 = vmatpush1.msra.mxu0 0.0
    %390 = vmatprep.subr.mxu0 0.0
    %391 = vmatpush1.msra.mxu0 0.0
    %392 = vmatprep.subr.mxu0 0.0
    %393 = vmatpush1.msra.mxu0 0.0
    %394 = vmatprep.subr.mxu0 0.0
    %395 = vmatpush1.msra.mxu0 0.0
    %396 = vmatprep.subr.mxu0 0.0
    %397 = vmatpush1.msra.mxu0 0.0
    %398 = vmatprep.subr.mxu0 0.0
    %399 = vmatpush1.msra.mxu0 0.0
    %400 = vmatprep.mubr.f32.mxu0 0.0
    %401 = vmatmul.mubr.f32.gmra.mrb[0].mxu0 %v331
    %v402 = vpop.f32.mrb[0].mxu0
    %v403 = vadd.f32 0.0, %v402
    %v404 = vpop.f32.mrb[0].mxu0
    %405 = vmatprep.mubr.f32.mxu0 0.0
    %406 = vmatmul.mubr.f32.gmra.mrb[0].mxu0 %v334
    %v407 = vpop.f32.mrb[0].mxu0
    %v408 = vadd.f32 0.0, %v407
    %v409 = vpop.f32.mrb[0].mxu0
    %410 = vdwg.mxu0
    %v411 = vrcp.pop %v403
    %v412 = vrcp.pop %v408
    %v413 = vmul.f32 %v327, %v411
    %v414 = vmul.f32 %v329, %v412
    %v415 = vpack.c.bf16 %v414, %v413
    %420 = vrot.lane.b32.xlu0 %v240, 64
    %v421 = vpop.permute.xlu0 %420
    %422 = vrot.lane.b32.xlu0 %v241, 64
    %v423 = vpop.permute.xlu0 %422
    %424 = vrot.lane.b32.xlu0 %v242, 64
    %v425 = vpop.permute.xlu0 %424
    %426 = vrot.lane.b32.xlu0 %v243, 64
    %v427 = vpop.permute.xlu0 %426
    %v433 = vsel %vm317, %v415, 0
    %435 = vmatprep.subr.bf16.mxu0 0
    %436 = vmatpush1.bf16.msra.mxu0 %v421
    %437 = vmatprep.subr.bf16.mxu0 0
    %438 = vmatpush1.bf16.msra.mxu0 %v423
    %439 = vmatprep.subr.bf16.mxu0 0
    %440 = vmatpush1.bf16.msra.mxu0 %v425
    %441 = vmatprep.subr.bf16.mxu0 0
    %442 = vmatpush1.bf16.msra.mxu0 %v427
    %443 = vmatprep.subr.bf16.mxu0 0
    %444 = vmatpush1.bf16.msra.mxu0 0
    %445 = vmatprep.subr.bf16.mxu0 0
    %446 = vmatpush1.bf16.msra.mxu0 0
    %447 = vmatprep.subr.bf16.mxu0 0
    %448 = vmatpush1.bf16.msra.mxu0 0
    %449 = vmatprep.subr.bf16.mxu0 0
    %450 = vmatpush1.bf16.msra.mxu0 0
    %451 = vmatprep.subr.bf16.mxu0 0
    %452 = vmatpush1.bf16.msra.mxu0 0
    %453 = vmatprep.subr.bf16.mxu0 0
    %454 = vmatpush1.bf16.msra.mxu0 0
    %455 = vmatprep.subr.bf16.mxu0 0
    %456 = vmatpush1.bf16.msra.mxu0 0
    %457 = vmatprep.subr.bf16.mxu0 0
    %458 = vmatpush1.bf16.msra.mxu0 0
    %459 = vmatprep.subr.bf16.mxu0 0
    %460 = vmatpush1.bf16.msra.mxu0 0
    %461 = vmatprep.subr.bf16.mxu0 0
    %462 = vmatpush1.bf16.msra.mxu0 0
    %463 = vmatprep.subr.bf16.mxu0 0
    %464 = vmatpush1.bf16.msra.mxu0 0
    %465 = vmatprep.subr.bf16.mxu0 0
    %466 = vmatpush1.bf16.msra.mxu0 0
    %467 = vmatprep.mubr.bf16.mxu0 0
    %468 = vmatmul.mubr.bf16.gmra.mrb[0].mxu0 %v433
    %v469 = vpop.f32.mrb[0].mxu0
    %v470 = vadd.f32 0.0, %v469
    %v471 = vpop.f32.mrb[0].mxu0
    %v472 = vpop.f32.mrb[0].mxu0
    %v473 = vadd.f32 0.0, %v472
    %v474 = vpop.f32.mrb[0].mxu0
    %475 = vdwg.mxu0
    %v476 = vpack.c.bf16 %v473, %v470
    %v477 = vpack.c.bf16 %v160, %v159
    %v478 = vpack.c.bf16 %v162, %v161
    %v479 = vlaneseq
    %v480 = vshrl.u32 %v479, 7
    %v481 = vsub.s32 0, %v480
    %v482 = vrot.slane %v163, %v481
    %v484 = vsel %vm114, %v476, 0
    %486 = vmatprep.subr.bf16.mxu0 0
    %487 = vmatpush1.bf16.msra.mxu0 %v477
    %488 = vmatprep.subr.bf16.mxu0 0
    %489 = vmatpush1.bf16.msra.mxu0 %v478
    %490 = vmatprep.subr.bf16.mxu0 0
    %491 = vmatpush1.bf16.msra.mxu0 0
    %492 = vmatprep.subr.bf16.mxu0 0
    %493 = vmatpush1.bf16.msra.mxu0 0
    %494 = vmatprep.subr.bf16.mxu0 0
    %495 = vmatpush1.bf16.msra.mxu0 0
    %496 = vmatprep.subr.bf16.mxu0 0
    %497 = vmatpush1.bf16.msra.mxu0 0
    %498 = vmatprep.subr.bf16.mxu0 0
    %499 = vmatpush1.bf16.msra.mxu0 0
    %500 = vmatprep.subr.bf16.mxu0 0
    %501 = vmatpush1.bf16.msra.mxu0 0
    %502 = vmatprep.subr.bf16.mxu0 0
    %503 = vmatpush1.bf16.msra.mxu0 0
    %504 = vmatprep.subr.bf16.mxu0 0
    %505 = vmatpush1.bf16.msra.mxu0 0
    %506 = vmatprep.subr.bf16.mxu0 0
    %507 = vmatpush1.bf16.msra.mxu0 0
    %508 = vmatprep.subr.bf16.mxu0 0
    %509 = vmatpush1.bf16.msra.mxu0 0
    %510 = vmatprep.subr.bf16.mxu0 0
    %511 = vmatpush1.bf16.msra.mxu0 0
    %512 = vmatprep.subr.bf16.mxu0 0
    %513 = vmatpush1.bf16.msra.mxu0 0
    %514 = vmatprep.subr.bf16.mxu0 0
    %515 = vmatpush1.bf16.msra.mxu0 0
    %516 = vmatprep.subr.bf16.mxu0 0
    %517 = vmatpush1.bf16.msra.mxu0 0
    %518 = vmatprep.mubr.bf16.mxu0 0
    %519 = vmatmul.mubr.bf16.gmra.mrb[0].mxu0 %v484
    %v520 = vpop.f32.mrb[0].mxu0
    %v521 = vadd.f32 %v482, %v520
    %v522 = vpop.f32.mrb[0].mxu0
    %v523 = vpop.f32.mrb[0].mxu0
    %v524 = vadd.f32 %v482, %v523
    %v525 = vpop.f32.mrb[0].mxu0
    %526 = vdwg.mxu0
    %v527 = vld [vmem:[#allocation4 + $0x50] sm:$0x1]
    %v528 = vld [vmem:[#allocation4 + $0x58] sm:$0x1]
    %v529 = vadd.f32 %v100, %v521
    %v530 = vadd.f32 %v101, %v524
    %v531 = vsel %vm114, %v529, 0.0
    %532 = vadd.xlane.f32.xlu0 %v531
    %v533 = vpop.xlane.xlu0 %532
    %v534 = vsel %vm114, %v530, 0.0
    %535 = vadd.xlane.f32.xlu0 %v534
    %v536 = vpop.xlane.xlu0 %535
    %v537 = vrcp.pop 32.0
    %v538 = vmul.f32 %v533, %v537
    %v539 = vmul.f32 %v536, %v537
    %v540 = vsub.f32 %v529, %v538
    %v541 = vsub.f32 %v530, %v539
    %v542 = vmul.f32 %v540, %v540
    %v543 = vmul.f32 %v541, %v541
    %v544 = vsel %vm114, %v542, 0.0
    %545 = vadd.xlane.f32.xlu0 %v544
    %v546 = vpop.xlane.xlu0 %545
    %v547 = vsel %vm114, %v543, 0.0
    %548 = vadd.xlane.f32.xlu0 %v547
    %v549 = vpop.xlane.xlu0 %548
    %v550 = vmul.f32 %v546, %v537
    %v551 = vmul.f32 %v549, %v537
    %v552 = vadd.f32 %v550, 1e-05
    %v553 = vadd.f32 %v551, 1e-05
    %v554 = vrsqrt.pop %v552
    %v555 = vrsqrt.pop %v553
    %v556 = vmul.f32 %v540, %v554
    %v557 = vmul.f32 %v541, %v555
    %v558 = vlaneseq
    %v559 = vshrl.u32 %v558, 7
    %v560 = vsub.s32 0, %v559
    %v561 = vrot.slane %v527, %v560
    %v562 = vmul.f32 %v556, %v561
    %v563 = vmul.f32 %v557, %v561
    %v564 = vlaneseq
    %v565 = vshrl.u32 %v564, 7
    %v566 = vsub.s32 0, %v565
    %v567 = vrot.slane %v528, %v566
    %v568 = vadd.f32 %v562, %v567
    %v569 = vadd.f32 %v563, %v567
    %v570 = vld [vmem:[#allocation4 + $0x60] sm:$0xff]
    %v571 = vld [vmem:[#allocation4 + $0x68] sm:$0xff]
    %v572 = vld [vmem:[#allocation4 + $0x70] sm:$0xff]
    %v573 = vld [vmem:[#allocation4 + $0x78] sm:$0xff]
    %v574 = vld [vmem:[#allocation4 + $0x80] sm:$0x1]
    %v575 = vld [vmem:[#allocation4 + $0x88] sm:$0xff]
    %v576 = vld [vmem:[#allocation4 + $0x90] sm:$0xff]
    %v577 = vld [vmem:[#allocation4 + $0x98] sm:$0xff]
    %v578 = vld [vmem:[#allocation4 + $0xa0] sm:$0xff]
    %v579 = vld [vmem:[#allocation4 + $0xa8] sm:$0xff]
    %v580 = vld [vmem:[#allocation4 + $0xb0] sm:$0xff]
    %v581 = vld [vmem:[#allocation4 + $0xb8] sm:$0xff]
    %v582 = vld [vmem:[#allocation4 + $0xc0] sm:$0xff]
    %v583 = vld [vmem:[#allocation4 + $0xc8] sm:$0x1]
    %v584 = vpack.c.bf16 %v569, %v568
    %v585 = vpack.c.bf16 %v571, %v570
    %v586 = vpack.c.bf16 %v573, %v572
    %v587 = vlaneseq
    %v588 = vshrl.u32 %v587, 7
    %v589 = vsub.s32 0, %v588
    %v590 = vrot.slane %v574, %v589
    %v592 = vsel %vm114, %v584, 0
    %594 = vmatprep.subr.bf16.mxu0 0
    %595 = vmatpush1.bf16.msra.mxu0 %v585
    %596 = vmatprep.subr.bf16.mxu0 0
    %597 = vmatpush1.bf16.msra.mxu0 %v586
    %598 = vmatprep.subr.bf16.mxu0 0
    %599 = vmatpush1.bf16.msra.mxu0 0
    %600 = vmatprep.subr.bf16.mxu0 0
    %601 = vmatpush1.bf16.msra.mxu0 0
    %602 = vmatprep.subr.bf16.mxu0 0
    %603 = vmatpush1.bf16.msra.mxu0 0
    %604 = vmatprep.subr.bf16.mxu0 0
    %605 = vmatpush1.bf16.msra.mxu0 0
    %606 = vmatprep.subr.bf16.mxu0 0
    %607 = vmatpush1.bf16.msra.mxu0 0
    %608 = vmatprep.subr.bf16.mxu0 0
    %609 = vmatpush1.bf16.msra.mxu0 0
    %610 = vmatprep.subr.bf16.mxu0 0
    %611 = vmatpush1.bf16.msra.mxu0 0
    %612 = vmatprep.subr.bf16.mxu0 0
    %613 = vmatpush1.bf16.msra.mxu0 0
    %614 = vmatprep.subr.bf16.mxu0 0
    %615 = vmatpush1.bf16.msra.mxu0 0
    %616 = vmatprep.subr.bf16.mxu0 0
    %617 = vmatpush1.bf16.msra.mxu0 0
    %618 = vmatprep.subr.bf16.mxu0 0
    %619 = vmatpush1.bf16.msra.mxu0 0
    %620 = vmatprep.subr.bf16.mxu0 0
    %621 = vmatpush1.bf16.msra.mxu0 0
    %622 = vmatprep.subr.bf16.mxu0 0
    %623 = vmatpush1.bf16.msra.mxu0 0
    %624 = vmatprep.subr.bf16.mxu0 0
    %625 = vmatpush1.bf16.msra.mxu0 0
    %626 = vmatprep.mubr.bf16.mxu0 0
    %627 = vmatmul.mubr.bf16.gmra.mrb[0].mxu0 %v592
    %v628 = vpop.f32.mrb[0].mxu0
    %v629 = vadd.f32 %v590, %v628
    %v630 = vpop.f32.mrb[0].mxu0
    %v631 = vpop.f32.mrb[0].mxu0
    %v632 = vadd.f32 %v590, %v631
    %v633 = vpop.f32.mrb[0].mxu0
    %634 = vdwg.mxu0
    %v635 = vmax.f32 %v629, 0.0
    %v636 = vmax.f32 %v632, 0.0
    %v637 = vpack.c.bf16 %v636, %v635
    %v638 = vpack.c.bf16 %v576, %v575
    %v639 = vpack.c.bf16 %v578, %v577
    %v640 = vpack.c.bf16 %v580, %v579
    %v641 = vpack.c.bf16 %v582, %v581
    %v642 = vlaneseq
    %v643 = vshrl.u32 %v642, 7
    %v644 = vsub.s32 0, %v643
    %v645 = vrot.slane %v583, %v644
    %v647 = vsel %vm317, %v637, 0
    %649 = vmatprep.subr.bf16.mxu0 0
    %650 = vmatpush1.bf16.msra.mxu0 %v638
    %651 = vmatprep.subr.bf16.mxu0 0
    %652 = vmatpush1.bf16.msra.mxu0 %v639
    %653 = vmatprep.subr.bf16.mxu0 0
    %654 = vmatpush1.bf16.msra.mxu0 %v640
    %655 = vmatprep.subr.bf16.mxu0 0
    %656 = vmatpush1.bf16.msra.mxu0 %v641
    %657 = vmatprep.subr.bf16.mxu0 0
    %658 = vmatpush1.bf16.msra.mxu0 0
    %659 = vmatprep.subr.bf16.mxu0 0
    %660 = vmatpush1.bf16.msra.mxu0 0
    %661 = vmatprep.subr.bf16.mxu0 0
    %662 = vmatpush1.bf16.msra.mxu0 0
    %663 = vmatprep.subr.bf16.mxu0 0
    %664 = vmatpush1.bf16.msra.mxu0 0
    %665 = vmatprep.subr.bf16.mxu0 0
    %666 = vmatpush1.bf16.msra.mxu0 0
    %667 = vmatprep.subr.bf16.mxu0 0
    %668 = vmatpush1.bf16.msra.mxu0 0
    %669 = vmatprep.subr.bf16.mxu0 0
    %670 = vmatpush1.bf16.msra.mxu0 0
    %671 = vmatprep.subr.bf16.mxu0 0
    %672 = vmatpush1.bf16.msra.mxu0 0
    %673 = vmatprep.subr.bf16.mxu0 0
    %674 = vmatpush1.bf16.msra.mxu0 0
    %675 = vmatprep.subr.bf16.mxu0 0
    %676 = vmatpush1.bf16.msra.mxu0 0
    %677 = vmatprep.subr.bf16.mxu0 0
    %678 = vmatpush1.bf16.msra.mxu0 0
    %679 = vmatprep.subr.bf16.mxu0 0
    %680 = vmatpush1.bf16.msra.mxu0 0
    %681 = vmatprep.mubr.bf16.mxu0 0
    %682 = vmatmul.mubr.bf16.gmra.mrb[0].mxu0 %v647
    %v683 = vpop.f32.mrb[0].mxu0
    %v684 = vadd.f32 %v645, %v683
    %v685 = vpop.f32.mrb[0].mxu0
    %v686 = vpop.f32.mrb[0].mxu0
    %v687 = vadd.f32 %v645, %v686
    %v688 = vpop.f32.mrb[0].mxu0
    %689 = vdwg.mxu0
    %v690 = vld [vmem:[#allocation4 + $0xd0] sm:$0x1]
    %v691 = vld [vmem:[#allocation4 + $0xd8] sm:$0x1]
    %v692 = vadd.f32 %v568, %v684
    %v693 = vadd.f32 %v569, %v687
    %v694 = vsel %vm114, %v692, 0.0
    %695 = vadd.xlane.f32.xlu0 %v694
    %v696 = vpop.xlane.xlu0 %695
    %v697 = vsel %vm114, %v693, 0.0
    %698 = vadd.xlane.f32.xlu0 %v697
    %v699 = vpop.xlane.xlu0 %698
    %v700 = vmul.f32 %v696, %v537
    %v701 = vmul.f32 %v699, %v537
    %v702 = vsub.f32 %v692, %v700
    %v703 = vsub.f32 %v693, %v701
    %v704 = vmul.f32 %v702, %v702
    %v705 = vmul.f32 %v703, %v703
    %v706 = vsel %vm114, %v704, 0.0
    %707 = vadd.xlane.f32.xlu0 %v706
    %v708 = vpop.xlane.xlu0 %707
    %v709 = vsel %vm114, %v705, 0.0
    %710 = vadd.xlane.f32.xlu0 %v709
    %v711 = vpop.xlane.xlu0 %710
    %v712 = vmul.f32 %v708, %v537
    %v713 = vmul.f32 %v711, %v537
    %v714 = vadd.f32 %v712, 1e-05
    %v715 = vadd.f32 %v713, 1e-05
    %v716 = vrsqrt.pop %v714
    %v717 = vrsqrt.pop %v715
    %v718 = vmul.f32 %v702, %v716
    %v719 = vmul.f32 %v703, %v717
    %v720 = vlaneseq
    %v721 = vshrl.u32 %v720, 7
    %v722 = vsub.s32 0, %v721
    %v723 = vrot.slane %v690, %v722
    %v724 = vmul.f32 %v718, %v723
    %v725 = vmul.f32 %v719, %v723
    %v726 = vlaneseq
    %v727 = vshrl.u32 %v726, 7
    %v728 = vsub.s32 0, %v727
    %v729 = vrot.slane %v691, %v728
    %v730 = vadd.f32 %v724, %v729
    %v731 = vadd.f32 %v725, %v729
    %v732 = vld [vmem:[#allocation4 + $0xe0] sm:$0xff]
    %v733 = vld [vmem:[#allocation4 + $0xe8] sm:$0xff]
    %v734 = vld [vmem:[#allocation4 + $0xf0] sm:$0xff]
    %v735 = vld [vmem:[#allocation4 + $0xf8] sm:$0xff]
    %v736 = vpack.c.bf16 %v731, %v730
    %v737 = vpack.c.bf16 %v733, %v732
    %v738 = vpack.c.bf16 %v735, %v734
    %v739 = vld [vmem:[#allocation4 + $0x100] sm:$0x1]
    %v740 = vlaneseq
    %v741 = vshrl.u32 %v740, 7
    %v742 = vsub.s32 0, %v741
    %v743 = vrot.slane %v739, %v742
    %v745 = vsel %vm114, %v736, 0
    %747 = vmatprep.subr.bf16.mxu0 0
    %748 = vmatpush1.bf16.msra.mxu0 %v737
    %749 = vmatprep.subr.bf16.mxu0 0
    %750 = vmatpush1.bf16.msra.mxu0 %v738
    %751 = vmatprep.subr.bf16.mxu0 0
    %752 = vmatpush1.bf16.msra.mxu0 0
    %753 = vmatprep.subr.bf16.mxu0 0
    %754 = vmatpush1.bf16.msra.mxu0 0
    %755 = vmatprep.subr.bf16.mxu0 0
    %756 = vmatpush1.bf16.msra.mxu0 0
    %757 = vmatprep.subr.bf16.mxu0 0
    %758 = vmatpush1.bf16.msra.mxu0 0
    %759 = vmatprep.subr.bf16.mxu0 0
    %760 = vmatpush1.bf16.msra.mxu0 0
    %761 = vmatprep.subr.bf16.mxu0 0
    %762 = vmatpush1.bf16.msra.mxu0 0
    %763 = vmatprep.subr.bf16.mxu0 0
    %764 = vmatpush1.bf16.msra.mxu0 0
    %765 = vmatprep.subr.bf16.mxu0 0
    %766 = vmatpush1.bf16.msra.mxu0 0
    %767 = vmatprep.subr.bf16.mxu0 0
    %768 = vmatpush1.bf16.msra.mxu0 0
    %769 = vmatprep.subr.bf16.mxu0 0
    %770 = vmatpush1.bf16.msra.mxu0 0
    %771 = vmatprep.subr.bf16.mxu0 0
    %772 = vmatpush1.bf16.msra.mxu0 0
    %773 = vmatprep.subr.bf16.mxu0 0
    %774 = vmatpush1.bf16.msra.mxu0 0
    %775 = vmatprep.subr.bf16.mxu0 0
    %776 = vmatpush1.bf16.msra.mxu0 0
    %777 = vmatprep.subr.bf16.mxu0 0
    %778 = vmatpush1.bf16.msra.mxu0 0
    %779 = vmatprep.mubr.bf16.mxu0 0
    %780 = vmatmul.mubr.bf16.gmra.mrb[0].mxu0 %v745
    %v781 = vpop.f32.mrb[0].mxu0
    %v782 = vadd.f32 %v743, %v781
    %v783 = vpop.f32.mrb[0].mxu0
    %v784 = vpop.f32.mrb[0].mxu0
    %v785 = vadd.f32 %v743, %v784
    %v786 = vpop.f32.mrb[0].mxu0
    %787 = vdwg.mxu0
    %v788 = vld [vmem:[#allocation4 + $0x108] sm:$0xff]
    %v789 = vld [vmem:[#allocation4 + $0x110] sm:$0xff]
    %v790 = vld [vmem:[#allocation4 + $0x118] sm:$0xff]
    %v791 = vld [vmem:[#allocation4 + $0x120] sm:$0xff]
    %v792 = vld [vmem:[#allocation4 + $0x128] sm:$0x1]
    %v793 = vmul.f32 %v782, %v173
    %v794 = vmul.f32 %v785, %v175
    %v795 = vmul.f32 %v782, %v177
    %v796 = vmul.f32 %v785, %v179
    %v797 = vmul.f32 %v782, %v181
    %v798 = vmul.f32 %v785, %v183
    %v799 = vmul.f32 %v782, %v185
    %v800 = vmul.f32 %v785, %v187
    %v801 = vpack.c.bf16 %v794, %v793
    %v802 = vpack.c.bf16 %v796, %v795
    %v803 = vpack.c.bf16 %v798, %v797
    %v804 = vpack.c.bf16 %v800, %v799
    %v805 = vmul.f32 %v782, %v209
    %v806 = vmul.f32 %v785, %v211
    %v807 = vmul.f32 %v782, %v213
    %v808 = vmul.f32 %v785, %v215
    %v809 = vmul.f32 %v782, %v217
    %v810 = vmul.f32 %v785, %v219
    %v811 = vmul.f32 %v782, %v221
    %v812 = vmul.f32 %v785, %v223
    %v813 = vpack.c.bf16 %v806, %v805
    %v814 = vpack.c.bf16 %v808, %v807
    %v815 = vpack.c.bf16 %v810, %v809
    %v816 = vpack.c.bf16 %v812, %v811
    %v817 = vpack.c.bf16 %v785, %v782
    %822 = vrot.lane.b32.xlu0 %v801, 96
    %v823 = vpop.permute.xlu0 %822
    %824 = vrot.lane.b32.xlu0 %v802, 96
    %v825 = vpop.permute.xlu0 %824
    %826 = vrot.lane.b32.xlu0 %v803, 96
    %v827 = vpop.permute.xlu0 %826
    %828 = vrot.lane.b32.xlu0 %v804, 96
    %v829 = vpop.permute.xlu0 %828
    %v831 = vsel %vm114, %v817, 0
    %v834 = vsel %vm114, %v823, 0
    %v837 = vsel %vm114, %v825, 0
    %v840 = vsel %vm114, %v827, 0
    %v843 = vsel %vm114, %v829, 0
    %845 = vmatprep.subr.bf16.mxu0 0
    %846 = vmatpush1.bf16.xpose.msra.mxu0 %v834
    %847 = vmatprep.subr.bf16.mxu0 0
    %848 = vmatpush1.bf16.xpose.msra.mxu0 %v837
    %849 = vmatprep.subr.bf16.mxu0 0
    %850 = vmatpush1.bf16.xpose.msra.mxu0 %v840
    %851 = vmatprep.subr.bf16.mxu0 0
    %852 = vmatpush1.bf16.xpose.msra.mxu0 %v843
    %853 = vmatprep.subr.bf16.mxu0 0
    %854 = vmatpush1.bf16.xpose.msra.mxu0 0
    %855 = vmatprep.subr.bf16.mxu0 0
    %856 = vmatpush1.bf16.xpose.msra.mxu0 0
    %857 = vmatprep.subr.bf16.mxu0 0
    %858 = vmatpush1.bf16.xpose.msra.mxu0 0
    %859 = vmatprep.subr.bf16.mxu0 0
    %860 = vmatpush1.bf16.xpose.msra.mxu0 0
    %861 = vmatprep.subr.bf16.mxu0 0
    %862 = vmatpush1.bf16.xpose.msra.mxu0 0
    %863 = vmatprep.subr.bf16.mxu0 0
    %864 = vmatpush1.bf16.xpose.msra.mxu0 0
    %865 = vmatprep.subr.bf16.mxu0 0
    %866 = vmatpush1.bf16.xpose.msra.mxu0 0
    %867 = vmatprep.subr.bf16.mxu0 0
    %868 = vmatpush1.bf16.xpose.msra.mxu0 0
    %869 = vmatprep.subr.bf16.mxu0 0
    %870 = vmatpush1.bf16.xpose.msra.mxu0 0
    %871 = vmatprep.subr.bf16.mxu0 0
    %872 = vmatpush1.bf16.xpose.msra.mxu0 0
    %873 = vmatprep.subr.bf16.mxu0 0
    %874 = vmatpush1.bf16.xpose.msra.mxu0 0
    %875 = vmatprep.subr.bf16.mxu0 0
    %876 = vmatpush1.bf16.xpose.msra.mxu0 0
    %877 = vmatprep.mubr.bf16.mxu0 0
    %878 = vmatmul.mubr.bf16.gmra.mrb[0].mxu0 %v831
    %v879 = vpop.f32.mrb[0].mxu0
    %v880 = vadd.f32 0.0, %v879
    %v881 = vpop.f32.mrb[0].mxu0
    %v882 = vpop.f32.mrb[0].mxu0
    %v883 = vadd.f32 0.0, %v882
    %v884 = vpop.f32.mrb[0].mxu0
    %885 = vdwg.mxu0
    %v886 = vmul.f32 %v880, 0.35355338
    %v887 = vmul.f32 %v883, 0.35355338
    %v888 = vadd.f32 %v886, %v60
    %v889 = vadd.f32 %v887, %v61
    %v890 = vsel %vm317, %v888, -inf
    %891 = vmax.xlane.f32.xlu0 %v890
    %v892 = vpop.xlane.xlu0 %891
    %v893 = vsel %vm317, %v889, -inf
    %894 = vmax.xlane.f32.xlu0 %v893
    %v895 = vpop.xlane.xlu0 %894
    %v896 = vsub.f32 %v888, %v892
    %v897 = vsub.f32 %v889, %v895
    %v898 = vmul.f32 %v896, 1.442695
    %v899 = vpow.pop %v898
    %v900 = vmul.f32 %v897, 1.442695
    %v901 = vpow.pop %v900
    %v903 = vsel %vm317, %v899, 0
    %v906 = vsel %vm317, %v901, 0
    %908 = vmatprep.subr.mxu0 0.0
    %909 = vmatpush1.msra.mxu0 %v76
    %910 = vmatprep.subr.mxu0 0.0
    %911 = vmatpush1.msra.mxu0 %v77
    %912 = vmatprep.subr.mxu0 0.0
    %913 = vmatpush1.msra.mxu0 %v78
    %914 = vmatprep.subr.mxu0 0.0
    %915 = vmatpush1.msra.mxu0 %v79
    %916 = vmatprep.subr.mxu0 0.0
    %917 = vmatpush1.msra.mxu0 %v80
    %918 = vmatprep.subr.mxu0 0.0
    %919 = vmatpush1.msra.mxu0 %v81
    %920 = vmatprep.subr.mxu0 0.0
    %921 = vmatpush1.msra.mxu0 %v82
    %922 = vmatprep.subr.mxu0 0.0
    %923 = vmatpush1.msra.mxu0 %v83
    %924 = vmatprep.subr.mxu0 0.0
    %925 = vmatpush1.msra.mxu0 0.0
    %926 = vmatprep.subr.mxu0 0.0
    %927 = vmatpush1.msra.mxu0 0.0
    %928 = vmatprep.subr.mxu0 0.0
    %929 = vmatpush1.msra.mxu0 0.0
    %930 = vmatprep.subr.mxu0 0.0
    %931 = vmatpush1.msra.mxu0 0.0
    %932 = vmatprep.subr.mxu0 0.0
    %933 = vmatpush1.msra.mxu0 0.0
    %934 = vmatprep.subr.mxu0 0.0
    %935 = vmatpush1.msra.mxu0 0.0
    %936 = vmatprep.subr.mxu0 0.0
    %937 = vmatpush1.msra.mxu0 0.0
    %938 = vmatprep.subr.mxu0 0.0
    %939 = vmatpush1.msra.mxu0 0.0
    %940 = vmatprep.subr.mxu0 0.0
    %941 = vmatpush1.msra.mxu0 0.0
    %942 = vmatprep.subr.mxu0 0.0
    %943 = vmatpush1.msra.mxu0 0.0
    %944 = vmatprep.subr.mxu0 0.0
    %945 = vmatpush1.msra.mxu0 0.0
    %946 = vmatprep.subr.mxu0 0.0
    %947 = vmatpush1.msra.mxu0 0.0
    %948 = vmatprep.subr.mxu0 0.0
    %949 = vmatpush1.msra.mxu0 0.0
    %950 = vmatprep.subr.mxu0 0.0
    %951 = vmatpush1.msra.mxu0 0.0
    %952 = vmatprep.subr.mxu0 0.0
    %953 = vmatpush1.msra.mxu0 0.0
    %954 = vmatprep.subr.mxu0 0.0
    %955 = vmatpush1.msra.mxu0 0.0
    %956 = vmatprep.subr.mxu0 0.0
    %957 = vmatpush1.msra.mxu0 0.0
    %958 = vmatprep.subr.mxu0 0.0
    %959 = vmatpush1.msra.mxu0 0.0
    %960 = vmatprep.subr.mxu0 0.0
    %961 = vmatpush1.msra.mxu0 0.0
    %962 = vmatprep.subr.mxu0 0.0
    %963 = vmatpush1.msra.mxu0 0.0
    %964 = vmatprep.subr.mxu0 0.0
    %965 = vmatpush1.msra.mxu0 0.0
    %966 = vmatprep.subr.mxu0 0.0
    %967 = vmatpush1.msra.mxu0 0.0
    %968 = vmatprep.subr.mxu0 0.0
    %969 = vmatpush1.msra.mxu0 0.0
    %970 = vmatprep.subr.mxu0 0.0
    %971 = vmatpush1.msra.mxu0 0.0
    %972 = vmatprep.mubr.f32.mxu0 0.0
    %973 = vmatmul.mubr.f32.gmra.mrb[0].mxu0 %v903
    %v974 = vpop.f32.mrb[0].mxu0
    %v975 = vadd.f32 0.0, %v974
    %v976 = vpop.f32.mrb[0].mxu0
    %977 = vmatprep.mubr.f32.mxu0 0.0
    %978 = vmatmul.mubr.f32.gmra.mrb[0].mxu0 %v906
    %v979 = vpop.f32.mrb[0].mxu0
    %v980 = vadd.f32 0.0, %v979
    %v981 = vpop.f32.mrb[0].mxu0
    %982 = vdwg.mxu0
    %v983 = vrcp.pop %v975
    %v984 = vrcp.pop %v980
    %v985 = vmul.f32 %v899, %v983
    %v986 = vmul.f32 %v901, %v984
    %v987 = vpack.c.bf16 %v986, %v985
    %992 = vrot.lane.b32.xlu0 %v813, 64
    %v993 = vpop.permute.xlu0 %992
    %994 = vrot.lane.b32.xlu0 %v814, 64
    %v995 = vpop.permute.xlu0 %994
    %996 = vrot.lane.b32.xlu0 %v815, 64
    %v997 = vpop.permute.xlu0 %996
    %998 = vrot.lane.b32.xlu0 %v816, 64
    %v999 = vpop.permute.xlu0 %998
    %v1005 = vsel %vm317, %v987, 0
    %1007 = vmatprep.subr.bf16.mxu0 0
    %1008 = vmatpush1.bf16.msra.mxu0 %v993
    %1009 = vmatprep.subr.bf16.mxu0 0
    %1010 = vmatpush1.bf16.msra.mxu0 %v995
    %1011 = vmatprep.subr.bf16.mxu0 0
    %1012 = vmatpush1.bf16.msra.mxu0 %v997
    %1013 = vmatprep.subr.bf16.mxu0 0
    %1014 = vmatpush1.bf16.msra.mxu0 %v999
    %1015 = vmatprep.subr.bf16.mxu0 0
    %1016 = vmatpush1.bf16.msra.mxu0 0
    %1017 = vmatprep.subr.bf16.mxu0 0
    %1018 = vmatpush1.bf16.msra.mxu0 0
    %1019 = vmatprep.subr.bf16.mxu0 0
    %1020 = vmatpush1.bf16.msra.mxu0 0
    %1021 = vmatprep.subr.bf16.mxu0 0
    %1022 = vmatpush1.bf16.msra.mxu0 0
    %1023 = vmatprep.subr.bf16.mxu0 0
    %1024 = vmatpush1.bf16.msra.mxu0 0
    %1025 = vmatprep.subr.bf16.mxu0 0
    %1026 = vmatpush1.bf16.msra.mxu0 0
    %1027 = vmatprep.subr.bf16.mxu0 0
    %1028 = vmatpush1.bf16.msra.mxu0 0
    %1029 = vmatprep.subr.bf16.mxu0 0
    %1030 = vmatpush1.bf16.msra.mxu0 0
    %1031 = vmatprep.subr.bf16.mxu0 0
    %1032 = vmatpush1.bf16.msra.mxu0 0
    %1033 = vmatprep.subr.bf16.mxu0 0
    %1034 = vmatpush1.bf16.msra.mxu0 0
    %1035 = vmatprep.subr.bf16.mxu0 0
    %1036 = vmatpush1.bf16.msra.mxu0 0
    %1037 = vmatprep.subr.bf16.mxu0 0
    %1038 = vmatpush1.bf16.msra.mxu0 0
    %1039 = vmatprep.mubr.bf16.mxu0 0
    %1040 = vmatmul.mubr.bf16.gmra.mrb[0].mxu0 %v1005
    %v1041 = vpop.f32.mrb[0].mxu0
    %v1042 = vadd.f32 0.0, %v1041
    %v1043 = vpop.f32.mrb[0].mxu0
    %v1044 = vpop.f32.mrb[0].mxu0
    %v1045 = vadd.f32 0.0, %v1044
    %v1046 = vpop.f32.mrb[0].mxu0
    %1047 = vdwg.mxu0
    %v1048 = vpack.c.bf16 %v1045, %v1042
    %v1049 = vpack.c.bf16 %v789, %v788
    %v1050 = vpack.c.bf16 %v791, %v790
    %v1051 = vlaneseq
    %v1052 = vshrl.u32 %v1051, 7
    %v1053 = vsub.s32 0, %v1052
    %v1054 = vrot.slane %v792, %v1053
    %v1056 = vsel %vm114, %v1048, 0
    %1058 = vmatprep.subr.bf16.mxu0 0
    %1059 = vmatpush1.bf16.msra.mxu0 %v1049
    %1060 = vmatprep.subr.bf16.mxu0 0
    %1061 = vmatpush1.bf16.msra.mxu0 %v1050
    %1062 = vmatprep.subr.bf16.mxu0 0
    %1063 = vmatpush1.bf16.msra.mxu0 0
    %1064 = vmatprep.subr.bf16.mxu0 0
    %1065 = vmatpush1.bf16.msra.mxu0 0
    %1066 = vmatprep.subr.bf16.mxu0 0
    %1067 = vmatpush1.bf16.msra.mxu0 0
    %1068 = vmatprep.subr.bf16.mxu0 0
    %1069 = vmatpush1.bf16.msra.mxu0 0
    %1070 = vmatprep.subr.bf16.mxu0 0
    %1071 = vmatpush1.bf16.msra.mxu0 0
    %1072 = vmatprep.subr.bf16.mxu0 0
    %1073 = vmatpush1.bf16.msra.mxu0 0
    %1074 = vmatprep.subr.bf16.mxu0 0
    %1075 = vmatpush1.bf16.msra.mxu0 0
    %1076 = vmatprep.subr.bf16.mxu0 0
    %1077 = vmatpush1.bf16.msra.mxu0 0
    %1078 = vmatprep.subr.bf16.mxu0 0
    %1079 = vmatpush1.bf16.msra.mxu0 0
    %1080 = vmatprep.subr.bf16.mxu0 0
    %1081 = vmatpush1.bf16.msra.mxu0 0
    %1082 = vmatprep.subr.bf16.mxu0 0
    %1083 = vmatpush1.bf16.msra.mxu0 0
    %1084 = vmatprep.subr.bf16.mxu0 0
    %1085 = vmatpush1.bf16.msra.mxu0 0
    %1086 = vmatprep.subr.bf16.mxu0 0
    %1087 = vmatpush1.bf16.msra.mxu0 0
    %1088 = vmatprep.subr.bf16.mxu0 0
    %1089 = vmatpush1.bf16.msra.mxu0 0
    %1090 = vmatprep.mubr.bf16.mxu0 0
    %1091 = vmatmul.mubr.bf16.gmra.mrb[0].mxu0 %v1056
    %v1092 = vpop.f32.mrb[0].mxu0
    %v1093 = vadd.f32 %v1054, %v1092
    %v1094 = vpop.f32.mrb[0].mxu0
    %v1095 = vpop.f32.mrb[0].mxu0
    %v1096 = vadd.f32 %v1054, %v1095
    %v1097 = vpop.f32.mrb[0].mxu0
    %1098 = vdwg.mxu0
    %v1099 = vld [vmem:[#allocation4 + $0x130] sm:$0x1]
    %v1100 = vld [vmem:[#allocation4 + $0x138] sm:$0x1]
    %v1101 = vadd.f32 %v730, %v1093
    %v1102 = vadd.f32 %v731, %v1096
    %v1103 = vsel %vm114, %v1101, 0.0
    %1104 = vadd.xlane.f32.xlu0 %v1103
    %v1105 = vpop.xlane.xlu0 %1104
    %v1106 = vsel %vm114, %v1102, 0.0
    %1107 = vadd.xlane.f32.xlu0 %v1106
    %v1108 = vpop.xlane.xlu0 %1107
    %v1109 = vmul.f32 %v1105, %v537
    %v1110 = vmul.f32 %v1108, %v537
    %v1111 = vsub.f32 %v1101, %v1109
    %v1112 = vsub.f32 %v1102, %v1110
    %v1113 = vmul.f32 %v1111, %v1111
    %v1114 = vmul.f32 %v1112, %v1112
    %v1115 = vsel %vm114, %v1113, 0.0
    %1116 = vadd.xlane.f32.xlu0 %v1115
    %v1117 = vpop.xlane.xlu0 %1116
    %v1118 = vsel %vm114, %v1114, 0.0
    %1119 = vadd.xlane.f32.xlu0 %v1118
    %v1120 = vpop.xlane.xlu0 %1119
    %v1121 = vmul.f32 %v1117, %v537
    %v1122 = vmul.f32 %v1120, %v537
    %v1123 = vadd.f32 %v1121, 1e-05
    %v1124 = vadd.f32 %v1122, 1e-05
    %v1125 = vrsqrt.pop %v1123
    %v1126 = vrsqrt.pop %v1124
    %v1127 = vmul.f32 %v1111, %v1125
    %v1128 = vmul.f32 %v1112, %v1126
    %v1129 = vlaneseq
    %v1130 = vshrl.u32 %v1129, 7
    %v1131 = vsub.s32 0, %v1130
    %v1132 = vrot.slane %v1099, %v1131
    %v1133 = vmul.f32 %v1127, %v1132
    %v1134 = vmul.f32 %v1128, %v1132
    %v1135 = vlaneseq
    %v1136 = vshrl.u32 %v1135, 7
    %v1137 = vsub.s32 0, %v1136
    %v1138 = vrot.slane %v1100, %v1137
    %v1139 = vadd.f32 %v1133, %v1138
    %v1140 = vadd.f32 %v1134, %v1138
    %v1141 = vld [vmem:[#allocation4 + $0x140] sm:$0xff]
    %v1142 = vld [vmem:[#allocation4 + $0x148] sm:$0xff]
    %v1143 = vld [vmem:[#allocation4 + $0x150] sm:$0xff]
    %v1144 = vld [vmem:[#allocation4 + $0x158] sm:$0xff]
    %v1145 = vld [vmem:[#allocation4 + $0x160] sm:$0x1]
    %v1146 = vld [vmem:[#allocation4 + $0x168] sm:$0xff]
    %v1147 = vld [vmem:[#allocation4 + $0x170] sm:$0xff]
    %v1148 = vld [vmem:[#allocation4 + $0x178] sm:$0xff]
    %v1149 = vld [vmem:[#allocation4 + $0x180] sm:$0xff]
    %v1150 = vld [vmem:[#allocation4 + $0x188] sm:$0xff]
    %v1151 = vld [vmem:[#allocation4 + $0x190] sm:$0xff]
    %v1152 = vld [vmem:[#allocation4 + $0x198] sm:$0xff]
    %v1153 = vld [vmem:[#allocation4 + $0x1a0] sm:$0xff]
    %v1154 = vld [vmem:[#allocation4 + $0x1a8] sm:$0x1]
    %v1155 = vpack.c.bf16 %v1140, %v1139
    %v1156 = vpack.c.bf16 %v1142, %v1141
    %v1157 = vpack.c.bf16 %v1144, %v1143
    %v1158 = vlaneseq
    %v1159 = vshrl.u32 %v1158, 7
    %v1160 = vsub.s32 0, %v1159
    %v1161 = vrot.slane %v1145, %v1160
    %v1163 = vsel %vm114, %v1155, 0
    %1165 = vmatprep.subr.bf16.mxu0 0
    %1166 = vmatpush1.bf16.msra.mxu0 %v1156
    %1167 = vmatprep.subr.bf16.mxu0 0
    %1168 = vmatpush1.bf16.msra.mxu0 %v1157
    %1169 = vmatprep.subr.bf16.mxu0 0
    %1170 = vmatpush1.bf16.msra.mxu0 0
    %1171 = vmatprep.subr.bf16.mxu0 0
    %1172 = vmatpush1.bf16.msra.mxu0 0
    %1173 = vmatprep.subr.bf16.mxu0 0
    %1174 = vmatpush1.bf16.msra.mxu0 0
    %1175 = vmatprep.subr.bf16.mxu0 0
    %1176 = vmatpush1.bf16.msra.mxu0 0
    %1177 = vmatprep.subr.bf16.mxu0 0
    %1178 = vmatpush1.bf16.msra.mxu0 0
    %1179 = vmatprep.subr.bf16.mxu0 0
    %1180 = vmatpush1.bf16.msra.mxu0 0
    %1181 = vmatprep.subr.bf16.mxu0 0
    %1182 = vmatpush1.bf16.msra.mxu0 0
    %1183 = vmatprep.subr.bf16.mxu0 0
    %1184 = vmatpush1.bf16.msra.mxu0 0
    %1185 = vmatprep.subr.bf16.mxu0 0
    %1186 = vmatpush1.bf16.msra.mxu0 0
    %1187 = vmatprep.subr.bf16.mxu0 0
    %1188 = vmatpush1.bf16.msra.mxu0 0
    %1189 = vmatprep.subr.bf16.mxu0 0
    %1190 = vmatpush1.bf16.msra.mxu0 0
    %1191 = vmatprep.subr.bf16.mxu0 0
    %1192 = vmatpush1.bf16.msra.mxu0 0
    %1193 = vmatprep.subr.bf16.mxu0 0
    %1194 = vmatpush1.bf16.msra.mxu0 0
    %1195 = vmatprep.subr.bf16.mxu0 0
    %1196 = vmatpush1.bf16.msra.mxu0 0
    %1197 = vmatprep.mubr.bf16.mxu0 0
    %1198 = vmatmul.mubr.bf16.gmra.mrb[0].mxu0 %v1163
    %v1199 = vpop.f32.mrb[0].mxu0
    %v1200 = vadd.f32 %v1161, %v1199
    %v1201 = vpop.f32.mrb[0].mxu0
    %v1202 = vpop.f32.mrb[0].mxu0
    %v1203 = vadd.f32 %v1161, %v1202
    %v1204 = vpop.f32.mrb[0].mxu0
    %1205 = vdwg.mxu0
    %v1206 = vmax.f32 %v1200, 0.0
    %v1207 = vmax.f32 %v1203, 0.0
    %v1208 = vpack.c.bf16 %v1207, %v1206
    %v1209 = vpack.c.bf16 %v1147, %v1146
    %v1210 = vpack.c.bf16 %v1149, %v1148
    %v1211 = vpack.c.bf16 %v1151, %v1150
    %v1212 = vpack.c.bf16 %v1153, %v1152
    %v1213 = vlaneseq
    %v1214 = vshrl.u32 %v1213, 7
    %v1215 = vsub.s32 0, %v1214
    %v1216 = vrot.slane %v1154, %v1215
    %v1218 = vsel %vm317, %v1208, 0
    %1220 = vmatprep.subr.bf16.mxu0 0
    %1221 = vmatpush1.bf16.msra.mxu0 %v1209
    %1222 = vmatprep.subr.bf16.mxu0 0
    %1223 = vmatpush1.bf16.msra.mxu0 %v1210
    %1224 = vmatprep.subr.bf16.mxu0 0
    %1225 = vmatpush1.bf16.msra.mxu0 %v1211
    %1226 = vmatprep.subr.bf16.mxu0 0
    %1227 = vmatpush1.bf16.msra.mxu0 %v1212
    %1228 = vmatprep.subr.bf16.mxu0 0
    %1229 = vmatpush1.bf16.msra.mxu0 0
    %1230 = vmatprep.subr.bf16.mxu0 0
    %1231 = vmatpush1.bf16.msra.mxu0 0
    %1232 = vmatprep.subr.bf16.mxu0 0
    %1233 = vmatpush1.bf16.msra.mxu0 0
    %1234 = vmatprep.subr.bf16.mxu0 0
    %1235 = vmatpush1.bf16.msra.mxu0 0
    %1236 = vmatprep.subr.bf16.mxu0 0
    %1237 = vmatpush1.bf16.msra.mxu0 0
    %1238 = vmatprep.subr.bf16.mxu0 0
    %1239 = vmatpush1.bf16.msra.mxu0 0
    %1240 = vmatprep.subr.bf16.mxu0 0
    %1241 = vmatpush1.bf16.msra.mxu0 0
    %1242 = vmatprep.subr.bf16.mxu0 0
    %1243 = vmatpush1.bf16.msra.mxu0 0
    %1244 = vmatprep.subr.bf16.mxu0 0
    %1245 = vmatpush1.bf16.msra.mxu0 0
    %1246 = vmatprep.subr.bf16.mxu0 0
    %1247 = vmatpush1.bf16.msra.mxu0 0
    %1248 = vmatprep.subr.bf16.mxu0 0
    %1249 = vmatpush1.bf16.msra.mxu0 0
    %1250 = vmatprep.subr.bf16.mxu0 0
    %1251 = vmatpush1.bf16.msra.mxu0 0
    %1252 = vmatprep.mubr.bf16.mxu0 0
    %1253 = vmatmul.mubr.bf16.gmra.mrb[0].mxu0 %v1218
    %v1254 = vpop.f32.mrb[0].mxu0
    %v1255 = vadd.f32 %v1216, %v1254
    %v1256 = vpop.f32.mrb[0].mxu0
    %v1257 = vpop.f32.mrb[0].mxu0
    %v1258 = vadd.f32 %v1216, %v1257
    %v1259 = vpop.f32.mrb[0].mxu0
    %1260 = vdwg.mxu0
    %v1261 = vld [vmem:[#allocation4 + $0x1b0] sm:$0x1]
    %v1262 = vld [vmem:[#allocation4 + $0x1b8] sm:$0x1]
    %v1263 = vadd.f32 %v1139, %v1255
    %v1264 = vadd.f32 %v1140, %v1258
    %v1265 = vsel %vm114, %v1263, 0.0
    %1266 = vadd.xlane.f32.xlu0 %v1265
    %v1267 = vpop.xlane.xlu0 %1266
    %v1268 = vsel %vm114, %v1264, 0.0
    %1269 = vadd.xlane.f32.xlu0 %v1268
    %v1270 = vpop.xlane.xlu0 %1269
    %v1271 = vmul.f32 %v1267, %v537
    %v1272 = vmul.f32 %v1270, %v537
    %v1273 = vsub.f32 %v1263, %v1271
    %v1274 = vsub.f32 %v1264, %v1272
    %v1275 = vmul.f32 %v1273, %v1273
    %v1276 = vmul.f32 %v1274, %v1274
    %v1277 = vsel %vm114, %v1275, 0.0
    %1278 = vadd.xlane.f32.xlu0 %v1277
    %v1279 = vpop.xlane.xlu0 %1278
    %v1280 = vsel %vm114, %v1276, 0.0
    %1281 = vadd.xlane.f32.xlu0 %v1280
    %v1282 = vpop.xlane.xlu0 %1281
    %v1283 = vmul.f32 %v1279, %v537
    %v1284 = vmul.f32 %v1282, %v537
    %v1285 = vadd.f32 %v1283, 1e-05
    %v1286 = vadd.f32 %v1284, 1e-05
    %v1287 = vrsqrt.pop %v1285
    %v1288 = vrsqrt.pop %v1286
    %v1289 = vmul.f32 %v1273, %v1287
    %v1290 = vmul.f32 %v1274, %v1288
    %v1291 = vlaneseq
    %v1292 = vshrl.u32 %v1291, 7
    %v1293 = vsub.s32 0, %v1292
    %v1294 = vrot.slane %v1261, %v1293
    %v1295 = vmul.f32 %v1289, %v1294
    %v1296 = vmul.f32 %v1290, %v1294
    %v1297 = vlaneseq
    %v1298 = vshrl.u32 %v1297, 7
    %v1299 = vsub.s32 0, %v1298
    %v1300 = vrot.slane %v1262, %v1299
    %v1301 = vadd.f32 %v1295, %v1300
    %v1302 = vadd.f32 %v1296, %v1300
    %v1303 = vld [vmem:[%s2] sm:$0xff]
    %v1304 = vld [vmem:[%s2 + $0x8] sm:$0xff]
    %v1305 = vld [vmem:[#allocation4 + $0x1c0] sm:$0xff]
    %v1306 = vld [vmem:[#allocation4 + $0x1c8] sm:$0xff]
    %v1307 = vld [vmem:[#allocation4 + $0x1d0] sm:$0xff]
    %v1308 = vld [vmem:[#allocation4 + $0x1d8] sm:$0xff]
    %v1309 = vpack.c.bf16 %v1304, %v1303
    %v1310 = vpack.c.bf16 %v1306, %v1305
    %v1311 = vpack.c.bf16 %v1308, %v1307
    %v1312 = vld [vmem:[#allocation4 + $0x1e0] sm:$0x1]
    %v1313 = vlaneseq
    %v1314 = vshrl.u32 %v1313, 7
    %v1315 = vsub.s32 0, %v1314
    %v1316 = vrot.slane %v1312, %v1315
    %v1318 = vsel %vm114, %v1309, 0
    %1320 = vmatprep.subr.bf16.mxu0 0
    %1321 = vmatpush1.bf16.msra.mxu0 %v1310
    %1322 = vmatprep.subr.bf16.mxu0 0
    %1323 = vmatpush1.bf16.msra.mxu0 %v1311
    %1324 = vmatprep.subr.bf16.mxu0 0
    %1325 = vmatpush1.bf16.msra.mxu0 0
    %1326 = vmatprep.subr.bf16.mxu0 0
    %1327 = vmatpush1.bf16.msra.mxu0 0
    %1328 = vmatprep.subr.bf16.mxu0 0
    %1329 = vmatpush1.bf16.msra.mxu0 0
    %1330 = vmatprep.subr.bf16.mxu0 0
    %1331 = vmatpush1.bf16.msra.mxu0 0
    %1332 = vmatprep.subr.bf16.mxu0 0
    %1333 = vmatpush1.bf16.msra.mxu0 0
    %1334 = vmatprep.subr.bf16.mxu0 0
    %1335 = vmatpush1.bf16.msra.mxu0 0
    %1336 = vmatprep.subr.bf16.mxu0 0
    %1337 = vmatpush1.bf16.msra.mxu0 0
    %1338 = vmatprep.subr.bf16.mxu0 0
    %1339 = vmatpush1.bf16.msra.mxu0 0
    %1340 = vmatprep.subr.bf16.mxu0 0
    %1341 = vmatpush1.bf16.msra.mxu0 0
    %1342 = vmatprep.subr.bf16.mxu0 0
    %1343 = vmatpush1.bf16.msra.mxu0 0
    %1344 = vmatprep.subr.bf16.mxu0 0
    %1345 = vmatpush1.bf16.msra.mxu0 0
    %1346 = vmatprep.subr.bf16.mxu0 0
    %1347 = vmatpush1.bf16.msra.mxu0 0
    %1348 = vmatprep.subr.bf16.mxu0 0
    %1349 = vmatpush1.bf16.msra.mxu0 0
    %1350 = vmatprep.subr.bf16.mxu0 0
    %1351 = vmatpush1.bf16.msra.mxu0 0
    %1352 = vmatprep.mubr.bf16.mxu0 0
    %1353 = vmatmul.mubr.bf16.gmra.mrb[0].mxu0 %v1318
    %v1354 = vpop.f32.mrb[0].mxu0
    %v1355 = vadd.f32 %v1316, %v1354
    %v1356 = vpop.f32.mrb[0].mxu0
    %v1357 = vpop.f32.mrb[0].mxu0
    %v1358 = vadd.f32 %v1316, %v1357
    %v1359 = vpop.f32.mrb[0].mxu0
    %1360 = vdwg.mxu0
    %v1361 = vld [vmem:[#allocation4 + $0x1e8] sm:$0xff]
    %v1362 = vld [vmem:[#allocation4 + $0x1f0] sm:$0xff]
    %v1363 = vld [vmem:[#allocation4 + $0x1f8] sm:$0xff]
    %v1364 = vld [vmem:[#allocation4 + $0x200] sm:$0xff]
    %v1365 = vld [vmem:[#allocation4 + $0x208] sm:$0x1]
    %1374 = vrot.lane.b32.xlu0 %v84, 32
    %v1375 = vpop.permute.xlu0 %1374
    %1376 = vrot.lane.b32.xlu0 %v85, 32
    %v1377 = vpop.permute.xlu0 %1376
    %1378 = vrot.lane.b32.xlu0 %v86, 32
    %v1379 = vpop.permute.xlu0 %1378
    %1380 = vrot.lane.b32.xlu0 %v87, 32
    %v1381 = vpop.permute.xlu0 %1380
    %1382 = vrot.lane.b32.xlu0 %v88, 32
    %v1383 = vpop.permute.xlu0 %1382
    %1384 = vrot.lane.b32.xlu0 %v89, 32
    %v1385 = vpop.permute.xlu0 %1384
    %1386 = vrot.lane.b32.xlu0 %v90, 32
    %v1387 = vpop.permute.xlu0 %1386
    %1388 = vrot.lane.b32.xlu0 %v91, 32
    %v1389 = vpop.permute.xlu0 %1388
    %v1398 = vmul.f32 %v1355, %v1375
    %v1399 = vmul.f32 %v1358, %v1377
    %v1400 = vmul.f32 %v1355, %v1379
    %v1401 = vmul.f32 %v1358, %v1381
    %v1402 = vmul.f32 %v1355, %v1383
    %v1403 = vmul.f32 %v1358, %v1385
    %v1404 = vmul.f32 %v1355, %v1387
    %v1405 = vmul.f32 %v1358, %v1389
    %v1406 = vpack.c.bf16 %v1399, %v1398
    %v1407 = vpack.c.bf16 %v1401, %v1400
    %v1408 = vpack.c.bf16 %v1403, %v1402
    %v1409 = vpack.c.bf16 %v1405, %v1404
    %1410 = vrot.lane.b32.xlu0 %v84, 64
    %v1411 = vpop.permute.xlu0 %1410
    %1412 = vrot.lane.b32.xlu0 %v85, 64
    %v1413 = vpop.permute.xlu0 %1412
    %1414 = vrot.lane.b32.xlu0 %v86, 64
    %v1415 = vpop.permute.xlu0 %1414
    %1416 = vrot.lane.b32.xlu0 %v87, 64
    %v1417 = vpop.permute.xlu0 %1416
    %1418 = vrot.lane.b32.xlu0 %v88, 64
    %v1419 = vpop.permute.xlu0 %1418
    %1420 = vrot.lane.b32.xlu0 %v89, 64
    %v1421 = vpop.permute.xlu0 %1420
    %1422 = vrot.lane.b32.xlu0 %v90, 64
    %v1423 = vpop.permute.xlu0 %1422
    %1424 = vrot.lane.b32.xlu0 %v91, 64
    %v1425 = vpop.permute.xlu0 %1424
    %v1434 = vmul.f32 %v1355, %v1411
    %v1435 = vmul.f32 %v1358, %v1413
    %v1436 = vmul.f32 %v1355, %v1415
    %v1437 = vmul.f32 %v1358, %v1417
    %v1438 = vmul.f32 %v1355, %v1419
    %v1439 = vmul.f32 %v1358, %v1421
    %v1440 = vmul.f32 %v1355, %v1423
    %v1441 = vmul.f32 %v1358, %v1425
    %v1442 = vpack.c.bf16 %v1435, %v1434
    %v1443 = vpack.c.bf16 %v1437, %v1436
    %v1444 = vpack.c.bf16 %v1439, %v1438
    %v1445 = vpack.c.bf16 %v1441, %v1440
    %v1446 = vpack.c.bf16 %v1358, %v1355
    %1451 = vrot.lane.b32.xlu0 %v1406, 96
    %v1452 = vpop.permute.xlu0 %1451
    %1453 = vrot.lane.b32.xlu0 %v1407, 96
    %v1454 = vpop.permute.xlu0 %1453
    %1455 = vrot.lane.b32.xlu0 %v1408, 96
    %v1456 = vpop.permute.xlu0 %1455
    %1457 = vrot.lane.b32.xlu0 %v1409, 96
    %v1458 = vpop.permute.xlu0 %1457
    %v1460 = vsel %vm114, %v1446, 0
    %v1463 = vsel %vm114, %v1452, 0
    %v1466 = vsel %vm114, %v1454, 0
    %v1469 = vsel %vm114, %v1456, 0
    %v1472 = vsel %vm114, %v1458, 0
    %1474 = vmatprep.subr.bf16.mxu0 0
    %1475 = vmatpush1.bf16.xpose.msra.mxu0 %v1463
    %1476 = vmatprep.subr.bf16.mxu0 0
    %1477 = vmatpush1.bf16.xpose.msra.mxu0 %v1466
    %1478 = vmatprep.subr.bf16.mxu0 0
    %1479 = vmatpush1.bf16.xpose.msra.mxu0 %v1469
    %1480 = vmatprep.subr.bf16.mxu0 0
    %1481 = vmatpush1.bf16.xpose.msra.mxu0 %v1472
    %1482 = vmatprep.subr.bf16.mxu0 0
    %1483 = vmatpush1.bf16.xpose.msra.mxu0 0
    %1484 = vmatprep.subr.bf16.mxu0 0
    %1485 = vmatpush1.bf16.xpose.msra.mxu0 0
    %1486 = vmatprep.subr.bf16.mxu0 0
    %1487 = vmatpush1.bf16.xpose.msra.mxu0 0
    %1488 = vmatprep.subr.bf16.mxu0 0
    %1489 = vmatpush1.bf16.xpose.msra.mxu0 0
    %1490 = vmatprep.subr.bf16.mxu0 0
    %1491 = vmatpush1.bf16.xpose.msra.mxu0 0
    %1492 = vmatprep.subr.bf16.mxu0 0
    %1493 = vmatpush1.bf16.xpose.msra.mxu0 0
    %1494 = vmatprep.subr.bf16.mxu0 0
    %1495 = vmatpush1.bf16.xpose.msra.mxu0 0
    %1496 = vmatprep.subr.bf16.mxu0 0
    %1497 = vmatpush1.bf16.xpose.msra.mxu0 0
    %1498 = vmatprep.subr.bf16.mxu0 0
    %1499 = vmatpush1.bf16.xpose.msra.mxu0 0
    %1500 = vmatprep.subr.bf16.mxu0 0
    %1501 = vmatpush1.bf16.xpose.msra.mxu0 0
    %1502 = vmatprep.subr.bf16.mxu0 0
    %1503 = vmatpush1.bf16.xpose.msra.mxu0 0
    %1504 = vmatprep.subr.bf16.mxu0 0
    %1505 = vmatpush1.bf16.xpose.msra.mxu0 0
    %1506 = vmatprep.mubr.bf16.mxu0 0
    %1507 = vmatmul.mubr.bf16.gmra.mrb[0].mxu0 %v1460
    %v1508 = vpop.f32.mrb[0].mxu0
    %v1509 = vadd.f32 0.0, %v1508
    %v1510 = vpop.f32.mrb[0].mxu0
    %v1511 = vpop.f32.mrb[0].mxu0
    %v1512 = vadd.f32 0.0, %v1511
    %v1513 = vpop.f32.mrb[0].mxu0
    %1514 = vdwg.mxu0
    %v1515 = vmul.f32 %v1509, 0.35355338
    %v1516 = vmul.f32 %v1512, 0.35355338
    %v1517 = vadd.f32 %v1515, %v62
    %v1518 = vadd.f32 %v1516, %v63
    %v1519 = vsel %vm317, %v1517, -inf
    %1520 = vmax.xlane.f32.xlu0 %v1519
    %v1521 = vpop.xlane.xlu0 %1520
    %v1522 = vsel %vm317, %v1518, -inf
    %1523 = vmax.xlane.f32.xlu0 %v1522
    %v1524 = vpop.xlane.xlu0 %1523
    %v1525 = vsub.f32 %v1517, %v1521
    %v1526 = vsub.f32 %v1518, %v1524
    %v1527 = vmul.f32 %v1525, 1.442695
    %v1528 = vpow.pop %v1527
    %v1529 = vmul.f32 %v1526, 1.442695
    %v1530 = vpow.pop %v1529
    %v1532 = vsel %vm317, %v1528, 0
    %v1535 = vsel %vm317, %v1530, 0
    %1537 = vmatprep.subr.mxu0 0.0
    %1538 = vmatpush1.msra.mxu0 %v92
    %1539 = vmatprep.subr.mxu0 0.0
    %1540 = vmatpush1.msra.mxu0 %v93
    %1541 = vmatprep.subr.mxu0 0.0
    %1542 = vmatpush1.msra.mxu0 %v94
    %1543 = vmatprep.subr.mxu0 0.0
    %1544 = vmatpush1.msra.mxu0 %v95
    %1545 = vmatprep.subr.mxu0 0.0
    %1546 = vmatpush1.msra.mxu0 %v96
    %1547 = vmatprep.subr.mxu0 0.0
    %1548 = vmatpush1.msra.mxu0 %v97
    %1549 = vmatprep.subr.mxu0 0.0
    %1550 = vmatpush1.msra.mxu0 %v98
    %1551 = vmatprep.subr.mxu0 0.0
    %1552 = vmatpush1.msra.mxu0 %v99
    %1553 = vmatprep.subr.mxu0 0.0
    %1554 = vmatpush1.msra.mxu0 0.0
    %1555 = vmatprep.subr.mxu0 0.0
    %1556 = vmatpush1.msra.mxu0 0.0
    %1557 = vmatprep.subr.mxu0 0.0
    %1558 = vmatpush1.msra.mxu0 0.0
    %1559 = vmatprep.subr.mxu0 0.0
    %1560 = vmatpush1.msra.mxu0 0.0
    %1561 = vmatprep.subr.mxu0 0.0
    %1562 = vmatpush1.msra.mxu0 0.0
    %1563 = vmatprep.subr.mxu0 0.0
    %1564 = vmatpush1.msra.mxu0 0.0
    %1565 = vmatprep.subr.mxu0 0.0
    %1566 = vmatpush1.msra.mxu0 0.0
    %1567 = vmatprep.subr.mxu0 0.0
    %1568 = vmatpush1.msra.mxu0 0.0
    %1569 = vmatprep.subr.mxu0 0.0
    %1570 = vmatpush1.msra.mxu0 0.0
    %1571 = vmatprep.subr.mxu0 0.0
    %1572 = vmatpush1.msra.mxu0 0.0
    %1573 = vmatprep.subr.mxu0 0.0
    %1574 = vmatpush1.msra.mxu0 0.0
    %1575 = vmatprep.subr.mxu0 0.0
    %1576 = vmatpush1.msra.mxu0 0.0
    %1577 = vmatprep.subr.mxu0 0.0
    %1578 = vmatpush1.msra.mxu0 0.0
    %1579 = vmatprep.subr.mxu0 0.0
    %1580 = vmatpush1.msra.mxu0 0.0
    %1581 = vmatprep.subr.mxu0 0.0
    %1582 = vmatpush1.msra.mxu0 0.0
    %1583 = vmatprep.subr.mxu0 0.0
    %1584 = vmatpush1.msra.mxu0 0.0
    %1585 = vmatprep.subr.mxu0 0.0
    %1586 = vmatpush1.msra.mxu0 0.0
    %1587 = vmatprep.subr.mxu0 0.0
    %1588 = vmatpush1.msra.mxu0 0.0
    %1589 = vmatprep.subr.mxu0 0.0
    %1590 = vmatpush1.msra.mxu0 0.0
    %1591 = vmatprep.subr.mxu0 0.0
    %1592 = vmatpush1.msra.mxu0 0.0
    %1593 = vmatprep.subr.mxu0 0.0
    %1594 = vmatpush1.msra.mxu0 0.0
    %1595 = vmatprep.subr.mxu0 0.0
    %1596 = vmatpush1.msra.mxu0 0.0
    %1597 = vmatprep.subr.mxu0 0.0
    %1598 = vmatpush1.msra.mxu0 0.0
    %1599 = vmatprep.subr.mxu0 0.0
    %1600 = vmatpush1.msra.mxu0 0.0
    %1601 = vmatprep.mubr.f32.mxu0 0.0
    %1602 = vmatmul.mubr.f32.gmra.mrb[0].mxu0 %v1532
    %v1603 = vpop.f32.mrb[0].mxu0
    %v1604 = vadd.f32 0.0, %v1603
    %v1605 = vpop.f32.mrb[0].mxu0
    %1606 = vmatprep.mubr.f32.mxu0 0.0
    %1607 = vmatmul.mubr.f32.gmra.mrb[0].mxu0 %v1535
    %v1608 = vpop.f32.mrb[0].mxu0
    %v1609 = vadd.f32 0.0, %v1608
    %v1610 = vpop.f32.mrb[0].mxu0
    %1611 = vdwg.mxu0
    %v1612 = vrcp.pop %v1604
    %v1613 = vrcp.pop %v1609
    %v1614 = vmul.f32 %v1528, %v1612
    %v1615 = vmul.f32 %v1530, %v1613
    %v1616 = vpack.c.bf16 %v1615, %v1614
    %1621 = vrot.lane.b32.xlu0 %v1442, 64
    %v1622 = vpop.permute.xlu0 %1621
    %1623 = vrot.lane.b32.xlu0 %v1443, 64
    %v1624 = vpop.permute.xlu0 %1623
    %1625 = vrot.lane.b32.xlu0 %v1444, 64
    %v1626 = vpop.permute.xlu0 %1625
    %1627 = vrot.lane.b32.xlu0 %v1445, 64
    %v1628 = vpop.permute.xlu0 %1627
    %v1634 = vsel %vm317, %v1616, 0
    %1636 = vmatprep.subr.bf16.mxu0 0
    %1637 = vmatpush1.bf16.msra.mxu0 %v1622
    %1638 = vmatprep.subr.bf16.mxu0 0
    %1639 = vmatpush1.bf16.msra.mxu0 %v1624
    %1640 = vmatprep.subr.bf16.mxu0 0
    %1641 = vmatpush1.bf16.msra.mxu0 %v1626
    %1642 = vmatprep.subr.bf16.mxu0 0
    %1643 = vmatpush1.bf16.msra.mxu0 %v1628
    %1644 = vmatprep.subr.bf16.mxu0 0
    %1645 = vmatpush1.bf16.msra.mxu0 0
    %1646 = vmatprep.subr.bf16.mxu0 0
    %1647 = vmatpush1.bf16.msra.mxu0 0
    %1648 = vmatprep.subr.bf16.mxu0 0
    %1649 = vmatpush1.bf16.msra.mxu0 0
    %1650 = vmatprep.subr.bf16.mxu0 0
    %1651 = vmatpush1.bf16.msra.mxu0 0
    %1652 = vmatprep.subr.bf16.mxu0 0
    %1653 = vmatpush1.bf16.msra.mxu0 0
    %1654 = vmatprep.subr.bf16.mxu0 0
    %1655 = vmatpush1.bf16.msra.mxu0 0
    %1656 = vmatprep.subr.bf16.mxu0 0
    %1657 = vmatpush1.bf16.msra.mxu0 0
    %1658 = vmatprep.subr.bf16.mxu0 0
    %1659 = vmatpush1.bf16.msra.mxu0 0
    %1660 = vmatprep.subr.bf16.mxu0 0
    %1661 = vmatpush1.bf16.msra.mxu0 0
    %1662 = vmatprep.subr.bf16.mxu0 0
    %1663 = vmatpush1.bf16.msra.mxu0 0
    %1664 = vmatprep.subr.bf16.mxu0 0
    %1665 = vmatpush1.bf16.msra.mxu0 0
    %1666 = vmatprep.subr.bf16.mxu0 0
    %1667 = vmatpush1.bf16.msra.mxu0 0
    %1668 = vmatprep.mubr.bf16.mxu0 0
    %1669 = vmatmul.mubr.bf16.gmra.mrb[0].mxu0 %v1634
    %v1670 = vpop.f32.mrb[0].mxu0
    %v1671 = vadd.f32 0.0, %v1670
    %v1672 = vpop.f32.mrb[0].mxu0
    %v1673 = vpop.f32.mrb[0].mxu0
    %v1674 = vadd.f32 0.0, %v1673
    %v1675 = vpop.f32.mrb[0].mxu0
    %1676 = vdwg.mxu0
    %v1677 = vpack.c.bf16 %v1674, %v1671
    %v1678 = vpack.c.bf16 %v1362, %v1361
    %v1679 = vpack.c.bf16 %v1364, %v1363
    %v1680 = vlaneseq
    %v1681 = vshrl.u32 %v1680, 7
    %v1682 = vsub.s32 0, %v1681
    %v1683 = vrot.slane %v1365, %v1682
    %v1685 = vsel %vm114, %v1677, 0
    %1687 = vmatprep.subr.bf16.mxu0 0
    %1688 = vmatpush1.bf16.msra.mxu0 %v1678
    %1689 = vmatprep.subr.bf16.mxu0 0
    %1690 = vmatpush1.bf16.msra.mxu0 %v1679
    %1691 = vmatprep.subr.bf16.mxu0 0
    %1692 = vmatpush1.bf16.msra.mxu0 0
    %1693 = vmatprep.subr.bf16.mxu0 0
    %1694 = vmatpush1.bf16.msra.mxu0 0
    %1695 = vmatprep.subr.bf16.mxu0 0
    %1696 = vmatpush1.bf16.msra.mxu0 0
    %1697 = vmatprep.subr.bf16.mxu0 0
    %1698 = vmatpush1.bf16.msra.mxu0 0
    %1699 = vmatprep.subr.bf16.mxu0 0
    %1700 = vmatpush1.bf16.msra.mxu0 0
    %1701 = vmatprep.subr.bf16.mxu0 0
    %1702 = vmatpush1.bf16.msra.mxu0 0
    %1703 = vmatprep.subr.bf16.mxu0 0
    %1704 = vmatpush1.bf16.msra.mxu0 0
    %1705 = vmatprep.subr.bf16.mxu0 0
    %1706 = vmatpush1.bf16.msra.mxu0 0
    %1707 = vmatprep.subr.bf16.mxu0 0
    %1708 = vmatpush1.bf16.msra.mxu0 0
    %1709 = vmatprep.subr.bf16.mxu0 0
    %1710 = vmatpush1.bf16.msra.mxu0 0
    %1711 = vmatprep.subr.bf16.mxu0 0
    %1712 = vmatpush1.bf16.msra.mxu0 0
    %1713 = vmatprep.subr.bf16.mxu0 0
    %1714 = vmatpush1.bf16.msra.mxu0 0
    %1715 = vmatprep.subr.bf16.mxu0 0
    %1716 = vmatpush1.bf16.msra.mxu0 0
    %1717 = vmatprep.subr.bf16.mxu0 0
    %1718 = vmatpush1.bf16.msra.mxu0 0
    %1719 = vmatprep.mubr.bf16.mxu0 0
    %1720 = vmatmul.mubr.bf16.gmra.mrb[0].mxu0 %v1685
    %v1721 = vpop.f32.mrb[0].mxu0
    %v1722 = vadd.f32 %v1683, %v1721
    %v1723 = vpop.f32.mrb[0].mxu0
    %v1724 = vpop.f32.mrb[0].mxu0
    %v1725 = vadd.f32 %v1683, %v1724
    %v1726 = vpop.f32.mrb[0].mxu0
    %1727 = vdwg.mxu0
    %v1728 = vld [vmem:[#allocation4 + $0x210] sm:$0x1]
    %v1729 = vld [vmem:[#allocation4 + $0x218] sm:$0x1]
    %v1730 = vadd.f32 %v1303, %v1722
    %v1731 = vadd.f32 %v1304, %v1725
    %v1732 = vsel %vm114, %v1730, 0.0
    %1733 = vadd.xlane.f32.xlu0 %v1732
    %v1734 = vpop.xlane.xlu0 %1733
    %v1735 = vsel %vm114, %v1731, 0.0
    %1736 = vadd.xlane.f32.xlu0 %v1735
    %v1737 = vpop.xlane.xlu0 %1736
    %v1738 = vmul.f32 %v1734, %v537
    %v1739 = vmul.f32 %v1737, %v537
    %v1740 = vsub.f32 %v1730, %v1738
    %v1741 = vsub.f32 %v1731, %v1739
    %v1742 = vmul.f32 %v1740, %v1740
    %v1743 = vmul.f32 %v1741, %v1741
    %v1744 = vsel %vm114, %v1742, 0.0
    %1745 = vadd.xlane.f32.xlu0 %v1744
    %v1746 = vpop.xlane.xlu0 %1745
    %v1747 = vsel %vm114, %v1743, 0.0
    %1748 = vadd.xlane.f32.xlu0 %v1747
    %v1749 = vpop.xlane.xlu0 %1748
    %v1750 = vmul.f32 %v1746, %v537
    %v1751 = vmul.f32 %v1749, %v537
    %v1752 = vadd.f32 %v1750, 1e-05
    %v1753 = vadd.f32 %v1751, 1e-05
    %v1754 = vrsqrt.pop %v1752
    %v1755 = vrsqrt.pop %v1753
    %v1756 = vmul.f32 %v1740, %v1754
    %v1757 = vmul.f32 %v1741, %v1755
    %v1758 = vlaneseq
    %v1759 = vshrl.u32 %v1758, 7
    %v1760 = vsub.s32 0, %v1759
    %v1761 = vrot.slane %v1728, %v1760
    %v1762 = vmul.f32 %v1756, %v1761
    %v1763 = vmul.f32 %v1757, %v1761
    %v1764 = vlaneseq
    %v1765 = vshrl.u32 %v1764, 7
    %v1766 = vsub.s32 0, %v1765
    %v1767 = vrot.slane %v1729, %v1766
    %v1768 = vadd.f32 %v1762, %v1767
    %v1769 = vadd.f32 %v1763, %v1767
    %v1770 = vld [vmem:[#allocation4 + $0x220] sm:$0xff]
    %v1771 = vld [vmem:[#allocation4 + $0x228] sm:$0xff]
    %v1772 = vld [vmem:[#allocation4 + $0x230] sm:$0xff]
    %v1773 = vld [vmem:[#allocation4 + $0x238] sm:$0xff]
    %v1774 = vpack.c.bf16 %v1771, %v1770
    %v1775 = vpack.c.bf16 %v1773, %v1772
    %v1776 = vld [vmem:[#allocation4 + $0x240] sm:$0x1]
    %v1777 = vlaneseq
    %v1778 = vshrl.u32 %v1777, 7
    %v1779 = vsub.s32 0, %v1778
    %v1780 = vrot.slane %v1776, %v1779
    %1781 = vmatprep.subr.bf16.mxu0 0
    %1782 = vmatpush1.bf16.msra.mxu0 %v1774
    %1783 = vmatprep.subr.bf16.mxu0 0
    %1784 = vmatpush1.bf16.msra.mxu0 %v1775
    %1785 = vmatprep.subr.bf16.mxu0 0
    %1786 = vmatpush1.bf16.msra.mxu0 0
    %1787 = vmatprep.subr.bf16.mxu0 0
    %1788 = vmatpush1.bf16.msra.mxu0 0
    %1789 = vmatprep.subr.bf16.mxu0 0
    %1790 = vmatpush1.bf16.msra.mxu0 0
    %1791 = vmatprep.subr.bf16.mxu0 0
    %1792 = vmatpush1.bf16.msra.mxu0 0
    %1793 = vmatprep.subr.bf16.mxu0 0
    %1794 = vmatpush1.bf16.msra.mxu0 0
    %1795 = vmatprep.subr.bf16.mxu0 0
    %1796 = vmatpush1.bf16.msra.mxu0 0
    %1797 = vmatprep.subr.bf16.mxu0 0
    %1798 = vmatpush1.bf16.msra.mxu0 0
    %1799 = vmatprep.subr.bf16.mxu0 0
    %1800 = vmatpush1.bf16.msra.mxu0 0
    %1801 = vmatprep.subr.bf16.mxu0 0
    %1802 = vmatpush1.bf16.msra.mxu0 0
    %1803 = vmatprep.subr.bf16.mxu0 0
    %1804 = vmatpush1.bf16.msra.mxu0 0
    %1805 = vmatprep.subr.bf16.mxu0 0
    %1806 = vmatpush1.bf16.msra.mxu0 0
    %1807 = vmatprep.subr.bf16.mxu0 0
    %1808 = vmatpush1.bf16.msra.mxu0 0
    %1809 = vmatprep.subr.bf16.mxu0 0
    %1810 = vmatpush1.bf16.msra.mxu0 0
    %1811 = vmatprep.subr.bf16.mxu0 0
    %1812 = vmatpush1.bf16.msra.mxu0 0
    %1813 = vmatprep.mubr.bf16.mxu0 0
    %1814 = vmatmul.mubr.bf16.gmra.mrb[0].mxu0 %v1318
    %v1815 = vpop.f32.mrb[0].mxu0
    %v1816 = vadd.f32 %v1780, %v1815
    %v1817 = vpop.f32.mrb[0].mxu0
    %v1818 = vpop.f32.mrb[0].mxu0
    %v1819 = vadd.f32 %v1780, %v1818
    %v1820 = vpop.f32.mrb[0].mxu0
    %1821 = vdwg.mxu0
    %v1822 = vld [vmem:[#allocation4 + $0x248] sm:$0xff]
    %v1823 = vld [vmem:[#allocation4 + $0x250] sm:$0xff]
    %v1824 = vld [vmem:[#allocation4 + $0x258] sm:$0xff]
    %v1825 = vld [vmem:[#allocation4 + $0x260] sm:$0xff]
    %v1826 = vpack.c.bf16 %v1302, %v1301
    %v1827 = vpack.c.bf16 %v1823, %v1822
    %v1828 = vpack.c.bf16 %v1825, %v1824
    %v1829 = vld [vmem:[#allocation4 + $0x268] sm:$0x1]
    %v1830 = vlaneseq
    %v1831 = vshrl.u32 %v1830, 7
    %v1832 = vsub.s32 0, %v1831
    %v1833 = vrot.slane %v1829, %v1832
    %v1835 = vsel %vm114, %v1826, 0
    %1837 = vmatprep.subr.bf16.mxu0 0
    %1838 = vmatpush1.bf16.msra.mxu0 %v1827
    %1839 = vmatprep.subr.bf16.mxu0 0
    %1840 = vmatpush1.bf16.msra.mxu0 %v1828
    %1841 = vmatprep.subr.bf16.mxu0 0
    %1842 = vmatpush1.bf16.msra.mxu0 0
    %1843 = vmatprep.subr.bf16.mxu0 0
    %1844 = vmatpush1.bf16.msra.mxu0 0
    %1845 = vmatprep.subr.bf16.mxu0 0
    %1846 = vmatpush1.bf16.msra.mxu0 0
    %1847 = vmatprep.subr.bf16.mxu0 0
    %1848 = vmatpush1.bf16.msra.mxu0 0
    %1849 = vmatprep.subr.bf16.mxu0 0
    %1850 = vmatpush1.bf16.msra.mxu0 0
    %1851 = vmatprep.subr.bf16.mxu0 0
    %1852 = vmatpush1.bf16.msra.mxu0 0
    %1853 = vmatprep.subr.bf16.mxu0 0
    %1854 = vmatpush1.bf16.msra.mxu0 0
    %1855 = vmatprep.subr.bf16.mxu0 0
    %1856 = vmatpush1.bf16.msra.mxu0 0
    %1857 = vmatprep.subr.bf16.mxu0 0
    %1858 = vmatpush1.bf16.msra.mxu0 0
    %1859 = vmatprep.subr.bf16.mxu0 0
    %1860 = vmatpush1.bf16.msra.mxu0 0
    %1861 = vmatprep.subr.bf16.mxu0 0
    %1862 = vmatpush1.bf16.msra.mxu0 0
    %1863 = vmatprep.subr.bf16.mxu0 0
    %1864 = vmatpush1.bf16.msra.mxu0 0
    %1865 = vmatprep.subr.bf16.mxu0 0
    %1866 = vmatpush1.bf16.msra.mxu0 0
    %1867 = vmatprep.subr.bf16.mxu0 0
    %1868 = vmatpush1.bf16.msra.mxu0 0
    %1869 = vmatprep.mubr.bf16.mxu0 0
    %1870 = vmatmul.mubr.bf16.gmra.mrb[0].mxu0 %v1835
    %v1871 = vpop.f32.mrb[0].mxu0
    %v1872 = vadd.f32 %v1833, %v1871
    %v1873 = vpop.f32.mrb[0].mxu0
    %v1874 = vpop.f32.mrb[0].mxu0
    %v1875 = vadd.f32 %v1833, %v1874
    %v1876 = vpop.f32.mrb[0].mxu0
    %1877 = vdwg.mxu0
    %v1878 = vld [vmem:[#allocation4 + $0x270] sm:$0xff]
    %v1879 = vld [vmem:[#allocation4 + $0x278] sm:$0xff]
    %v1880 = vld [vmem:[#allocation4 + $0x280] sm:$0xff]
    %v1881 = vld [vmem:[#allocation4 + $0x288] sm:$0xff]
    %v1882 = vld [vmem:[#allocation4 + $0x290] sm:$0x1]
    %v1883 = vmul.f32 %v1872, %v68
    %v1884 = vmul.f32 %v1875, %v69
    %v1885 = vmul.f32 %v1872, %v70
    %v1886 = vmul.f32 %v1875, %v71
    %v1887 = vmul.f32 %v1872, %v72
    %v1888 = vmul.f32 %v1875, %v73
    %v1889 = vmul.f32 %v1872, %v74
    %v1890 = vmul.f32 %v1875, %v75
    %v1891 = vpack.c.bf16 %v1884, %v1883
    %v1892 = vpack.c.bf16 %v1886, %v1885
    %v1893 = vpack.c.bf16 %v1888, %v1887
    %v1894 = vpack.c.bf16 %v1890, %v1889
    %v1895 = vmul.f32 %v1872, %v173
    %v1896 = vmul.f32 %v1875, %v175
    %v1897 = vmul.f32 %v1872, %v177
    %v1898 = vmul.f32 %v1875, %v179
    %v1899 = vmul.f32 %v1872, %v181
    %v1900 = vmul.f32 %v1875, %v183
    %v1901 = vmul.f32 %v1872, %v185
    %v1902 = vmul.f32 %v1875, %v187
    %v1903 = vpack.c.bf16 %v1896, %v1895
    %v1904 = vpack.c.bf16 %v1898, %v1897
    %v1905 = vpack.c.bf16 %v1900, %v1899
    %v1906 = vpack.c.bf16 %v1902, %v1901
    %v1907 = vpack.c.bf16 %v1819, %v1816
    %v1909 = vsel %vm114, %v1907, 0
    %v1912 = vsel %vm114, %v1891, 0
    %v1915 = vsel %vm114, %v1892, 0
    %v1918 = vsel %vm114, %v1893, 0
    %v1921 = vsel %vm114, %v1894, 0
    %1923 = vmatprep.subr.bf16.mxu0 0
    %1924 = vmatpush1.bf16.xpose.msra.mxu0 %v1912
    %1925 = vmatprep.subr.bf16.mxu0 0
    %1926 = vmatpush1.bf16.xpose.msra.mxu0 %v1915
    %1927 = vmatprep.subr.bf16.mxu0 0
    %1928 = vmatpush1.bf16.xpose.msra.mxu0 %v1918
    %1929 = vmatprep.subr.bf16.mxu0 0
    %1930 = vmatpush1.bf16.xpose.msra.mxu0 %v1921
    %1931 = vmatprep.subr.bf16.mxu0 0
    %1932 = vmatpush1.bf16.xpose.msra.mxu0 0
    %1933 = vmatprep.subr.bf16.mxu0 0
    %1934 = vmatpush1.bf16.xpose.msra.mxu0 0
    %1935 = vmatprep.subr.bf16.mxu0 0
    %1936 = vmatpush1.bf16.xpose.msra.mxu0 0
    %1937 = vmatprep.subr.bf16.mxu0 0
    %1938 = vmatpush1.bf16.xpose.msra.mxu0 0
    %1939 = vmatprep.subr.bf16.mxu0 0
    %1940 = vmatpush1.bf16.xpose.msra.mxu0 0
    %1941 = vmatprep.subr.bf16.mxu0 0
    %1942 = vmatpush1.bf16.xpose.msra.mxu0 0
    %1943 = vmatprep.subr.bf16.mxu0 0
    %1944 = vmatpush1.bf16.xpose.msra.mxu0 0
    %1945 = vmatprep.subr.bf16.mxu0 0
    %1946 = vmatpush1.bf16.xpose.msra.mxu0 0
    %1947 = vmatprep.subr.bf16.mxu0 0
    %1948 = vmatpush1.bf16.xpose.msra.mxu0 0
    %1949 = vmatprep.subr.bf16.mxu0 0
    %1950 = vmatpush1.bf16.xpose.msra.mxu0 0
    %1951 = vmatprep.subr.bf16.mxu0 0
    %1952 = vmatpush1.bf16.xpose.msra.mxu0 0
    %1953 = vmatprep.subr.bf16.mxu0 0
    %1954 = vmatpush1.bf16.xpose.msra.mxu0 0
    %1955 = vmatprep.mubr.bf16.mxu0 0
    %1956 = vmatmul.mubr.bf16.gmra.mrb[0].mxu0 %v1909
    %v1957 = vpop.f32.mrb[0].mxu0
    %v1958 = vadd.f32 0.0, %v1957
    %v1959 = vpop.f32.mrb[0].mxu0
    %v1960 = vpop.f32.mrb[0].mxu0
    %v1961 = vadd.f32 0.0, %v1960
    %v1962 = vpop.f32.mrb[0].mxu0
    %1963 = vdwg.mxu0
    %v1964 = vmul.f32 %v1958, 0.35355338
    %v1965 = vmul.f32 %v1961, 0.35355338
    %v1966 = vadd.f32 %v1964, %v66
    %v1967 = vadd.f32 %v1965, %v67
    %v1968 = vsel %vm317, %v1966, -inf
    %1969 = vmax.xlane.f32.xlu0 %v1968
    %v1970 = vpop.xlane.xlu0 %1969
    %v1971 = vsel %vm317, %v1967, -inf
    %1972 = vmax.xlane.f32.xlu0 %v1971
    %v1973 = vpop.xlane.xlu0 %1972
    %v1974 = vsub.f32 %v1966, %v1970
    %v1975 = vsub.f32 %v1967, %v1973
    %v1976 = vmul.f32 %v1974, 1.442695
    %v1977 = vpow.pop %v1976
    %v1978 = vmul.f32 %v1975, 1.442695
    %v1979 = vpow.pop %v1978
    %v1981 = vsel %vm317, %v1977, 0
    %v1984 = vsel %vm317, %v1979, 0
    %1986 = vmatprep.subr.mxu0 0.0
    %1987 = vmatpush1.msra.mxu0 %v76
    %1988 = vmatprep.subr.mxu0 0.0
    %1989 = vmatpush1.msra.mxu0 %v77
    %1990 = vmatprep.subr.mxu0 0.0
    %1991 = vmatpush1.msra.mxu0 %v78
    %1992 = vmatprep.subr.mxu0 0.0
    %1993 = vmatpush1.msra.mxu0 %v79
    %1994 = vmatprep.subr.mxu0 0.0
    %1995 = vmatpush1.msra.mxu0 %v80
    %1996 = vmatprep.subr.mxu0 0.0
    %1997 = vmatpush1.msra.mxu0 %v81
    %1998 = vmatprep.subr.mxu0 0.0
    %1999 = vmatpush1.msra.mxu0 %v82
    %2000 = vmatprep.subr.mxu0 0.0
    %2001 = vmatpush1.msra.mxu0 %v83
    %2002 = vmatprep.subr.mxu0 0.0
    %2003 = vmatpush1.msra.mxu0 0.0
    %2004 = vmatprep.subr.mxu0 0.0
    %2005 = vmatpush1.msra.mxu0 0.0
    %2006 = vmatprep.subr.mxu0 0.0
    %2007 = vmatpush1.msra.mxu0 0.0
    %2008 = vmatprep.subr.mxu0 0.0
    %2009 = vmatpush1.msra.mxu0 0.0
    %2010 = vmatprep.subr.mxu0 0.0
    %2011 = vmatpush1.msra.mxu0 0.0
    %2012 = vmatprep.subr.mxu0 0.0
    %2013 = vmatpush1.msra.mxu0 0.0
    %2014 = vmatprep.subr.mxu0 0.0
    %2015 = vmatpush1.msra.mxu0 0.0
    %2016 = vmatprep.subr.mxu0 0.0
    %2017 = vmatpush1.msra.mxu0 0.0
    %2018 = vmatprep.subr.mxu0 0.0
    %2019 = vmatpush1.msra.mxu0 0.0
    %2020 = vmatprep.subr.mxu0 0.0
    %2021 = vmatpush1.msra.mxu0 0.0
    %2022 = vmatprep.subr.mxu0 0.0
    %2023 = vmatpush1.msra.mxu0 0.0
    %2024 = vmatprep.subr.mxu0 0.0
    %2025 = vmatpush1.msra.mxu0 0.0
    %2026 = vmatprep.subr.mxu0 0.0
    %2027 = vmatpush1.msra.mxu0 0.0
    %2028 = vmatprep.subr.mxu0 0.0
    %2029 = vmatpush1.msra.mxu0 0.0
    %2030 = vmatprep.subr.mxu0 0.0
    %2031 = vmatpush1.msra.mxu0 0.0
    %2032 = vmatprep.subr.mxu0 0.0
    %2033 = vmatpush1.msra.mxu0 0.0
    %2034 = vmatprep.subr.mxu0 0.0
    %2035 = vmatpush1.msra.mxu0 0.0
    %2036 = vmatprep.subr.mxu0 0.0
    %2037 = vmatpush1.msra.mxu0 0.0
    %2038 = vmatprep.subr.mxu0 0.0
    %2039 = vmatpush1.msra.mxu0 0.0
    %2040 = vmatprep.subr.mxu0 0.0
    %2041 = vmatpush1.msra.mxu0 0.0
    %2042 = vmatprep.subr.mxu0 0.0
    %2043 = vmatpush1.msra.mxu0 0.0
    %2044 = vmatprep.subr.mxu0 0.0
    %2045 = vmatpush1.msra.mxu0 0.0
    %2046 = vmatprep.subr.mxu0 0.0
    %2047 = vmatpush1.msra.mxu0 0.0
    %2048 = vmatprep.subr.mxu0 0.0
    %2049 = vmatpush1.msra.mxu0 0.0
    %2050 = vmatprep.mubr.f32.mxu0 0.0
    %2051 = vmatmul.mubr.f32.gmra.mrb[0].mxu0 %v1981
    %v2052 = vpop.f32.mrb[0].mxu0
    %v2053 = vadd.f32 0.0, %v2052
    %v2054 = vpop.f32.mrb[0].mxu0
    %2055 = vmatprep.mubr.f32.mxu0 0.0
    %2056 = vmatmul.mubr.f32.gmra.mrb[0].mxu0 %v1984
    %v2057 = vpop.f32.mrb[0].mxu0
    %v2058 = vadd.f32 0.0, %v2057
    %v2059 = vpop.f32.mrb[0].mxu0
    %2060 = vdwg.mxu0
    %v2061 = vrcp.pop %v2053
    %v2062 = vrcp.pop %v2058
    %v2063 = vmul.f32 %v1977, %v2061
    %v2064 = vmul.f32 %v1979, %v2062
    %v2065 = vpack.c.bf16 %v2064, %v2063
    %2070 = vrot.lane.b32.xlu0 %v1903, 96
    %v2071 = vpop.permute.xlu0 %2070
    %2072 = vrot.lane.b32.xlu0 %v1904, 96
    %v2073 = vpop.permute.xlu0 %2072
    %2074 = vrot.lane.b32.xlu0 %v1905, 96
    %v2075 = vpop.permute.xlu0 %2074
    %2076 = vrot.lane.b32.xlu0 %v1906, 96
    %v2077 = vpop.permute.xlu0 %2076
    %v2083 = vsel %vm317, %v2065, 0
    %2085 = vmatprep.subr.bf16.mxu0 0
    %2086 = vmatpush1.bf16.msra.mxu0 %v2071
    %2087 = vmatprep.subr.bf16.mxu0 0
    %2088 = vmatpush1.bf16.msra.mxu0 %v2073
    %2089 = vmatprep.subr.bf16.mxu0 0
    %2090 = vmatpush1.bf16.msra.mxu0 %v2075
    %2091 = vmatprep.subr.bf16.mxu0 0
    %2092 = vmatpush1.bf16.msra.mxu0 %v2077
    %2093 = vmatprep.subr.bf16.mxu0 0
    %2094 = vmatpush1.bf16.msra.mxu0 0
    %2095 = vmatprep.subr.bf16.mxu0 0
    %2096 = vmatpush1.bf16.msra.mxu0 0
    %2097 = vmatprep.subr.bf16.mxu0 0
    %2098 = vmatpush1.bf16.msra.mxu0 0
    %2099 = vmatprep.subr.bf16.mxu0 0
    %2100 = vmatpush1.bf16.msra.mxu0 0
    %2101 = vmatprep.subr.bf16.mxu0 0
    %2102 = vmatpush1.bf16.msra.mxu0 0
    %2103 = vmatprep.subr.bf16.mxu0 0
    %2104 = vmatpush1.bf16.msra.mxu0 0
    %2105 = vmatprep.subr.bf16.mxu0 0
    %2106 = vmatpush1.bf16.msra.mxu0 0
    %2107 = vmatprep.subr.bf16.mxu0 0
    %2108 = vmatpush1.bf16.msra.mxu0 0
    %2109 = vmatprep.subr.bf16.mxu0 0
    %2110 = vmatpush1.bf16.msra.mxu0 0
    %2111 = vmatprep.subr.bf16.mxu0 0
    %2112 = vmatpush1.bf16.msra.mxu0 0
    %2113 = vmatprep.subr.bf16.mxu0 0
    %2114 = vmatpush1.bf16.msra.mxu0 0
    %2115 = vmatprep.subr.bf16.mxu0 0
    %2116 = vmatpush1.bf16.msra.mxu0 0
    %2117 = vmatprep.mubr.bf16.mxu0 0
    %2118 = vmatmul.mubr.bf16.gmra.mrb[0].mxu0 %v2083
    %v2119 = vpop.f32.mrb[0].mxu0
    %v2120 = vadd.f32 0.0, %v2119
    %v2121 = vpop.f32.mrb[0].mxu0
    %v2122 = vpop.f32.mrb[0].mxu0
    %v2123 = vadd.f32 0.0, %v2122
    %v2124 = vpop.f32.mrb[0].mxu0
    %2125 = vdwg.mxu0
    %v2126 = vpack.c.bf16 %v2123, %v2120
    %v2127 = vpack.c.bf16 %v1879, %v1878
    %v2128 = vpack.c.bf16 %v1881, %v1880
    %v2129 = vlaneseq
    %v2130 = vshrl.u32 %v2129, 7
    %v2131 = vsub.s32 0, %v2130
    %v2132 = vrot.slane %v1882, %v2131
    %v2134 = vsel %vm114, %v2126, 0
    %2136 = vmatprep.subr.bf16.mxu0 0
    %2137 = vmatpush1.bf16.msra.mxu0 %v2127
    %2138 = vmatprep.subr.bf16.mxu0 0
    %2139 = vmatpush1.bf16.msra.mxu0 %v2128
    %2140 = vmatprep.subr.bf16.mxu0 0
    %2141 = vmatpush1.bf16.msra.mxu0 0
    %2142 = vmatprep.subr.bf16.mxu0 0
    %2143 = vmatpush1.bf16.msra.mxu0 0
    %2144 = vmatprep.subr.bf16.mxu0 0
    %2145 = vmatpush1.bf16.msra.mxu0 0
    %2146 = vmatprep.subr.bf16.mxu0 0
    %2147 = vmatpush1.bf16.msra.mxu0 0
    %2148 = vmatprep.subr.bf16.mxu0 0
    %2149 = vmatpush1.bf16.msra.mxu0 0
    %2150 = vmatprep.subr.bf16.mxu0 0
    %2151 = vmatpush1.bf16.msra.mxu0 0
    %2152 = vmatprep.subr.bf16.mxu0 0
    %2153 = vmatpush1.bf16.msra.mxu0 0
    %2154 = vmatprep.subr.bf16.mxu0 0
    %2155 = vmatpush1.bf16.msra.mxu0 0
    %2156 = vmatprep.subr.bf16.mxu0 0
    %2157 = vmatpush1.bf16.msra.mxu0 0
    %2158 = vmatprep.subr.bf16.mxu0 0
    %2159 = vmatpush1.bf16.msra.mxu0 0
    %2160 = vmatprep.subr.bf16.mxu0 0
    %2161 = vmatpush1.bf16.msra.mxu0 0
    %2162 = vmatprep.subr.bf16.mxu0 0
    %2163 = vmatpush1.bf16.msra.mxu0 0
    %2164 = vmatprep.subr.bf16.mxu0 0
    %2165 = vmatpush1.bf16.msra.mxu0 0
    %2166 = vmatprep.subr.bf16.mxu0 0
    %2167 = vmatpush1.bf16.msra.mxu0 0
    %2168 = vmatprep.mubr.bf16.mxu0 0
    %2169 = vmatmul.mubr.bf16.gmra.mrb[0].mxu0 %v2134
    %v2170 = vpop.f32.mrb[0].mxu0
    %v2171 = vadd.f32 %v2132, %v2170
    %v2172 = vpop.f32.mrb[0].mxu0
    %v2173 = vpop.f32.mrb[0].mxu0
    %v2174 = vadd.f32 %v2132, %v2173
    %v2175 = vpop.f32.mrb[0].mxu0
    %2176 = vdwg.mxu0
    %v2177 = vld [vmem:[#allocation4 + $0x298] sm:$0x1]
    %v2178 = vld [vmem:[#allocation4 + $0x2a0] sm:$0x1]
    %v2179 = vadd.f32 %v1768, %v2171
    %v2180 = vadd.f32 %v1769, %v2174
    %v2181 = vsel %vm114, %v2179, 0.0
    %2182 = vadd.xlane.f32.xlu0 %v2181
    %v2183 = vpop.xlane.xlu0 %2182
    %v2184 = vsel %vm114, %v2180, 0.0
    %2185 = vadd.xlane.f32.xlu0 %v2184
    %v2186 = vpop.xlane.xlu0 %2185
    %v2187 = vmul.f32 %v2183, %v537
    %v2188 = vmul.f32 %v2186, %v537
    %v2189 = vsub.f32 %v2179, %v2187
    %v2190 = vsub.f32 %v2180, %v2188
    %v2191 = vmul.f32 %v2189, %v2189
    %v2192 = vmul.f32 %v2190, %v2190
    %v2193 = vsel %vm114, %v2191, 0.0
    %2194 = vadd.xlane.f32.xlu0 %v2193
    %v2195 = vpop.xlane.xlu0 %2194
    %v2196 = vsel %vm114, %v2192, 0.0
    %2197 = vadd.xlane.f32.xlu0 %v2196
    %v2198 = vpop.xlane.xlu0 %2197
    %v2199 = vmul.f32 %v2195, %v537
    %v2200 = vmul.f32 %v2198, %v537
    %v2201 = vadd.f32 %v2199, 1e-05
    %v2202 = vadd.f32 %v2200, 1e-05
    %v2203 = vrsqrt.pop %v2201
    %v2204 = vrsqrt.pop %v2202
    %v2205 = vmul.f32 %v2189, %v2203
    %v2206 = vmul.f32 %v2190, %v2204
    %v2207 = vlaneseq
    %v2208 = vshrl.u32 %v2207, 7
    %v2209 = vsub.s32 0, %v2208
    %v2210 = vrot.slane %v2177, %v2209
    %v2211 = vmul.f32 %v2205, %v2210
    %v2212 = vmul.f32 %v2206, %v2210
    %v2213 = vlaneseq
    %v2214 = vshrl.u32 %v2213, 7
    %v2215 = vsub.s32 0, %v2214
    %v2216 = vrot.slane %v2178, %v2215
    %v2217 = vadd.f32 %v2211, %v2216
    %v2218 = vadd.f32 %v2212, %v2216
    %v2219 = vld [vmem:[#allocation4 + $0x2a8] sm:$0xff]
    %v2220 = vld [vmem:[#allocation4 + $0x2b0] sm:$0xff]
    %v2221 = vld [vmem:[#allocation4 + $0x2b8] sm:$0xff]
    %v2222 = vld [vmem:[#allocation4 + $0x2c0] sm:$0xff]
    %v2223 = vld [vmem:[#allocation4 + $0x2c8] sm:$0x1]
    %v2224 = vld [vmem:[#allocation4 + $0x2d0] sm:$0xff]
    %v2225 = vld [vmem:[#allocation4 + $0x2d8] sm:$0xff]
    %v2226 = vld [vmem:[#allocation4 + $0x2e0] sm:$0xff]
    %v2227 = vld [vmem:[#allocation4 + $0x2e8] sm:$0xff]
    %v2228 = vld [vmem:[#allocation4 + $0x2f0] sm:$0xff]
    %v2229 = vld [vmem:[#allocation4 + $0x2f8] sm:$0xff]
    %v2230 = vld [vmem:[#allocation4 + $0x300] sm:$0xff]
    %v2231 = vld [vmem:[#allocation4 + $0x308] sm:$0xff]
    %v2232 = vld [vmem:[#allocation4 + $0x310] sm:$0x1]
    %v2233 = vpack.c.bf16 %v2218, %v2217
    %v2234 = vpack.c.bf16 %v2220, %v2219
    %v2235 = vpack.c.bf16 %v2222, %v2221
    %v2236 = vlaneseq
    %v2237 = vshrl.u32 %v2236, 7
    %v2238 = vsub.s32 0, %v2237
    %v2239 = vrot.slane %v2223, %v2238
    %v2241 = vsel %vm114, %v2233, 0
    %2243 = vmatprep.subr.bf16.mxu0 0
    %2244 = vmatpush1.bf16.msra.mxu0 %v2234
    %2245 = vmatprep.subr.bf16.mxu0 0
    %2246 = vmatpush1.bf16.msra.mxu0 %v2235
    %2247 = vmatprep.subr.bf16.mxu0 0
    %2248 = vmatpush1.bf16.msra.mxu0 0
    %2249 = vmatprep.subr.bf16.mxu0 0
    %2250 = vmatpush1.bf16.msra.mxu0 0
    %2251 = vmatprep.subr.bf16.mxu0 0
    %2252 = vmatpush1.bf16.msra.mxu0 0
    %2253 = vmatprep.subr.bf16.mxu0 0
    %2254 = vmatpush1.bf16.msra.mxu0 0
    %2255 = vmatprep.subr.bf16.mxu0 0
    %2256 = vmatpush1.bf16.msra.mxu0 0
    %2257 = vmatprep.subr.bf16.mxu0 0
    %2258 = vmatpush1.bf16.msra.mxu0 0
    %2259 = vmatprep.subr.bf16.mxu0 0
    %2260 = vmatpush1.bf16.msra.mxu0 0
    %2261 = vmatprep.subr.bf16.mxu0 0
    %2262 = vmatpush1.bf16.msra.mxu0 0
    %2263 = vmatprep.subr.bf16.mxu0 0
    %2264 = vmatpush1.bf16.msra.mxu0 0
    %2265 = vmatprep.subr.bf16.mxu0 0
    %2266 = vmatpush1.bf16.msra.mxu0 0
    %2267 = vmatprep.subr.bf16.mxu0 0
    %2268 = vmatpush1.bf16.msra.mxu0 0
    %2269 = vmatprep.subr.bf16.mxu0 0
    %2270 = vmatpush1.bf16.msra.mxu0 0
    %2271 = vmatprep.subr.bf16.mxu0 0
    %2272 = vmatpush1.bf16.msra.mxu0 0
    %2273 = vmatprep.subr.bf16.mxu0 0
    %2274 = vmatpush1.bf16.msra.mxu0 0
    %2275 = vmatprep.mubr.bf16.mxu0 0
    %2276 = vmatmul.mubr.bf16.gmra.mrb[0].mxu0 %v2241
    %v2277 = vpop.f32.mrb[0].mxu0
    %v2278 = vadd.f32 %v2239, %v2277
    %v2279 = vpop.f32.mrb[0].mxu0
    %v2280 = vpop.f32.mrb[0].mxu0
    %v2281 = vadd.f32 %v2239, %v2280
    %v2282 = vpop.f32.mrb[0].mxu0
    %2283 = vdwg.mxu0
    %v2284 = vmax.f32 %v2278, 0.0
    %v2285 = vmax.f32 %v2281, 0.0
    %v2286 = vpack.c.bf16 %v2285, %v2284
    %v2287 = vpack.c.bf16 %v2225, %v2224
    %v2288 = vpack.c.bf16 %v2227, %v2226
    %v2289 = vpack.c.bf16 %v2229, %v2228
    %v2290 = vpack.c.bf16 %v2231, %v2230
    %v2291 = vlaneseq
    %v2292 = vshrl.u32 %v2291, 7
    %v2293 = vsub.s32 0, %v2292
    %v2294 = vrot.slane %v2232, %v2293
    %v2296 = vsel %vm317, %v2286, 0
    %2298 = vmatprep.subr.bf16.mxu0 0
    %2299 = vmatpush1.bf16.msra.mxu0 %v2287
    %2300 = vmatprep.subr.bf16.mxu0 0
    %2301 = vmatpush1.bf16.msra.mxu0 %v2288
    %2302 = vmatprep.subr.bf16.mxu0 0
    %2303 = vmatpush1.bf16.msra.mxu0 %v2289
    %2304 = vmatprep.subr.bf16.mxu0 0
    %2305 = vmatpush1.bf16.msra.mxu0 %v2290
    %2306 = vmatprep.subr.bf16.mxu0 0
    %2307 = vmatpush1.bf16.msra.mxu0 0
    %2308 = vmatprep.subr.bf16.mxu0 0
    %2309 = vmatpush1.bf16.msra.mxu0 0
    %2310 = vmatprep.subr.bf16.mxu0 0
    %2311 = vmatpush1.bf16.msra.mxu0 0
    %2312 = vmatprep.subr.bf16.mxu0 0
    %2313 = vmatpush1.bf16.msra.mxu0 0
    %2314 = vmatprep.subr.bf16.mxu0 0
    %2315 = vmatpush1.bf16.msra.mxu0 0
    %2316 = vmatprep.subr.bf16.mxu0 0
    %2317 = vmatpush1.bf16.msra.mxu0 0
    %2318 = vmatprep.subr.bf16.mxu0 0
    %2319 = vmatpush1.bf16.msra.mxu0 0
    %2320 = vmatprep.subr.bf16.mxu0 0
    %2321 = vmatpush1.bf16.msra.mxu0 0
    %2322 = vmatprep.subr.bf16.mxu0 0
    %2323 = vmatpush1.bf16.msra.mxu0 0
    %2324 = vmatprep.subr.bf16.mxu0 0
    %2325 = vmatpush1.bf16.msra.mxu0 0
    %2326 = vmatprep.subr.bf16.mxu0 0
    %2327 = vmatpush1.bf16.msra.mxu0 0
    %2328 = vmatprep.subr.bf16.mxu0 0
    %2329 = vmatpush1.bf16.msra.mxu0 0
    %2330 = vmatprep.mubr.bf16.mxu0 0
    %2331 = vmatmul.mubr.bf16.gmra.mrb[0].mxu0 %v2296
    %v2332 = vpop.f32.mrb[0].mxu0
    %v2333 = vadd.f32 %v2294, %v2332
    %v2334 = vpop.f32.mrb[0].mxu0
    %v2335 = vpop.f32.mrb[0].mxu0
    %v2336 = vadd.f32 %v2294, %v2335
    %v2337 = vpop.f32.mrb[0].mxu0
    %2338 = vdwg.mxu0
    %v2339 = vld [vmem:[#allocation4 + $0x318] sm:$0x1]
    %v2340 = vld [vmem:[#allocation4 + $0x320] sm:$0x1]
    %v2341 = vadd.f32 %v2217, %v2333
    %v2342 = vadd.f32 %v2218, %v2336
    %v2343 = vsel %vm114, %v2341, 0.0
    %2344 = vadd.xlane.f32.xlu0 %v2343
    %v2345 = vpop.xlane.xlu0 %2344
    %v2346 = vsel %vm114, %v2342, 0.0
    %2347 = vadd.xlane.f32.xlu0 %v2346
    %v2348 = vpop.xlane.xlu0 %2347
    %v2349 = vmul.f32 %v2345, %v537
    %v2350 = vmul.f32 %v2348, %v537
    %v2351 = vsub.f32 %v2341, %v2349
    %v2352 = vsub.f32 %v2342, %v2350
    %v2353 = vmul.f32 %v2351, %v2351
    %v2354 = vmul.f32 %v2352, %v2352
    %v2355 = vsel %vm114, %v2353, 0.0
    %2356 = vadd.xlane.f32.xlu0 %v2355
    %v2357 = vpop.xlane.xlu0 %2356
    %v2358 = vsel %vm114, %v2354, 0.0
    %2359 = vadd.xlane.f32.xlu0 %v2358
    %v2360 = vpop.xlane.xlu0 %2359
    %v2361 = vmul.f32 %v2357, %v537
    %v2362 = vmul.f32 %v2360, %v537
    %v2363 = vadd.f32 %v2361, 1e-05
    %v2364 = vadd.f32 %v2362, 1e-05
    %v2365 = vrsqrt.pop %v2363
    %v2366 = vrsqrt.pop %v2364
    %v2367 = vmul.f32 %v2351, %v2365
    %v2368 = vmul.f32 %v2352, %v2366
    %v2369 = vlaneseq
    %v2370 = vshrl.u32 %v2369, 7
    %v2371 = vsub.s32 0, %v2370
    %v2372 = vrot.slane %v2339, %v2371
    %v2373 = vmul.f32 %v2367, %v2372
    %v2374 = vmul.f32 %v2368, %v2372
    %v2375 = vlaneseq
    %v2376 = vshrl.u32 %v2375, 7
    %v2377 = vsub.s32 0, %v2376
    %v2378 = vrot.slane %v2340, %v2377
    %v2379 = vadd.f32 %v2373, %v2378
    %v2380 = vadd.f32 %v2374, %v2378
    %v2381 = vld [vmem:[#allocation4 + $0x328] sm:$0xff]
    %v2382 = vld [vmem:[#allocation4 + $0x330] sm:$0xff]
    %v2383 = vld [vmem:[#allocation4 + $0x338] sm:$0xff]
    %v2384 = vld [vmem:[#allocation4 + $0x340] sm:$0xff]
    %v2385 = vpack.c.bf16 %v2380, %v2379
    %v2386 = vpack.c.bf16 %v2382, %v2381
    %v2387 = vpack.c.bf16 %v2384, %v2383
    %v2388 = vld [vmem:[#allocation4 + $0x348] sm:$0x1]
    %v2389 = vlaneseq
    %v2390 = vshrl.u32 %v2389, 7
    %v2391 = vsub.s32 0, %v2390
    %v2392 = vrot.slane %v2388, %v2391
    %v2394 = vsel %vm114, %v2385, 0
    %2396 = vmatprep.subr.bf16.mxu0 0
    %2397 = vmatpush1.bf16.msra.mxu0 %v2386
    %2398 = vmatprep.subr.bf16.mxu0 0
    %2399 = vmatpush1.bf16.msra.mxu0 %v2387
    %2400 = vmatprep.subr.bf16.mxu0 0
    %2401 = vmatpush1.bf16.msra.mxu0 0
    %2402 = vmatprep.subr.bf16.mxu0 0
    %2403 = vmatpush1.bf16.msra.mxu0 0
    %2404 = vmatprep.subr.bf16.mxu0 0
    %2405 = vmatpush1.bf16.msra.mxu0 0
    %2406 = vmatprep.subr.bf16.mxu0 0
    %2407 = vmatpush1.bf16.msra.mxu0 0
    %2408 = vmatprep.subr.bf16.mxu0 0
    %2409 = vmatpush1.bf16.msra.mxu0 0
    %2410 = vmatprep.subr.bf16.mxu0 0
    %2411 = vmatpush1.bf16.msra.mxu0 0
    %2412 = vmatprep.subr.bf16.mxu0 0
    %2413 = vmatpush1.bf16.msra.mxu0 0
    %2414 = vmatprep.subr.bf16.mxu0 0
    %2415 = vmatpush1.bf16.msra.mxu0 0
    %2416 = vmatprep.subr.bf16.mxu0 0
    %2417 = vmatpush1.bf16.msra.mxu0 0
    %2418 = vmatprep.subr.bf16.mxu0 0
    %2419 = vmatpush1.bf16.msra.mxu0 0
    %2420 = vmatprep.subr.bf16.mxu0 0
    %2421 = vmatpush1.bf16.msra.mxu0 0
    %2422 = vmatprep.subr.bf16.mxu0 0
    %2423 = vmatpush1.bf16.msra.mxu0 0
    %2424 = vmatprep.subr.bf16.mxu0 0
    %2425 = vmatpush1.bf16.msra.mxu0 0
    %2426 = vmatprep.subr.bf16.mxu0 0
    %2427 = vmatpush1.bf16.msra.mxu0 0
    %2428 = vmatprep.mubr.bf16.mxu0 0
    %2429 = vmatmul.mubr.bf16.gmra.mrb[0].mxu0 %v2394
    %v2430 = vpop.f32.mrb[0].mxu0
    %v2431 = vadd.f32 %v2392, %v2430
    %v2432 = vpop.f32.mrb[0].mxu0
    %v2433 = vpop.f32.mrb[0].mxu0
    %v2434 = vadd.f32 %v2392, %v2433
    %v2435 = vpop.f32.mrb[0].mxu0
    %2436 = vdwg.mxu0
    %v2437 = vld [vmem:[#allocation4 + $0x350] sm:$0xff]
    %v2438 = vld [vmem:[#allocation4 + $0x358] sm:$0xff]
    %v2439 = vld [vmem:[#allocation4 + $0x360] sm:$0xff]
    %v2440 = vld [vmem:[#allocation4 + $0x368] sm:$0xff]
    %v2441 = vld [vmem:[#allocation4 + $0x370] sm:$0x1]
    %v2442 = vmul.f32 %v2431, %v1375
    %v2443 = vmul.f32 %v2434, %v1377
    %v2444 = vmul.f32 %v2431, %v1379
    %v2445 = vmul.f32 %v2434, %v1381
    %v2446 = vmul.f32 %v2431, %v1383
    %v2447 = vmul.f32 %v2434, %v1385
    %v2448 = vmul.f32 %v2431, %v1387
    %v2449 = vmul.f32 %v2434, %v1389
    %v2450 = vpack.c.bf16 %v2443, %v2442
    %v2451 = vpack.c.bf16 %v2445, %v2444
    %v2452 = vpack.c.bf16 %v2447, %v2446
    %v2453 = vpack.c.bf16 %v2449, %v2448
    %v2454 = vmul.f32 %v2431, %v1411
    %v2455 = vmul.f32 %v2434, %v1413
    %v2456 = vmul.f32 %v2431, %v1415
    %v2457 = vmul.f32 %v2434, %v1417
    %v2458 = vmul.f32 %v2431, %v1419
    %v2459 = vmul.f32 %v2434, %v1421
    %v2460 = vmul.f32 %v2431, %v1423
    %v2461 = vmul.f32 %v2434, %v1425
    %v2462 = vpack.c.bf16 %v2455, %v2454
    %v2463 = vpack.c.bf16 %v2457, %v2456
    %v2464 = vpack.c.bf16 %v2459, %v2458
    %v2465 = vpack.c.bf16 %v2461, %v2460
    %v2466 = vpack.c.bf16 %v2434, %v2431
    %2471 = vrot.lane.b32.xlu0 %v2450, 96
    %v2472 = vpop.permute.xlu0 %2471
    %2473 = vrot.lane.b32.xlu0 %v2451, 96
    %v2474 = vpop.permute.xlu0 %2473
    %2475 = vrot.lane.b32.xlu0 %v2452, 96
    %v2476 = vpop.permute.xlu0 %2475
    %2477 = vrot.lane.b32.xlu0 %v2453, 96
    %v2478 = vpop.permute.xlu0 %2477
    %v2480 = vsel %vm114, %v2466, 0
    %v2483 = vsel %vm114, %v2472, 0
    %v2486 = vsel %vm114, %v2474, 0
    %v2489 = vsel %vm114, %v2476, 0
    %v2492 = vsel %vm114, %v2478, 0
    %2494 = vmatprep.subr.bf16.mxu0 0
    %2495 = vmatpush1.bf16.xpose.msra.mxu0 %v2483
    %2496 = vmatprep.subr.bf16.mxu0 0
    %2497 = vmatpush1.bf16.xpose.msra.mxu0 %v2486
    %2498 = vmatprep.subr.bf16.mxu0 0
    %2499 = vmatpush1.bf16.xpose.msra.mxu0 %v2489
    %2500 = vmatprep.subr.bf16.mxu0 0
    %2501 = vmatpush1.bf16.xpose.msra.mxu0 %v2492
    %2502 = vmatprep.subr.bf16.mxu0 0
    %2503 = vmatpush1.bf16.xpose.msra.mxu0 0
    %2504 = vmatprep.subr.bf16.mxu0 0
    %2505 = vmatpush1.bf16.xpose.msra.mxu0 0
    %2506 = vmatprep.subr.bf16.mxu0 0
    %2507 = vmatpush1.bf16.xpose.msra.mxu0 0
    %2508 = vmatprep.subr.bf16.mxu0 0
    %2509 = vmatpush1.bf16.xpose.msra.mxu0 0
    %2510 = vmatprep.subr.bf16.mxu0 0
    %2511 = vmatpush1.bf16.xpose.msra.mxu0 0
    %2512 = vmatprep.subr.bf16.mxu0 0
    %2513 = vmatpush1.bf16.xpose.msra.mxu0 0
    %2514 = vmatprep.subr.bf16.mxu0 0
    %2515 = vmatpush1.bf16.xpose.msra.mxu0 0
    %2516 = vmatprep.subr.bf16.mxu0 0
    %2517 = vmatpush1.bf16.xpose.msra.mxu0 0
    %2518 = vmatprep.subr.bf16.mxu0 0
    %2519 = vmatpush1.bf16.xpose.msra.mxu0 0
    %2520 = vmatprep.subr.bf16.mxu0 0
    %2521 = vmatpush1.bf16.xpose.msra.mxu0 0
    %2522 = vmatprep.subr.bf16.mxu0 0
    %2523 = vmatpush1.bf16.xpose.msra.mxu0 0
    %2524 = vmatprep.subr.bf16.mxu0 0
    %2525 = vmatpush1.bf16.xpose.msra.mxu0 0
    %2526 = vmatprep.mubr.bf16.mxu0 0
    %2527 = vmatmul.mubr.bf16.gmra.mrb[0].mxu0 %v2480
    %v2528 = vpop.f32.mrb[0].mxu0
    %v2529 = vadd.f32 0.0, %v2528
    %v2530 = vpop.f32.mrb[0].mxu0
    %v2531 = vpop.f32.mrb[0].mxu0
    %v2532 = vadd.f32 0.0, %v2531
    %v2533 = vpop.f32.mrb[0].mxu0
    %2534 = vdwg.mxu0
    %v2535 = vmul.f32 %v2529, 0.35355338
    %v2536 = vmul.f32 %v2532, 0.35355338
    %v2537 = vadd.f32 %v2535, %v62
    %v2538 = vadd.f32 %v2536, %v63
    %v2539 = vsel %vm317, %v2537, -inf
    %2540 = vmax.xlane.f32.xlu0 %v2539
    %v2541 = vpop.xlane.xlu0 %2540
    %v2542 = vsel %vm317, %v2538, -inf
    %2543 = vmax.xlane.f32.xlu0 %v2542
    %v2544 = vpop.xlane.xlu0 %2543
    %v2545 = vsub.f32 %v2537, %v2541
    %v2546 = vsub.f32 %v2538, %v2544
    %v2547 = vmul.f32 %v2545, 1.442695
    %v2548 = vpow.pop %v2547
    %v2549 = vmul.f32 %v2546, 1.442695
    %v2550 = vpow.pop %v2549
    %v2552 = vsel %vm317, %v2548, 0
    %v2555 = vsel %vm317, %v2550, 0
    %2557 = vmatprep.subr.mxu0 0.0
    %2558 = vmatpush1.msra.mxu0 %v92
    %2559 = vmatprep.subr.mxu0 0.0
    %2560 = vmatpush1.msra.mxu0 %v93
    %2561 = vmatprep.subr.mxu0 0.0
    %2562 = vmatpush1.msra.mxu0 %v94
    %2563 = vmatprep.subr.mxu0 0.0
    %2564 = vmatpush1.msra.mxu0 %v95
    %2565 = vmatprep.subr.mxu0 0.0
    %2566 = vmatpush1.msra.mxu0 %v96
    %2567 = vmatprep.subr.mxu0 0.0
    %2568 = vmatpush1.msra.mxu0 %v97
    %2569 = vmatprep.subr.mxu0 0.0
    %2570 = vmatpush1.msra.mxu0 %v98
    %2571 = vmatprep.subr.mxu0 0.0
    %2572 = vmatpush1.msra.mxu0 %v99
    %2573 = vmatprep.subr.mxu0 0.0
    %2574 = vmatpush1.msra.mxu0 0.0
    %2575 = vmatprep.subr.mxu0 0.0
    %2576 = vmatpush1.msra.mxu0 0.0
    %2577 = vmatprep.subr.mxu0 0.0
    %2578 = vmatpush1.msra.mxu0 0.0
    %2579 = vmatprep.subr.mxu0 0.0
    %2580 = vmatpush1.msra.mxu0 0.0
    %2581 = vmatprep.subr.mxu0 0.0
    %2582 = vmatpush1.msra.mxu0 0.0
    %2583 = vmatprep.subr.mxu0 0.0
    %2584 = vmatpush1.msra.mxu0 0.0
    %2585 = vmatprep.subr.mxu0 0.0
    %2586 = vmatpush1.msra.mxu0 0.0
    %2587 = vmatprep.subr.mxu0 0.0
    %2588 = vmatpush1.msra.mxu0 0.0
    %2589 = vmatprep.subr.mxu0 0.0
    %2590 = vmatpush1.msra.mxu0 0.0
    %2591 = vmatprep.subr.mxu0 0.0
    %2592 = vmatpush1.msra.mxu0 0.0
    %2593 = vmatprep.subr.mxu0 0.0
    %2594 = vmatpush1.msra.mxu0 0.0
    %2595 = vmatprep.subr.mxu0 0.0
    %2596 = vmatpush1.msra.mxu0 0.0
    %2597 = vmatprep.subr.mxu0 0.0
    %2598 = vmatpush1.msra.mxu0 0.0
    %2599 = vmatprep.subr.mxu0 0.0
    %2600 = vmatpush1.msra.mxu0 0.0
    %2601 = vmatprep.subr.mxu0 0.0
    %2602 = vmatpush1.msra.mxu0 0.0
    %2603 = vmatprep.subr.mxu0 0.0
    %2604 = vmatpush1.msra.mxu0 0.0
    %2605 = vmatprep.subr.mxu0 0.0
    %2606 = vmatpush1.msra.mxu0 0.0
    %2607 = vmatprep.subr.mxu0 0.0
    %2608 = vmatpush1.msra.mxu0 0.0
    %2609 = vmatprep.subr.mxu0 0.0
    %2610 = vmatpush1.msra.mxu0 0.0
    %2611 = vmatprep.subr.mxu0 0.0
    %2612 = vmatpush1.msra.mxu0 0.0
    %2613 = vmatprep.subr.mxu0 0.0
    %2614 = vmatpush1.msra.mxu0 0.0
    %2615 = vmatprep.subr.mxu0 0.0
    %2616 = vmatpush1.msra.mxu0 0.0
    %2617 = vmatprep.subr.mxu0 0.0
    %2618 = vmatpush1.msra.mxu0 0.0
    %2619 = vmatprep.subr.mxu0 0.0
    %2620 = vmatpush1.msra.mxu0 0.0
    %2621 = vmatprep.mubr.f32.mxu0 0.0
    %2622 = vmatmul.mubr.f32.gmra.mrb[0].mxu0 %v2552
    %v2623 = vpop.f32.mrb[0].mxu0
    %v2624 = vadd.f32 0.0, %v2623
    %v2625 = vpop.f32.mrb[0].mxu0
    %2626 = vmatprep.mubr.f32.mxu0 0.0
    %2627 = vmatmul.mubr.f32.gmra.mrb[0].mxu0 %v2555
    %v2628 = vpop.f32.mrb[0].mxu0
    %v2629 = vadd.f32 0.0, %v2628
    %v2630 = vpop.f32.mrb[0].mxu0
    %2631 = vdwg.mxu0
    %v2632 = vrcp.pop %v2624
    %v2633 = vrcp.pop %v2629
    %v2634 = vmul.f32 %v2548, %v2632
    %v2635 = vmul.f32 %v2550, %v2633
    %v2636 = vpack.c.bf16 %v2635, %v2634
    %2641 = vrot.lane.b32.xlu0 %v2462, 64
    %v2642 = vpop.permute.xlu0 %2641
    %2643 = vrot.lane.b32.xlu0 %v2463, 64
    %v2644 = vpop.permute.xlu0 %2643
    %2645 = vrot.lane.b32.xlu0 %v2464, 64
    %v2646 = vpop.permute.xlu0 %2645
    %2647 = vrot.lane.b32.xlu0 %v2465, 64
    %v2648 = vpop.permute.xlu0 %2647
    %v2654 = vsel %vm317, %v2636, 0
    %2656 = vmatprep.subr.bf16.mxu0 0
    %2657 = vmatpush1.bf16.msra.mxu0 %v2642
    %2658 = vmatprep.subr.bf16.mxu0 0
    %2659 = vmatpush1.bf16.msra.mxu0 %v2644
    %2660 = vmatprep.subr.bf16.mxu0 0
    %2661 = vmatpush1.bf16.msra.mxu0 %v2646
    %2662 = vmatprep.subr.bf16.mxu0 0
    %2663 = vmatpush1.bf16.msra.mxu0 %v2648
    %2664 = vmatprep.subr.bf16.mxu0 0
    %2665 = vmatpush1.bf16.msra.mxu0 0
    %2666 = vmatprep.subr.bf16.mxu0 0
    %2667 = vmatpush1.bf16.msra.mxu0 0
    %2668 = vmatprep.subr.bf16.mxu0 0
    %2669 = vmatpush1.bf16.msra.mxu0 0
    %2670 = vmatprep.subr.bf16.mxu0 0
    %2671 = vmatpush1.bf16.msra.mxu0 0
    %2672 = vmatprep.subr.bf16.mxu0 0
    %2673 = vmatpush1.bf16.msra.mxu0 0
    %2674 = vmatprep.subr.bf16.mxu0 0
    %2675 = vmatpush1.bf16.msra.mxu0 0
    %2676 = vmatprep.subr.bf16.mxu0 0
    %2677 = vmatpush1.bf16.msra.mxu0 0
    %2678 = vmatprep.subr.bf16.mxu0 0
    %2679 = vmatpush1.bf16.msra.mxu0 0
    %2680 = vmatprep.subr.bf16.mxu0 0
    %2681 = vmatpush1.bf16.msra.mxu0 0
    %2682 = vmatprep.subr.bf16.mxu0 0
    %2683 = vmatpush1.bf16.msra.mxu0 0
    %2684 = vmatprep.subr.bf16.mxu0 0
    %2685 = vmatpush1.bf16.msra.mxu0 0
    %2686 = vmatprep.subr.bf16.mxu0 0
    %2687 = vmatpush1.bf16.msra.mxu0 0
    %2688 = vmatprep.mubr.bf16.mxu0 0
    %2689 = vmatmul.mubr.bf16.gmra.mrb[0].mxu0 %v2654
    %v2690 = vpop.f32.mrb[0].mxu0
    %v2691 = vadd.f32 0.0, %v2690
    %v2692 = vpop.f32.mrb[0].mxu0
    %v2693 = vpop.f32.mrb[0].mxu0
    %v2694 = vadd.f32 0.0, %v2693
    %v2695 = vpop.f32.mrb[0].mxu0
    %2696 = vdwg.mxu0
    %v2697 = vpack.c.bf16 %v2694, %v2691
    %v2698 = vpack.c.bf16 %v2438, %v2437
    %v2699 = vpack.c.bf16 %v2440, %v2439
    %v2700 = vlaneseq
    %v2701 = vshrl.u32 %v2700, 7
    %v2702 = vsub.s32 0, %v2701
    %v2703 = vrot.slane %v2441, %v2702
    %v2705 = vsel %vm114, %v2697, 0
    %2707 = vmatprep.subr.bf16.mxu0 0
    %2708 = vmatpush1.bf16.msra.mxu0 %v2698
    %2709 = vmatprep.subr.bf16.mxu0 0
    %2710 = vmatpush1.bf16.msra.mxu0 %v2699
    %2711 = vmatprep.subr.bf16.mxu0 0
    %2712 = vmatpush1.bf16.msra.mxu0 0
    %2713 = vmatprep.subr.bf16.mxu0 0
    %2714 = vmatpush1.bf16.msra.mxu0 0
    %2715 = vmatprep.subr.bf16.mxu0 0
    %2716 = vmatpush1.bf16.msra.mxu0 0
    %2717 = vmatprep.subr.bf16.mxu0 0
    %2718 = vmatpush1.bf16.msra.mxu0 0
    %2719 = vmatprep.subr.bf16.mxu0 0
    %2720 = vmatpush1.bf16.msra.mxu0 0
    %2721 = vmatprep.subr.bf16.mxu0 0
    %2722 = vmatpush1.bf16.msra.mxu0 0
    %2723 = vmatprep.subr.bf16.mxu0 0
    %2724 = vmatpush1.bf16.msra.mxu0 0
    %2725 = vmatprep.subr.bf16.mxu0 0
    %2726 = vmatpush1.bf16.msra.mxu0 0
    %2727 = vmatprep.subr.bf16.mxu0 0
    %2728 = vmatpush1.bf16.msra.mxu0 0
    %2729 = vmatprep.subr.bf16.mxu0 0
    %2730 = vmatpush1.bf16.msra.mxu0 0
    %2731 = vmatprep.subr.bf16.mxu0 0
    %2732 = vmatpush1.bf16.msra.mxu0 0
    %2733 = vmatprep.subr.bf16.mxu0 0
    %2734 = vmatpush1.bf16.msra.mxu0 0
    %2735 = vmatprep.subr.bf16.mxu0 0
    %2736 = vmatpush1.bf16.msra.mxu0 0
    %2737 = vmatprep.subr.bf16.mxu0 0
    %2738 = vmatpush1.bf16.msra.mxu0 0
    %2739 = vmatprep.mubr.bf16.mxu0 0
    %2740 = vmatmul.mubr.bf16.gmra.mrb[0].mxu0 %v2705
    %v2741 = vpop.f32.mrb[0].mxu0
    %v2742 = vadd.f32 %v2703, %v2741
    %v2743 = vpop.f32.mrb[0].mxu0
    %v2744 = vpop.f32.mrb[0].mxu0
    %v2745 = vadd.f32 %v2703, %v2744
    %v2746 = vpop.f32.mrb[0].mxu0
    %2747 = vdwg.mxu0
    %v2748 = vld [vmem:[#allocation4 + $0x378] sm:$0x1]
    %v2749 = vld [vmem:[#allocation4 + $0x380] sm:$0x1]
    %v2750 = vadd.f32 %v2379, %v2742
    %v2751 = vadd.f32 %v2380, %v2745
    %v2752 = vsel %vm114, %v2750, 0.0
    %2753 = vadd.xlane.f32.xlu0 %v2752
    %v2754 = vpop.xlane.xlu0 %2753
    %v2755 = vsel %vm114, %v2751, 0.0
    %2756 = vadd.xlane.f32.xlu0 %v2755
    %v2757 = vpop.xlane.xlu0 %2756
    %v2758 = vmul.f32 %v2754, %v537
    %v2759 = vmul.f32 %v2757, %v537
    %v2760 = vsub.f32 %v2750, %v2758
    %v2761 = vsub.f32 %v2751, %v2759
    %v2762 = vmul.f32 %v2760, %v2760
    %v2763 = vmul.f32 %v2761, %v2761
    %v2764 = vsel %vm114, %v2762, 0.0
    %2765 = vadd.xlane.f32.xlu0 %v2764
    %v2766 = vpop.xlane.xlu0 %2765
    %v2767 = vsel %vm114, %v2763, 0.0
    %2768 = vadd.xlane.f32.xlu0 %v2767
    %v2769 = vpop.xlane.xlu0 %2768
    %v2770 = vmul.f32 %v2766, %v537
    %v2771 = vmul.f32 %v2769, %v537
    %v2772 = vadd.f32 %v2770, 1e-05
    %v2773 = vadd.f32 %v2771, 1e-05
    %v2774 = vrsqrt.pop %v2772
    %v2775 = vrsqrt.pop %v2773
    %v2776 = vmul.f32 %v2760, %v2774
    %v2777 = vmul.f32 %v2761, %v2775
    %v2778 = vlaneseq
    %v2779 = vshrl.u32 %v2778, 7
    %v2780 = vsub.s32 0, %v2779
    %v2781 = vrot.slane %v2748, %v2780
    %v2782 = vmul.f32 %v2776, %v2781
    %v2783 = vmul.f32 %v2777, %v2781
    %v2784 = vlaneseq
    %v2785 = vshrl.u32 %v2784, 7
    %v2786 = vsub.s32 0, %v2785
    %v2787 = vrot.slane %v2749, %v2786
    %v2788 = vadd.f32 %v2782, %v2787
    %v2789 = vadd.f32 %v2783, %v2787
    %v2790 = vld [vmem:[#allocation4 + $0x388] sm:$0xff]
    %v2791 = vld [vmem:[#allocation4 + $0x390] sm:$0xff]
    %v2792 = vld [vmem:[#allocation4 + $0x398] sm:$0xff]
    %v2793 = vld [vmem:[#allocation4 + $0x3a0] sm:$0xff]
    %v2794 = vpack.c.bf16 %v2791, %v2790
    %v2795 = vpack.c.bf16 %v2793, %v2792
    %v2796 = vld [vmem:[#allocation4 + $0x3a8] sm:$0x1]
    %v2797 = vlaneseq
    %v2798 = vshrl.u32 %v2797, 7
    %v2799 = vsub.s32 0, %v2798
    %v2800 = vrot.slane %v2796, %v2799
    %2801 = vmatprep.subr.bf16.mxu0 0
    %2802 = vmatpush1.bf16.msra.mxu0 %v2794
    %2803 = vmatprep.subr.bf16.mxu0 0
    %2804 = vmatpush1.bf16.msra.mxu0 %v2795
    %2805 = vmatprep.subr.bf16.mxu0 0
    %2806 = vmatpush1.bf16.msra.mxu0 0
    %2807 = vmatprep.subr.bf16.mxu0 0
    %2808 = vmatpush1.bf16.msra.mxu0 0
    %2809 = vmatprep.subr.bf16.mxu0 0
    %2810 = vmatpush1.bf16.msra.mxu0 0
    %2811 = vmatprep.subr.bf16.mxu0 0
    %2812 = vmatpush1.bf16.msra.mxu0 0
    %2813 = vmatprep.subr.bf16.mxu0 0
    %2814 = vmatpush1.bf16.msra.mxu0 0
    %2815 = vmatprep.subr.bf16.mxu0 0
    %2816 = vmatpush1.bf16.msra.mxu0 0
    %2817 = vmatprep.subr.bf16.mxu0 0
    %2818 = vmatpush1.bf16.msra.mxu0 0
    %2819 = vmatprep.subr.bf16.mxu0 0
    %2820 = vmatpush1.bf16.msra.mxu0 0
    %2821 = vmatprep.subr.bf16.mxu0 0
    %2822 = vmatpush1.bf16.msra.mxu0 0
    %2823 = vmatprep.subr.bf16.mxu0 0
    %2824 = vmatpush1.bf16.msra.mxu0 0
    %2825 = vmatprep.subr.bf16.mxu0 0
    %2826 = vmatpush1.bf16.msra.mxu0 0
    %2827 = vmatprep.subr.bf16.mxu0 0
    %2828 = vmatpush1.bf16.msra.mxu0 0
    %2829 = vmatprep.subr.bf16.mxu0 0
    %2830 = vmatpush1.bf16.msra.mxu0 0
    %2831 = vmatprep.subr.bf16.mxu0 0
    %2832 = vmatpush1.bf16.msra.mxu0 0
    %2833 = vmatprep.mubr.bf16.mxu0 0
    %2834 = vmatmul.mubr.bf16.gmra.mrb[0].mxu0 %v2394
    %v2835 = vpop.f32.mrb[0].mxu0
    %v2836 = vadd.f32 %v2800, %v2835
    %v2837 = vpop.f32.mrb[0].mxu0
    %v2838 = vpop.f32.mrb[0].mxu0
    %v2839 = vadd.f32 %v2800, %v2838
    %v2840 = vpop.f32.mrb[0].mxu0
    %2841 = vdwg.mxu0
    %v2842 = vld [vmem:[#allocation4 + $0x3b0] sm:$0xff]
    %v2843 = vld [vmem:[#allocation4 + $0x3b8] sm:$0xff]
    %v2844 = vld [vmem:[#allocation4 + $0x3c0] sm:$0xff]
    %v2845 = vld [vmem:[#allocation4 + $0x3c8] sm:$0xff]
    %v2846 = vpack.c.bf16 %v2843, %v2842
    %v2847 = vpack.c.bf16 %v2845, %v2844
    %v2848 = vld [vmem:[#allocation4 + $0x3d0] sm:$0x1]
    %v2849 = vlaneseq
    %v2850 = vshrl.u32 %v2849, 7
    %v2851 = vsub.s32 0, %v2850
    %v2852 = vrot.slane %v2848, %v2851
    %2853 = vmatprep.subr.bf16.mxu0 0
    %2854 = vmatpush1.bf16.msra.mxu0 %v2846
    %2855 = vmatprep.subr.bf16.mxu0 0
    %2856 = vmatpush1.bf16.msra.mxu0 %v2847
    %2857 = vmatprep.subr.bf16.mxu0 0
    %2858 = vmatpush1.bf16.msra.mxu0 0
    %2859 = vmatprep.subr.bf16.mxu0 0
    %2860 = vmatpush1.bf16.msra.mxu0 0
    %2861 = vmatprep.subr.bf16.mxu0 0
    %2862 = vmatpush1.bf16.msra.mxu0 0
    %2863 = vmatprep.subr.bf16.mxu0 0
    %2864 = vmatpush1.bf16.msra.mxu0 0
    %2865 = vmatprep.subr.bf16.mxu0 0
    %2866 = vmatpush1.bf16.msra.mxu0 0
    %2867 = vmatprep.subr.bf16.mxu0 0
    %2868 = vmatpush1.bf16.msra.mxu0 0
    %2869 = vmatprep.subr.bf16.mxu0 0
    %2870 = vmatpush1.bf16.msra.mxu0 0
    %2871 = vmatprep.subr.bf16.mxu0 0
    %2872 = vmatpush1.bf16.msra.mxu0 0
    %2873 = vmatprep.subr.bf16.mxu0 0
    %2874 = vmatpush1.bf16.msra.mxu0 0
    %2875 = vmatprep.subr.bf16.mxu0 0
    %2876 = vmatpush1.bf16.msra.mxu0 0
    %2877 = vmatprep.subr.bf16.mxu0 0
    %2878 = vmatpush1.bf16.msra.mxu0 0
    %2879 = vmatprep.subr.bf16.mxu0 0
    %2880 = vmatpush1.bf16.msra.mxu0 0
    %2881 = vmatprep.subr.bf16.mxu0 0
    %2882 = vmatpush1.bf16.msra.mxu0 0
    %2883 = vmatprep.subr.bf16.mxu0 0
    %2884 = vmatpush1.bf16.msra.mxu0 0
    %2885 = vmatprep.mubr.bf16.mxu0 0
    %2886 = vmatmul.mubr.bf16.gmra.mrb[0].mxu0 %v1835
    %v2887 = vpop.f32.mrb[0].mxu0
    %v2888 = vadd.f32 %v2852, %v2887
    %v2889 = vpop.f32.mrb[0].mxu0
    %v2890 = vpop.f32.mrb[0].mxu0
    %v2891 = vadd.f32 %v2852, %v2890
    %v2892 = vpop.f32.mrb[0].mxu0
    %2893 = vdwg.mxu0
    %v2894 = vld [vmem:[#allocation4 + $0x3d8] sm:$0xff]
    %v2895 = vld [vmem:[#allocation4 + $0x3e0] sm:$0xff]
    %v2896 = vld [vmem:[#allocation4 + $0x3e8] sm:$0xff]
    %v2897 = vld [vmem:[#allocation4 + $0x3f0] sm:$0xff]
    %v2898 = vld [vmem:[#allocation4 + $0x3f8] sm:$0x1]
    %v2899 = vmul.f32 %v2888, %v68
    %v2900 = vmul.f32 %v2891, %v69
    %v2901 = vmul.f32 %v2888, %v70
    %v2902 = vmul.f32 %v2891, %v71
    %v2903 = vmul.f32 %v2888, %v72
    %v2904 = vmul.f32 %v2891, %v73
    %v2905 = vmul.f32 %v2888, %v74
    %v2906 = vmul.f32 %v2891, %v75
    %v2907 = vpack.c.bf16 %v2900, %v2899
    %v2908 = vpack.c.bf16 %v2902, %v2901
    %v2909 = vpack.c.bf16 %v2904, %v2903
    %v2910 = vpack.c.bf16 %v2906, %v2905
    %v2911 = vmul.f32 %v2888, %v173
    %v2912 = vmul.f32 %v2891, %v175
    %v2913 = vmul.f32 %v2888, %v177
    %v2914 = vmul.f32 %v2891, %v179
    %v2915 = vmul.f32 %v2888, %v181
    %v2916 = vmul.f32 %v2891, %v183
    %v2917 = vmul.f32 %v2888, %v185
    %v2918 = vmul.f32 %v2891, %v187
    %v2919 = vpack.c.bf16 %v2912, %v2911
    %v2920 = vpack.c.bf16 %v2914, %v2913
    %v2921 = vpack.c.bf16 %v2916, %v2915
    %v2922 = vpack.c.bf16 %v2918, %v2917
    %v2923 = vpack.c.bf16 %v2839, %v2836
    %v2925 = vsel %vm114, %v2923, 0
    %v2928 = vsel %vm114, %v2907, 0
    %v2931 = vsel %vm114, %v2908, 0
    %v2934 = vsel %vm114, %v2909, 0
    %v2937 = vsel %vm114, %v2910, 0
    %2939 = vmatprep.subr.bf16.mxu0 0
    %2940 = vmatpush1.bf16.xpose.msra.mxu0 %v2928
    %2941 = vmatprep.subr.bf16.mxu0 0
    %2942 = vmatpush1.bf16.xpose.msra.mxu0 %v2931
    %2943 = vmatprep.subr.bf16.mxu0 0
    %2944 = vmatpush1.bf16.xpose.msra.mxu0 %v2934
    %2945 = vmatprep.subr.bf16.mxu0 0
    %2946 = vmatpush1.bf16.xpose.msra.mxu0 %v2937
    %2947 = vmatprep.subr.bf16.mxu0 0
    %2948 = vmatpush1.bf16.xpose.msra.mxu0 0
    %2949 = vmatprep.subr.bf16.mxu0 0
    %2950 = vmatpush1.bf16.xpose.msra.mxu0 0
    %2951 = vmatprep.subr.bf16.mxu0 0
    %2952 = vmatpush1.bf16.xpose.msra.mxu0 0
    %2953 = vmatprep.subr.bf16.mxu0 0
    %2954 = vmatpush1.bf16.xpose.msra.mxu0 0
    %2955 = vmatprep.subr.bf16.mxu0 0
    %2956 = vmatpush1.bf16.xpose.msra.mxu0 0
    %2957 = vmatprep.subr.bf16.mxu0 0
    %2958 = vmatpush1.bf16.xpose.msra.mxu0 0
    %2959 = vmatprep.subr.bf16.mxu0 0
    %2960 = vmatpush1.bf16.xpose.msra.mxu0 0
    %2961 = vmatprep.subr.bf16.mxu0 0
    %2962 = vmatpush1.bf16.xpose.msra.mxu0 0
    %2963 = vmatprep.subr.bf16.mxu0 0
    %2964 = vmatpush1.bf16.xpose.msra.mxu0 0
    %2965 = vmatprep.subr.bf16.mxu0 0
    %2966 = vmatpush1.bf16.xpose.msra.mxu0 0
    %2967 = vmatprep.subr.bf16.mxu0 0
    %2968 = vmatpush1.bf16.xpose.msra.mxu0 0
    %2969 = vmatprep.subr.bf16.mxu0 0
    %2970 = vmatpush1.bf16.xpose.msra.mxu0 0
    %2971 = vmatprep.mubr.bf16.mxu0 0
    %2972 = vmatmul.mubr.bf16.gmra.mrb[0].mxu0 %v2925
    %v2973 = vpop.f32.mrb[0].mxu0
    %v2974 = vadd.f32 0.0, %v2973
    %v2975 = vpop.f32.mrb[0].mxu0
    %v2976 = vpop.f32.mrb[0].mxu0
    %v2977 = vadd.f32 0.0, %v2976
    %v2978 = vpop.f32.mrb[0].mxu0
    %2979 = vdwg.mxu0
    %v2980 = vmul.f32 %v2974, 0.35355338
    %v2981 = vmul.f32 %v2977, 0.35355338
    %v2982 = vadd.f32 %v2980, %v66
    %v2983 = vadd.f32 %v2981, %v67
    %v2984 = vsel %vm317, %v2982, -inf
    %2985 = vmax.xlane.f32.xlu0 %v2984
    %v2986 = vpop.xlane.xlu0 %2985
    %v2987 = vsel %vm317, %v2983, -inf
    %2988 = vmax.xlane.f32.xlu0 %v2987
    %v2989 = vpop.xlane.xlu0 %2988
    %v2990 = vsub.f32 %v2982, %v2986
    %v2991 = vsub.f32 %v2983, %v2989
    %v2992 = vmul.f32 %v2990, 1.442695
    %v2993 = vpow.pop %v2992
    %v2994 = vmul.f32 %v2991, 1.442695
    %v2995 = vpow.pop %v2994
    %v2997 = vsel %vm317, %v2993, 0
    %v3000 = vsel %vm317, %v2995, 0
    %3002 = vmatprep.subr.mxu0 0.0
    %3003 = vmatpush1.msra.mxu0 %v76
    %3004 = vmatprep.subr.mxu0 0.0
    %3005 = vmatpush1.msra.mxu0 %v77
    %3006 = vmatprep.subr.mxu0 0.0
    %3007 = vmatpush1.msra.mxu0 %v78
    %3008 = vmatprep.subr.mxu0 0.0
    %3009 = vmatpush1.msra.mxu0 %v79
    %3010 = vmatprep.subr.mxu0 0.0
    %3011 = vmatpush1.msra.mxu0 %v80
    %3012 = vmatprep.subr.mxu0 0.0
    %3013 = vmatpush1.msra.mxu0 %v81
    %3014 = vmatprep.subr.mxu0 0.0
    %3015 = vmatpush1.msra.mxu0 %v82
    %3016 = vmatprep.subr.mxu0 0.0
    %3017 = vmatpush1.msra.mxu0 %v83
    %3018 = vmatprep.subr.mxu0 0.0
    %3019 = vmatpush1.msra.mxu0 0.0
    %3020 = vmatprep.subr.mxu0 0.0
    %3021 = vmatpush1.msra.mxu0 0.0
    %3022 = vmatprep.subr.mxu0 0.0
    %3023 = vmatpush1.msra.mxu0 0.0
    %3024 = vmatprep.subr.mxu0 0.0
    %3025 = vmatpush1.msra.mxu0 0.0
    %3026 = vmatprep.subr.mxu0 0.0
    %3027 = vmatpush1.msra.mxu0 0.0
    %3028 = vmatprep.subr.mxu0 0.0
    %3029 = vmatpush1.msra.mxu0 0.0
    %3030 = vmatprep.subr.mxu0 0.0
    %3031 = vmatpush1.msra.mxu0 0.0
    %3032 = vmatprep.subr.mxu0 0.0
    %3033 = vmatpush1.msra.mxu0 0.0
    %3034 = vmatprep.subr.mxu0 0.0
    %3035 = vmatpush1.msra.mxu0 0.0
    %3036 = vmatprep.subr.mxu0 0.0
    %3037 = vmatpush1.msra.mxu0 0.0
    %3038 = vmatprep.subr.mxu0 0.0
    %3039 = vmatpush1.msra.mxu0 0.0
    %3040 = vmatprep.subr.mxu0 0.0
    %3041 = vmatpush1.msra.mxu0 0.0
    %3042 = vmatprep.subr.mxu0 0.0
    %3043 = vmatpush1.msra.mxu0 0.0
    %3044 = vmatprep.subr.mxu0 0.0
    %3045 = vmatpush1.msra.mxu0 0.0
    %3046 = vmatprep.subr.mxu0 0.0
    %3047 = vmatpush1.msra.mxu0 0.0
    %3048 = vmatprep.subr.mxu0 0.0
    %3049 = vmatpush1.msra.mxu0 0.0
    %3050 = vmatprep.subr.mxu0 0.0
    %3051 = vmatpush1.msra.mxu0 0.0
    %3052 = vmatprep.subr.mxu0 0.0
    %3053 = vmatpush1.msra.mxu0 0.0
    %3054 = vmatprep.subr.mxu0 0.0
    %3055 = vmatpush1.msra.mxu0 0.0
    %3056 = vmatprep.subr.mxu0 0.0
    %3057 = vmatpush1.msra.mxu0 0.0
    %3058 = vmatprep.subr.mxu0 0.0
    %3059 = vmatpush1.msra.mxu0 0.0
    %3060 = vmatprep.subr.mxu0 0.0
    %3061 = vmatpush1.msra.mxu0 0.0
    %3062 = vmatprep.subr.mxu0 0.0
    %3063 = vmatpush1.msra.mxu0 0.0
    %3064 = vmatprep.subr.mxu0 0.0
    %3065 = vmatpush1.msra.mxu0 0.0
    %3066 = vmatprep.mubr.f32.mxu0 0.0
    %3067 = vmatmul.mubr.f32.gmra.mrb[0].mxu0 %v2997
    %v3068 = vpop.f32.mrb[0].mxu0
    %v3069 = vadd.f32 0.0, %v3068
    %v3070 = vpop.f32.mrb[0].mxu0
    %3071 = vmatprep.mubr.f32.mxu0 0.0
    %3072 = vmatmul.mubr.f32.gmra.mrb[0].mxu0 %v3000
    %v3073 = vpop.f32.mrb[0].mxu0
    %v3074 = vadd.f32 0.0, %v3073
    %v3075 = vpop.f32.mrb[0].mxu0
    %3076 = vdwg.mxu0
    %v3077 = vrcp.pop %v3069
    %v3078 = vrcp.pop %v3074
    %v3079 = vmul.f32 %v2993, %v3077
    %v3080 = vmul.f32 %v2995, %v3078
    %v3081 = vpack.c.bf16 %v3080, %v3079
    %3086 = vrot.lane.b32.xlu0 %v2919, 96
    %v3087 = vpop.permute.xlu0 %3086
    %3088 = vrot.lane.b32.xlu0 %v2920, 96
    %v3089 = vpop.permute.xlu0 %3088
    %3090 = vrot.lane.b32.xlu0 %v2921, 96
    %v3091 = vpop.permute.xlu0 %3090
    %3092 = vrot.lane.b32.xlu0 %v2922, 96
    %v3093 = vpop.permute.xlu0 %3092
    %v3099 = vsel %vm317, %v3081, 0
    %3101 = vmatprep.subr.bf16.mxu0 0
    %3102 = vmatpush1.bf16.msra.mxu0 %v3087
    %3103 = vmatprep.subr.bf16.mxu0 0
    %3104 = vmatpush1.bf16.msra.mxu0 %v3089
    %3105 = vmatprep.subr.bf16.mxu0 0
    %3106 = vmatpush1.bf16.msra.mxu0 %v3091
    %3107 = vmatprep.subr.bf16.mxu0 0
    %3108 = vmatpush1.bf16.msra.mxu0 %v3093
    %3109 = vmatprep.subr.bf16.mxu0 0
    %3110 = vmatpush1.bf16.msra.mxu0 0
    %3111 = vmatprep.subr.bf16.mxu0 0
    %3112 = vmatpush1.bf16.msra.mxu0 0
    %3113 = vmatprep.subr.bf16.mxu0 0
    %3114 = vmatpush1.bf16.msra.mxu0 0
    %3115 = vmatprep.subr.bf16.mxu0 0
    %3116 = vmatpush1.bf16.msra.mxu0 0
    %3117 = vmatprep.subr.bf16.mxu0 0
    %3118 = vmatpush1.bf16.msra.mxu0 0
    %3119 = vmatprep.subr.bf16.mxu0 0
    %3120 = vmatpush1.bf16.msra.mxu0 0
    %3121 = vmatprep.subr.bf16.mxu0 0
    %3122 = vmatpush1.bf16.msra.mxu0 0
    %3123 = vmatprep.subr.bf16.mxu0 0
    %3124 = vmatpush1.bf16.msra.mxu0 0
    %3125 = vmatprep.subr.bf16.mxu0 0
    %3126 = vmatpush1.bf16.msra.mxu0 0
    %3127 = vmatprep.subr.bf16.mxu0 0
    %3128 = vmatpush1.bf16.msra.mxu0 0
    %3129 = vmatprep.subr.bf16.mxu0 0
    %3130 = vmatpush1.bf16.msra.mxu0 0
    %3131 = vmatprep.subr.bf16.mxu0 0
    %3132 = vmatpush1.bf16.msra.mxu0 0
    %3133 = vmatprep.mubr.bf16.mxu0 0
    %3134 = vmatmul.mubr.bf16.gmra.mrb[0].mxu0 %v3099
    %v3135 = vpop.f32.mrb[0].mxu0
    %v3136 = vadd.f32 0.0, %v3135
    %v3137 = vpop.f32.mrb[0].mxu0
    %v3138 = vpop.f32.mrb[0].mxu0
    %v3139 = vadd.f32 0.0, %v3138
    %v3140 = vpop.f32.mrb[0].mxu0
    %3141 = vdwg.mxu0
    %v3142 = vpack.c.bf16 %v3139, %v3136
    %v3143 = vpack.c.bf16 %v2895, %v2894
    %v3144 = vpack.c.bf16 %v2897, %v2896
    %v3145 = vlaneseq
    %v3146 = vshrl.u32 %v3145, 7
    %v3147 = vsub.s32 0, %v3146
    %v3148 = vrot.slane %v2898, %v3147
    %v3150 = vsel %vm114, %v3142, 0
    %3152 = vmatprep.subr.bf16.mxu0 0
    %3153 = vmatpush1.bf16.msra.mxu0 %v3143
    %3154 = vmatprep.subr.bf16.mxu0 0
    %3155 = vmatpush1.bf16.msra.mxu0 %v3144
    %3156 = vmatprep.subr.bf16.mxu0 0
    %3157 = vmatpush1.bf16.msra.mxu0 0
    %3158 = vmatprep.subr.bf16.mxu0 0
    %3159 = vmatpush1.bf16.msra.mxu0 0
    %3160 = vmatprep.subr.bf16.mxu0 0
    %3161 = vmatpush1.bf16.msra.mxu0 0
    %3162 = vmatprep.subr.bf16.mxu0 0
    %3163 = vmatpush1.bf16.msra.mxu0 0
    %3164 = vmatprep.subr.bf16.mxu0 0
    %3165 = vmatpush1.bf16.msra.mxu0 0
    %3166 = vmatprep.subr.bf16.mxu0 0
    %3167 = vmatpush1.bf16.msra.mxu0 0
    %3168 = vmatprep.subr.bf16.mxu0 0
    %3169 = vmatpush1.bf16.msra.mxu0 0
    %3170 = vmatprep.subr.bf16.mxu0 0
    %3171 = vmatpush1.bf16.msra.mxu0 0
    %3172 = vmatprep.subr.bf16.mxu0 0
    %3173 = vmatpush1.bf16.msra.mxu0 0
    %3174 = vmatprep.subr.bf16.mxu0 0
    %3175 = vmatpush1.bf16.msra.mxu0 0
    %3176 = vmatprep.subr.bf16.mxu0 0
    %3177 = vmatpush1.bf16.msra.mxu0 0
    %3178 = vmatprep.subr.bf16.mxu0 0
    %3179 = vmatpush1.bf16.msra.mxu0 0
    %3180 = vmatprep.subr.bf16.mxu0 0
    %3181 = vmatpush1.bf16.msra.mxu0 0
    %3182 = vmatprep.subr.bf16.mxu0 0
    %3183 = vmatpush1.bf16.msra.mxu0 0
    %3184 = vmatprep.mubr.bf16.mxu0 0
    %3185 = vmatmul.mubr.bf16.gmra.mrb[0].mxu0 %v3150
    %v3186 = vpop.f32.mrb[0].mxu0
    %v3187 = vadd.f32 %v3148, %v3186
    %v3188 = vpop.f32.mrb[0].mxu0
    %v3189 = vpop.f32.mrb[0].mxu0
    %v3190 = vadd.f32 %v3148, %v3189
    %v3191 = vpop.f32.mrb[0].mxu0
    %3192 = vdwg.mxu0
    %v3193 = vld [vmem:[#allocation4 + $0x400] sm:$0x1]
    %v3194 = vld [vmem:[#allocation4 + $0x408] sm:$0x1]
    %v3195 = vadd.f32 %v2788, %v3187
    %v3196 = vadd.f32 %v2789, %v3190
    %v3197 = vsel %vm114, %v3195, 0.0
    %3198 = vadd.xlane.f32.xlu0 %v3197
    %v3199 = vpop.xlane.xlu0 %3198
    %v3200 = vsel %vm114, %v3196, 0.0
    %3201 = vadd.xlane.f32.xlu0 %v3200
    %v3202 = vpop.xlane.xlu0 %3201
    %v3203 = vmul.f32 %v3199, %v537
    %v3204 = vmul.f32 %v3202, %v537
    %v3205 = vsub.f32 %v3195, %v3203
    %v3206 = vsub.f32 %v3196, %v3204
    %v3207 = vmul.f32 %v3205, %v3205
    %v3208 = vmul.f32 %v3206, %v3206
    %v3209 = vsel %vm114, %v3207, 0.0
    %3210 = vadd.xlane.f32.xlu0 %v3209
    %v3211 = vpop.xlane.xlu0 %3210
    %v3212 = vsel %vm114, %v3208, 0.0
    %3213 = vadd.xlane.f32.xlu0 %v3212
    %v3214 = vpop.xlane.xlu0 %3213
    %v3215 = vmul.f32 %v3211, %v537
    %v3216 = vmul.f32 %v3214, %v537
    %v3217 = vadd.f32 %v3215, 1e-05
    %v3218 = vadd.f32 %v3216, 1e-05
    %v3219 = vrsqrt.pop %v3217
    %v3220 = vrsqrt.pop %v3218
    %v3221 = vmul.f32 %v3205, %v3219
    %v3222 = vmul.f32 %v3206, %v3220
    %v3223 = vlaneseq
    %v3224 = vshrl.u32 %v3223, 7
    %v3225 = vsub.s32 0, %v3224
    %v3226 = vrot.slane %v3193, %v3225
    %v3227 = vmul.f32 %v3221, %v3226
    %v3228 = vmul.f32 %v3222, %v3226
    %v3229 = vlaneseq
    %v3230 = vshrl.u32 %v3229, 7
    %v3231 = vsub.s32 0, %v3230
    %v3232 = vrot.slane %v3194, %v3231
    %v3233 = vadd.f32 %v3227, %v3232
    %v3234 = vadd.f32 %v3228, %v3232
    %v3235 = vld [vmem:[#allocation4 + $0x410] sm:$0xff]
    %v3236 = vld [vmem:[#allocation4 + $0x418] sm:$0xff]
    %v3237 = vld [vmem:[#allocation4 + $0x420] sm:$0xff]
    %v3238 = vld [vmem:[#allocation4 + $0x428] sm:$0xff]
    %v3239 = vld [vmem:[#allocation4 + $0x430] sm:$0x1]
    %v3240 = vld [vmem:[#allocation4 + $0x438] sm:$0xff]
    %v3241 = vld [vmem:[#allocation4 + $0x440] sm:$0xff]
    %v3242 = vld [vmem:[#allocation4 + $0x448] sm:$0xff]
    %v3243 = vld [vmem:[#allocation4 + $0x450] sm:$0xff]
    %v3244 = vld [vmem:[#allocation4 + $0x458] sm:$0xff]
    %v3245 = vld [vmem:[#allocation4 + $0x460] sm:$0xff]
    %v3246 = vld [vmem:[#allocation4 + $0x468] sm:$0xff]
    %v3247 = vld [vmem:[#allocation4 + $0x470] sm:$0xff]
    %v3248 = vld [vmem:[#allocation4 + $0x478] sm:$0x1]
    %v3249 = vpack.c.bf16 %v3234, %v3233
    %v3250 = vpack.c.bf16 %v3236, %v3235
    %v3251 = vpack.c.bf16 %v3238, %v3237
    %v3252 = vlaneseq
    %v3253 = vshrl.u32 %v3252, 7
    %v3254 = vsub.s32 0, %v3253
    %v3255 = vrot.slane %v3239, %v3254
    %v3257 = vsel %vm114, %v3249, 0
    %3259 = vmatprep.subr.bf16.mxu0 0
    %3260 = vmatpush1.bf16.msra.mxu0 %v3250
    %3261 = vmatprep.subr.bf16.mxu0 0
    %3262 = vmatpush1.bf16.msra.mxu0 %v3251
    %3263 = vmatprep.subr.bf16.mxu0 0
    %3264 = vmatpush1.bf16.msra.mxu0 0
    %3265 = vmatprep.subr.bf16.mxu0 0
    %3266 = vmatpush1.bf16.msra.mxu0 0
    %3267 = vmatprep.subr.bf16.mxu0 0
    %3268 = vmatpush1.bf16.msra.mxu0 0
    %3269 = vmatprep.subr.bf16.mxu0 0
    %3270 = vmatpush1.bf16.msra.mxu0 0
    %3271 = vmatprep.subr.bf16.mxu0 0
    %3272 = vmatpush1.bf16.msra.mxu0 0
    %3273 = vmatprep.subr.bf16.mxu0 0
    %3274 = vmatpush1.bf16.msra.mxu0 0
    %3275 = vmatprep.subr.bf16.mxu0 0
    %3276 = vmatpush1.bf16.msra.mxu0 0
    %3277 = vmatprep.subr.bf16.mxu0 0
    %3278 = vmatpush1.bf16.msra.mxu0 0
    %3279 = vmatprep.subr.bf16.mxu0 0
    %3280 = vmatpush1.bf16.msra.mxu0 0
    %3281 = vmatprep.subr.bf16.mxu0 0
    %3282 = vmatpush1.bf16.msra.mxu0 0
    %3283 = vmatprep.subr.bf16.mxu0 0
    %3284 = vmatpush1.bf16.msra.mxu0 0
    %3285 = vmatprep.subr.bf16.mxu0 0
    %3286 = vmatpush1.bf16.msra.mxu0 0
    %3287 = vmatprep.subr.bf16.mxu0 0
    %3288 = vmatpush1.bf16.msra.mxu0 0
    %3289 = vmatprep.subr.bf16.mxu0 0
    %3290 = vmatpush1.bf16.msra.mxu0 0
    %3291 = vmatprep.mubr.bf16.mxu0 0
    %3292 = vmatmul.mubr.bf16.gmra.mrb[0].mxu0 %v3257
    %v3293 = vpop.f32.mrb[0].mxu0
    %v3294 = vadd.f32 %v3255, %v3293
    %v3295 = vpop.f32.mrb[0].mxu0
    %v3296 = vpop.f32.mrb[0].mxu0
    %v3297 = vadd.f32 %v3255, %v3296
    %v3298 = vpop.f32.mrb[0].mxu0
    %3299 = vdwg.mxu0
    %v3300 = vmax.f32 %v3294, 0.0
    %v3301 = vmax.f32 %v3297, 0.0
    %v3302 = vpack.c.bf16 %v3301, %v3300
    %v3303 = vpack.c.bf16 %v3241, %v3240
    %v3304 = vpack.c.bf16 %v3243, %v3242
    %v3305 = vpack.c.bf16 %v3245, %v3244
    %v3306 = vpack.c.bf16 %v3247, %v3246
    %v3307 = vlaneseq
    %v3308 = vshrl.u32 %v3307, 7
    %v3309 = vsub.s32 0, %v3308
    %v3310 = vrot.slane %v3248, %v3309
    %v3312 = vsel %vm317, %v3302, 0
    %3314 = vmatprep.subr.bf16.mxu0 0
    %3315 = vmatpush1.bf16.msra.mxu0 %v3303
    %3316 = vmatprep.subr.bf16.mxu0 0
    %3317 = vmatpush1.bf16.msra.mxu0 %v3304
    %3318 = vmatprep.subr.bf16.mxu0 0
    %3319 = vmatpush1.bf16.msra.mxu0 %v3305
    %3320 = vmatprep.subr.bf16.mxu0 0
    %3321 = vmatpush1.bf16.msra.mxu0 %v3306
    %3322 = vmatprep.subr.bf16.mxu0 0
    %3323 = vmatpush1.bf16.msra.mxu0 0
    %3324 = vmatprep.subr.bf16.mxu0 0
    %3325 = vmatpush1.bf16.msra.mxu0 0
    %3326 = vmatprep.subr.bf16.mxu0 0
    %3327 = vmatpush1.bf16.msra.mxu0 0
    %3328 = vmatprep.subr.bf16.mxu0 0
    %3329 = vmatpush1.bf16.msra.mxu0 0
    %3330 = vmatprep.subr.bf16.mxu0 0
    %3331 = vmatpush1.bf16.msra.mxu0 0
    %3332 = vmatprep.subr.bf16.mxu0 0
    %3333 = vmatpush1.bf16.msra.mxu0 0
    %3334 = vmatprep.subr.bf16.mxu0 0
    %3335 = vmatpush1.bf16.msra.mxu0 0
    %3336 = vmatprep.subr.bf16.mxu0 0
    %3337 = vmatpush1.bf16.msra.mxu0 0
    %3338 = vmatprep.subr.bf16.mxu0 0
    %3339 = vmatpush1.bf16.msra.mxu0 0
    %3340 = vmatprep.subr.bf16.mxu0 0
    %3341 = vmatpush1.bf16.msra.mxu0 0
    %3342 = vmatprep.subr.bf16.mxu0 0
    %3343 = vmatpush1.bf16.msra.mxu0 0
    %3344 = vmatprep.subr.bf16.mxu0 0
    %3345 = vmatpush1.bf16.msra.mxu0 0
    %3346 = vmatprep.mubr.bf16.mxu0 0
    %3347 = vmatmul.mubr.bf16.gmra.mrb[0].mxu0 %v3312
    %v3348 = vpop.f32.mrb[0].mxu0
    %v3349 = vadd.f32 %v3310, %v3348
    %v3350 = vpop.f32.mrb[0].mxu0
    %v3351 = vpop.f32.mrb[0].mxu0
    %v3352 = vadd.f32 %v3310, %v3351
    %v3353 = vpop.f32.mrb[0].mxu0
    %3354 = vdwg.mxu0
    %v3355 = vld [vmem:[#allocation4 + $0x480] sm:$0x1]
    %v3356 = vld [vmem:[#allocation4 + $0x488] sm:$0x1]
    %v3357 = vadd.f32 %v3233, %v3349
    %v3358 = vadd.f32 %v3234, %v3352
    %v3359 = vsel %vm114, %v3357, 0.0
    %3360 = vadd.xlane.f32.xlu0 %v3359
    %v3361 = vpop.xlane.xlu0 %3360
    %v3362 = vsel %vm114, %v3358, 0.0
    %3363 = vadd.xlane.f32.xlu0 %v3362
    %v3364 = vpop.xlane.xlu0 %3363
    %v3365 = vmul.f32 %v3361, %v537
    %v3366 = vmul.f32 %v3364, %v537
    %v3367 = vsub.f32 %v3357, %v3365
    %v3368 = vsub.f32 %v3358, %v3366
    %v3369 = vmul.f32 %v3367, %v3367
    %v3370 = vmul.f32 %v3368, %v3368
    %v3371 = vsel %vm114, %v3369, 0.0
    %3372 = vadd.xlane.f32.xlu0 %v3371
    %v3373 = vpop.xlane.xlu0 %3372
    %v3374 = vsel %vm114, %v3370, 0.0
    %3375 = vadd.xlane.f32.xlu0 %v3374
    %v3376 = vpop.xlane.xlu0 %3375
    %v3377 = vmul.f32 %v3373, %v537
    %v3378 = vmul.f32 %v3376, %v537
    %v3379 = vadd.f32 %v3377, 1e-05
    %v3380 = vadd.f32 %v3378, 1e-05
    %v3381 = vrsqrt.pop %v3379
    %v3382 = vrsqrt.pop %v3380
    %v3383 = vmul.f32 %v3367, %v3381
    %v3384 = vmul.f32 %v3368, %v3382
    %v3385 = vlaneseq
    %v3386 = vshrl.u32 %v3385, 7
    %v3387 = vsub.s32 0, %v3386
    %v3388 = vrot.slane %v3355, %v3387
    %v3389 = vmul.f32 %v3383, %v3388
    %v3390 = vmul.f32 %v3384, %v3388
    %v3391 = vlaneseq
    %v3392 = vshrl.u32 %v3391, 7
    %v3393 = vsub.s32 0, %v3392
    %v3394 = vrot.slane %v3356, %v3393
    %v3395 = vadd.f32 %v3389, %v3394
    %v3396 = vadd.f32 %v3390, %v3394
    %v3397 = vld [vmem:[#allocation4 + $0x490] sm:$0xff]
    %v3398 = vld [vmem:[#allocation4 + $0x498] sm:$0xff]
    %v3399 = vld [vmem:[#allocation4 + $0x4a0] sm:$0xff]
    %v3400 = vld [vmem:[#allocation4 + $0x4a8] sm:$0xff]
    %v3401 = vpack.c.bf16 %v3396, %v3395
    %v3402 = vpack.c.bf16 %v3398, %v3397
    %v3403 = vpack.c.bf16 %v3400, %v3399
    %v3404 = vld [vmem:[#allocation4 + $0x4b0] sm:$0x1]
    %v3405 = vlaneseq
    %v3406 = vshrl.u32 %v3405, 7
    %v3407 = vsub.s32 0, %v3406
    %v3408 = vrot.slane %v3404, %v3407
    %v3410 = vsel %vm114, %v3401, 0
    %3412 = vmatprep.subr.bf16.mxu0 0
    %3413 = vmatpush1.bf16.msra.mxu0 %v3402
    %3414 = vmatprep.subr.bf16.mxu0 0
    %3415 = vmatpush1.bf16.msra.mxu0 %v3403
    %3416 = vmatprep.subr.bf16.mxu0 0
    %3417 = vmatpush1.bf16.msra.mxu0 0
    %3418 = vmatprep.subr.bf16.mxu0 0
    %3419 = vmatpush1.bf16.msra.mxu0 0
    %3420 = vmatprep.subr.bf16.mxu0 0
    %3421 = vmatpush1.bf16.msra.mxu0 0
    %3422 = vmatprep.subr.bf16.mxu0 0
    %3423 = vmatpush1.bf16.msra.mxu0 0
    %3424 = vmatprep.subr.bf16.mxu0 0
    %3425 = vmatpush1.bf16.msra.mxu0 0
    %3426 = vmatprep.subr.bf16.mxu0 0
    %3427 = vmatpush1.bf16.msra.mxu0 0
    %3428 = vmatprep.subr.bf16.mxu0 0
    %3429 = vmatpush1.bf16.msra.mxu0 0
    %3430 = vmatprep.subr.bf16.mxu0 0
    %3431 = vmatpush1.bf16.msra.mxu0 0
    %3432 = vmatprep.subr.bf16.mxu0 0
    %3433 = vmatpush1.bf16.msra.mxu0 0
    %3434 = vmatprep.subr.bf16.mxu0 0
    %3435 = vmatpush1.bf16.msra.mxu0 0
    %3436 = vmatprep.subr.bf16.mxu0 0
    %3437 = vmatpush1.bf16.msra.mxu0 0
    %3438 = vmatprep.subr.bf16.mxu0 0
    %3439 = vmatpush1.bf16.msra.mxu0 0
    %3440 = vmatprep.subr.bf16.mxu0 0
    %3441 = vmatpush1.bf16.msra.mxu0 0
    %3442 = vmatprep.subr.bf16.mxu0 0
    %3443 = vmatpush1.bf16.msra.mxu0 0
    %3444 = vmatprep.mubr.bf16.mxu0 0
    %3445 = vmatmul.mubr.bf16.gmra.mrb[0].mxu0 %v3410
    %v3446 = vpop.f32.mrb[0].mxu0
    %v3447 = vadd.f32 %v3408, %v3446
    %v3448 = vpop.f32.mrb[0].mxu0
    %v3449 = vpop.f32.mrb[0].mxu0
    %v3450 = vadd.f32 %v3408, %v3449
    %v3451 = vpop.f32.mrb[0].mxu0
    %3452 = vdwg.mxu0
    %3453 = vst [vmem:[#allocation7] sm:$0xff] %v3447
    %3454 = vst [vmem:[#allocation7 + $0x8] sm:$0xff] %v3450
    // Predicated region
    $region18: #{forward.1} parent=1 // pred_check
      _
    $region19: #{forward.1} parent=1 // pred_check_branch
      %3456 = sbr.rel (0) target = $region21
    $region20: #{forward.1} parent=1 // pred_region
      %s3458 = ssub.s32 256, 256
      %3459 = vsyncadd [#allocation6], %s3458
      %s3460 = sshll.u32 [#allocation7], 4
      %s3461 = int_to_ptr.vmem [resolvable:$true] %s3460
      %3466 = dma.vmem_to_hbm [thread:$0]  %s3461, 256, %s4, [#allocation6], 128, 128, 8
    $region21: #{forward.1} parent=1 // pred_fallthru
      _
    // Predicated region
    $region22: #{forward.1} parent=1 // pred_check
      _
    $region23: #{forward.1} parent=1 // pred_check_branch
      %3468 = sbr.rel (0) target = $region25
    $region24: #{forward.1} parent=1 // pred_region
      %3469 = dma.done [#allocation6], 256
    $region25: #{forward.1} parent=1 // pred_fallthru
      _
    %3470 = vsyncpa [#allocation5], 1
    %3471 = vsyncpa [#allocation6], 1

</llo_original>
